<compile_context>
chip_gen: v7x
topology: tpu7x:2x2x1
jax: 0.10.0
libtpu: 0.0.40
codegen_flags: <defaults>
</compile_context>

<pallas_src>
import functools

import jax
import jax.numpy as jnp
import numpy as np
from jax.experimental import pallas as pl
from jax.experimental.pallas import tpu as pltpu

EPS = 1e-5     # nn.BatchNorm1d default
SLOPE = 0.2    # LeakyReLU negative slope


# ------------------------------ fused kernel ---------------------------------
def _generator_kernel(z_ref, w1_ref, w2_ref, w3_ref, w4_ref, w5_ref,
                      g1_ref, b1_ref, g2_ref, b2_ref, g3_ref, b3_ref,
                      g4_ref, b4_ref, o_ref, *, n, n_pad, l1):
    """Whole generator forward pass; all tensors stay in VMEM.

    Layout: after d stride-2 layers the activation is held phase-major as 2^d
    blocks stacked on axis 0, each (bh, C) with bh = l1*n_pad and
    row = u*n_pad + b, i.e. X[b, :, j] = block[j % 2^d][(j // 2^d)*n_pad + b].
    Layer-4's output is instead held lane-major: (bh, 8*64) with phase groups
    along lanes, so the heaviest elementwise work runs at full vreg width.
    """
    bh = l1 * n_pad

    # --- helpers -------------------------------------------------------------
    def shift_down(x):      # value at position-group u comes from u-1 (zero at u=0)
        if l1 == 1:
            return jnp.zeros_like(x)
        zero = jnp.zeros((n_pad, x.shape[1]), x.dtype)
        return jnp.concatenate([zero, x[:bh - n_pad]], axis=0)

    def shift_up(x):        # value at position-group u comes from u+1 (zero at u=l1-1)
        if l1 == 1:
            return jnp.zeros_like(x)
        zero = jnp.zeros((n_pad, x.shape[1]), x.dtype)
        return jnp.concatenate([x[n_pad:], zero], axis=0)

    def masked_sums(y):
        # One pass: sum and sum-of-squares over valid rows only (padded batch
        # rows are excluded so BN statistics match the unpadded batch exactly).
        if n == n_pad:
            return (jnp.sum(y, axis=0, keepdims=True),
                    jnp.sum(y * y, axis=0, keepdims=True))
        ridx = jax.lax.broadcasted_iota(jnp.int32, (y.shape[0], 1), 0)
        valid = (ridx % n_pad) < n
        ym = jnp.where(valid, y, 0.0)
        return (jnp.sum(ym, axis=0, keepdims=True),
                jnp.sum(ym * y, axis=0, keepdims=True))

    def bn_lrelu(y, g, b, count):
        # Train-mode BatchNorm1d (biased variance) fused into scale/shift+LReLU.
        s1, s2 = masked_sums(y)
        inv = 1.0 / count
        mean = s1 * inv
        var = s2 * inv - mean * mean
        scale = g * jax.lax.rsqrt(var + EPS)
        shift = b - mean * scale
        y = y * scale + shift
        return jnp.where(y >= 0, y, SLOPE * y)

    def bn_lrelu_grouped(y, g, b, count, groups):
        # y: (R, groups*C); lane L holds channel (L mod C).  Per-channel stats
        # fold the `groups` lane-groups with a static tree reduction, then the
        # per-channel scale/shift is tiled back across groups.
        chans = y.shape[1] // groups
        s1, s2 = masked_sums(y)
        while s1.shape[1] > chans:
            half = s1.shape[1] // 2
            s1 = s1[:, :half] + s1[:, half:]
            s2 = s2[:, :half] + s2[:, half:]
        inv = 1.0 / count
        mean = s1 * inv
        var = s2 * inv - mean * mean
        scale_c = g * jax.lax.rsqrt(var + EPS)
        shift_c = b - mean * scale_c
        scale = jnp.tile(scale_c, (1, groups))
        shift = jnp.tile(shift_c, (1, groups))
        y = y * scale + shift
        return jnp.where(y >= 0, y, SLOPE * y)

    def up_layer(h, w_ref, r, cout):
        # ConvTranspose1d(k=4, s=2, p=1), polyphase.  One matmul against the
        # pre-concatenated taps [A|B|C|D] = w[:, :, [1, 3, 0, 2]], then
        #   Q[2i]   = A_i + B_{i-1}   (wrap: phase r-1 at u-1, zero at u=0)
        #   Q[2i+1] = D_i + C_{i+1}   (wrap: phase 0   at u+1, zero at u=l1-1)
        t = jnp.dot(h.astype(jnp.bfloat16), w_ref[...],
                    preferred_element_type=jnp.float32)          # (r*bh, 4*cout)
        ta, tb = t[:, :cout], t[:, cout:2 * cout]
        tc, td = t[:, 2 * cout:3 * cout], t[:, 3 * cout:]
        blocks = []
        for i in range(r):
            a = ta[i * bh:(i + 1) * bh]
            d = td[i * bh:(i + 1) * bh]
            bprev = tb[(i - 1) * bh:i * bh] if i > 0 else shift_down(tb[(r - 1) * bh:])
            cnext = tc[(i + 1) * bh:(i + 2) * bh] if i < r - 1 else shift_up(tc[:bh])
            blocks.append(a + bprev)
            blocks.append(d + cnext)
        return jnp.concatenate(blocks, axis=0)                   # (2*r*bh, cout)

    # ---- layer 1: ConvTranspose1d(noise, 512, l1, stride=1, pad=0), L_in=1 --
    zb = z_ref[...].astype(jnp.bfloat16)                         # (n_pad, noise)
    h1 = jnp.dot(zb, w1_ref[...], preferred_element_type=jnp.float32)  # (n_pad, l1*512)
    h = jnp.concatenate([h1[:, u * 512:(u + 1) * 512] for u in range(l1)],
                        axis=0)                                  # (bh, 512)
    h = bn_lrelu(h, g1_ref[...], b1_ref[...], l1 * n)

    # ---- layers 2-3: ConvTranspose1d(k=4, s=2, p=1) + BN + LeakyReLU --------
    h = bn_lrelu(up_layer(h, w2_ref, 1, 256), g2_ref[...], b2_ref[...], 2 * l1 * n)
    h = bn_lrelu(up_layer(h, w3_ref, 2, 128), g3_ref[...], b3_ref[...], 4 * l1 * n)

    # ---- layer 4: ConvTranspose1d(128, 64, 4, 2, 1); output kept lane-major -
    # Taps pre-ordered as [A|D|B|C], so the 128-lane halves slice cleanly.
    t4 = jnp.dot(h.astype(jnp.bfloat16), w4_ref[...],
                 preferred_element_type=jnp.float32)             # (4*bh, 256)
    t_ad, t_bc = t4[:, :128], t4[:, 128:]
    lane = jax.lax.broadcasted_iota(jnp.int32, (bh, 128), 1)
    pairs = []
    for i in range(4):
        ad = t_ad[i * bh:(i + 1) * bh]                           # [A_i | D_i]
        left = t_bc[(i - 1) * bh:i * bh] if i > 0 else shift_down(t_bc[3 * bh:])
        right = t_bc[(i + 1) * bh:(i + 2) * bh] if i < 3 else shift_up(t_bc[:bh])
        # lanes 0:64 take B_{i-1}, lanes 64:128 take C_{i+1}  -> [Q2i | Q2i+1]
        pairs.append(ad + jnp.where(lane < 64, left, right))
    h = jnp.concatenate(pairs, axis=1)                           # (bh, 512), phase-major lanes
    h = bn_lrelu_grouped(h, g4_ref[...], b4_ref[...], 8 * l1 * n, groups=8)

    # ---- layer 5: ConvTranspose1d(64, 1, 4, 2, 1) + Tanh --------------------
    # One matmul against a block-structured (512, 18) weight: columns 0..15 are
    # the 16 output phases (same-u contributions), columns 16/17 carry the two
    # position-wrap terms that need a +-1 u shift.
    p18 = jnp.dot(h.astype(jnp.bfloat16), w5_ref[...],
                  preferred_element_type=jnp.float32)            # (bh, 18)
    col = jax.lax.broadcasted_iota(jnp.int32, (bh, 16), 1)
    p = p18[:, :16]
    p = p + jnp.where(col == 0, shift_down(p18[:, 16:17]), 0.0)
    p = p + jnp.where(col == 15, shift_up(p18[:, 17:18]), 0.0)

    # lane-dense output: out[b, u*16 + s] = P[u*n_pad + b, s]
    out = jnp.concatenate([p[u * n_pad:(u + 1) * n_pad] for u in range(l1)],
                          axis=1)                                # (n_pad, 16*l1)
    o_ref[...] = jnp.tanh(out)


# ------------------------------- parameters ----------------------------------
def _prepare_kernel_params(params):
    """Pre-arrange weights for the fused kernel (done once, off the hot path)."""
    kp = {}
    w1 = params["blocks"][0][0]                           # (noise, 512, l1)
    noise, c1, l1 = w1.shape
    # columns ordered u-major: col u*512 + co = w1[:, co, u]
    kp["w1"] = jnp.transpose(w1, (0, 2, 1)).reshape(noise, l1 * c1).astype(jnp.bfloat16)

    # stride-2 layers 2-3: taps concatenated [A|B|C|D] = w[:, :, [1, 3, 0, 2]]
    for name, idx in (("w2", 1), ("w3", 2)):
        w = params["blocks"][idx][0]
        kp[name] = jnp.concatenate([w[:, :, 1], w[:, :, 3], w[:, :, 0], w[:, :, 2]],
                                   axis=1).astype(jnp.bfloat16)  # (Cin, 4*Cout)

    # layer 4: taps concatenated [A|D|B|C] so the 128-lane halves slice cleanly
    w4 = params["blocks"][3][0]
    kp["w4"] = jnp.concatenate([w4[:, :, 1], w4[:, :, 2], w4[:, :, 3], w4[:, :, 0]],
                               axis=1).astype(jnp.bfloat16)      # (128, 256)

    # layer 5: block-structured (512, 18) matrix over the lane-major layer-4 act
    w5 = np.asarray(params["last"][0])                    # (64, 1, 4)
    tap_a, tap_b = w5[:, 0, 1], w5[:, 0, 3]
    tap_c, tap_d = w5[:, 0, 0], w5[:, 0, 2]
    w5m = np.zeros((512, 18), np.float32)
    for p in range(8):
        w5m[64 * p:64 * (p + 1), 2 * p] += tap_a          # same-u even output
        w5m[64 * p:64 * (p + 1), 2 * p + 1] += tap_d      # same-u odd output
    for p in range(1, 8):
        w5m[64 * (p - 1):64 * p, 2 * p] += tap_b          # previous phase, same u
    for p in range(7):
        w5m[64 * (p + 1):64 * (p + 2), 2 * p + 1] += tap_c  # next phase, same u
    w5m[448:512, 16] = tap_b                              # wrap: phase 7 at u-1 -> col 0
    w5m[0:64, 17] = tap_c                                 # wrap: phase 0 at u+1 -> col 15
    kp["w5"] = jnp.asarray(w5m, jnp.bfloat16)

    for i in range(4):
        _, g, b, *_ = params["blocks"][i]
        kp[f"g{i + 1}"] = g.reshape(1, -1)
        kp[f"b{i + 1}"] = b.reshape(1, -1)
    return kp


def init_params(key, noise_size, output_size):
    size_multiplier = 1000 // output_size
    k1 = 64 // size_multiplier
    cfgs = [
        (noise_size, 512, k1, 1, 0),
        (512, 256, 4, 2, 1),
        (256, 128, 4, 2, 1),
        (128, 64, 4, 2, 1),
    ]
    last_cfg = (64, 1, 4, 2, 1)
    keys = jax.random.split(key, len(cfgs) + 1)
    blocks = []
    for kk, (ci, co, kw, s, p) in zip(keys[:-1], cfgs):
        w = 0.05 * jax.random.normal(kk, (ci, co, kw), jnp.float32)  # (Cin, Cout, k)
        blocks.append((w, jnp.ones((co,), jnp.float32),
                       jnp.zeros((co,), jnp.float32), kw, s, p))
    ci, co, kw, s, p = last_cfg
    w_last = 0.05 * jax.random.normal(keys[-1], (ci, co, kw), jnp.float32)
    params = {"blocks": blocks, "last": (w_last, kw, s, p)}
    params["kernel"] = _prepare_kernel_params(params)
    return params


# --------------------------------- wrapper -----------------------------------
def generator_forward(x, params, output_size):
    kp = params["kernel"]
    n = x.shape[0]
    noise = x.shape[1]
    l1 = kp["w1"].shape[1] // 512
    n_pad = ((n + 7) // 8) * 8            # 8-row alignment for all sublane shifts
    z = x[:, :, 0]                        # (N, noise)  (L_in = 1)
    if n_pad != n:
        z = jnp.concatenate([z, jnp.zeros((n_pad - n, noise), z.dtype)], axis=0)

    vmem = pl.BlockSpec(memory_space=pltpu.MemorySpace.VMEM)
    out = pl.pallas_call(
        functools.partial(_generator_kernel, n=n, n_pad=n_pad, l1=l1),
        out_shape=jax.ShapeDtypeStruct((n_pad, 16 * l1), jnp.float32),
        in_specs=[vmem] * 14,
        out_specs=vmem,
        compiler_params=pltpu.CompilerParams(vmem_limit_bytes=64 * 1024 * 1024),
    )(z, kp["w1"], kp["w2"], kp["w3"], kp["w4"], kp["w5"],
      kp["g1"], kp["b1"], kp["g2"], kp["b2"], kp["g3"], kp["b3"],
      kp["g4"], kp["b4"])
    # lane-dense kernel output: out[b, u*16+s]; just drop padding and trim.
    return out[:n, None, :output_size]


# ---------------- pure-JAX reference (PyTorch train-mode semantics) ----------
def _convt1d_ref(x, w, s, p):
    k = w.shape[-1]
    w_conv = jnp.flip(w, axis=-1).transpose(1, 0, 2)  # (Cout, Cin, k)
    return jax.lax.conv_general_dilated(
        x, w_conv, window_strides=(1,), padding=[(k - 1 - p, k - 1 - p)],
        lhs_dilation=(s,), dimension_numbers=("NCH", "OIH", "NCH"))


def _bn_lrelu_ref(y, g, b):
    mean = y.mean(axis=(0, 2), keepdims=True)
    var = jnp.square(y - mean).mean(axis=(0, 2), keepdims=True)
    yn = (y - mean) / jnp.sqrt(var + EPS) * g.reshape(1, -1, 1) + b.reshape(1, -1, 1)
    return jnp.where(yn >= 0, yn, SLOPE * yn)


def generator_ref(x, params, output_size):
    h = x
    for (w, g, b, kw, s, p) in params["blocks"]:
        h = _bn_lrelu_ref(_convt1d_ref(h, w, s, p), g, b)
    w_last, kw, s, p = params["last"]
    h = jnp.tanh(_convt1d_ref(h, w_last, s, p))
    return h[:, :, :output_size]


if __name__ == "__main__":
    noise_size, output_size, batch = 16, 64, 2
    key = jax.random.PRNGKey(0)
    kx, kparam = jax.random.split(key)
    # PyTorch-style NCW noise input: (N, noise_size, 1)
    x = jax.random.normal(kx, (batch, noise_size, 1), jnp.float32)
    params = init_params(kparam, noise_size, output_size)

    fwd = jax.jit(functools.partial(generator_forward, output_size=output_size))
    out = jax.block_until_ready(fwd(x, params))
    assert out.shape == (batch, 1, output_size), out.shape

    ref = jax.block_until_ready(generator_ref(x, params, output_size))
    np.testing.assert_allclose(np.asarray(out), np.asarray(ref), rtol=5e-2, atol=5e-2)
    print("KERNEL_OK")
</pallas_src>

<mosaic_0001>
module attributes {stable_mosaic.version = 11 : i64} {
  func.func @_generator_kernel(%arg0: memref<8x16xf32, #tpu.memory_space<vmem>>, %arg1: memref<16x2048xbf16, #tpu.memory_space<vmem>>, %arg2: memref<512x1024xbf16, #tpu.memory_space<vmem>>, %arg3: memref<256x512xbf16, #tpu.memory_space<vmem>>, %arg4: memref<128x256xbf16, #tpu.memory_space<vmem>>, %arg5: memref<512x18xbf16, #tpu.memory_space<vmem>>, %arg6: memref<1x512xf32, #tpu.memory_space<vmem>>, %arg7: memref<1x512xf32, #tpu.memory_space<vmem>>, %arg8: memref<1x256xf32, #tpu.memory_space<vmem>>, %arg9: memref<1x256xf32, #tpu.memory_space<vmem>>, %arg10: memref<1x128xf32, #tpu.memory_space<vmem>>, %arg11: memref<1x128xf32, #tpu.memory_space<vmem>>, %arg12: memref<1x64xf32, #tpu.memory_space<vmem>>, %arg13: memref<1x64xf32, #tpu.memory_space<vmem>>, %arg14: memref<8x64xf32, #tpu.memory_space<vmem>>) attributes {dimension_semantics = [], scalar_prefetch = 0 : i64, scratch_operands = 0 : i64, tpu.core_type = #tpu.core_type<tc>} {
    %c0 = arith.constant 0 : index
    %c0_0 = arith.constant 0 : index
    %0 = vector.load %arg0[%c0, %c0_0] : memref<8x16xf32, #tpu.memory_space<vmem>>, vector<8x16xf32>
    %1 = arith.truncf %0 : vector<8x16xf32> to vector<8x16xbf16>
    %c0_1 = arith.constant 0 : index
    %c0_2 = arith.constant 0 : index
    %2 = vector.load %arg1[%c0_1, %c0_2] : memref<16x2048xbf16, #tpu.memory_space<vmem>>, vector<16x2048xbf16>
    %cst = arith.constant dense<0.000000e+00> : vector<8x2048xf32>
    %3 = tpu.matmul %1, %2, %cst {dimension_numbers = #tpu.dot_dimension_numbers<[1], [0], [0], [1], [0, 0, 1, 1], [], []>} : vector<8x16xbf16>, vector<16x2048xbf16>, vector<8x2048xf32> -> vector<8x2048xf32>
    %4 = vector.extract_strided_slice %3 {offsets = [0, 0], sizes = [8, 512], strides = [1, 1]} : vector<8x2048xf32> to vector<8x512xf32>
    %5 = vector.extract_strided_slice %3 {offsets = [0, 512], sizes = [8, 512], strides = [1, 1]} : vector<8x2048xf32> to vector<8x512xf32>
    %6 = vector.extract_strided_slice %3 {offsets = [0, 1024], sizes = [8, 512], strides = [1, 1]} : vector<8x2048xf32> to vector<8x512xf32>
    %7 = vector.extract_strided_slice %3 {offsets = [0, 1536], sizes = [8, 512], strides = [1, 1]} : vector<8x2048xf32> to vector<8x512xf32>
    %8 = tpu.concatenate %4, %5, %6, %7 in 0 : vector<8x512xf32>, vector<8x512xf32>, vector<8x512xf32>, vector<8x512xf32> -> vector<32x512xf32>
    %c0_3 = arith.constant 0 : index
    %c0_4 = arith.constant 0 : index
    %9 = vector.load %arg6[%c0_3, %c0_4] : memref<1x512xf32, #tpu.memory_space<vmem>>, vector<1x512xf32>
    %c0_5 = arith.constant 0 : index
    %c0_6 = arith.constant 0 : index
    %10 = vector.load %arg7[%c0_5, %c0_6] : memref<1x512xf32, #tpu.memory_space<vmem>>, vector<1x512xf32>
    %11 = tpu.iota {dimensions = array<i32: 0>} : vector<32x1xi32>
    %c8_i32 = arith.constant 8 : i32
    %c0_i32 = arith.constant 0 : i32
    %12 = arith.cmpi eq, %c8_i32, %c0_i32 : i32
    %c1_i32 = arith.constant 1 : i32
    %13 = arith.select %12, %c1_i32, %c8_i32 : i32
    %14 = vector.broadcast %13 : i32 to vector<32x1xi32>
    %15 = arith.remsi %11, %14 : vector<32x1xi32>
    %c0_i32_7 = arith.constant 0 : i32
    %16 = vector.broadcast %c0_i32_7 : i32 to vector<32x1xi32>
    %17 = arith.cmpi ne, %15, %16 : vector<32x1xi32>
    %c0_i32_8 = arith.constant 0 : i32
    %18 = vector.broadcast %c0_i32_8 : i32 to vector<32x1xi32>
    %19 = arith.cmpi slt, %15, %18 : vector<32x1xi32>
    %c0_i32_9 = arith.constant 0 : i32
    %20 = arith.cmpi slt, %13, %c0_i32_9 : i32
    %21 = vector.broadcast %20 : i1 to vector<32x1xi1>
    %22 = vector.broadcast %21 : vector<32x1xi1> to vector<32x1xi1>
    %23 = arith.xori %19, %22 : vector<32x1xi1>
    %24 = arith.andi %23, %17 : vector<32x1xi1>
    %25 = vector.broadcast %13 : i32 to vector<32x1xi32>
    %26 = arith.addi %15, %25 : vector<32x1xi32>
    %27 = arith.select %24, %26, %15 : vector<32x1xi1>, vector<32x1xi32>
    %c2_i32 = arith.constant 2 : i32
    %28 = vector.broadcast %c2_i32 : i32 to vector<32x1xi32>
    %29 = arith.cmpi slt, %27, %28 : vector<32x1xi32>
    %cst_10 = arith.constant 0.000000e+00 : f32
    %30 = vector.shape_cast %29 : vector<32x1xi1> to vector<32x1xi1>
    %31 = vector.broadcast %30 : vector<32x1xi1> to vector<32x512xi1>
    %32 = vector.broadcast %cst_10 : f32 to vector<32x512xf32>
    %33 = arith.select %31, %8, %32 : vector<32x512xi1>, vector<32x512xf32>
    %cst_11 = arith.constant dense<0.000000e+00> : vector<512xf32>
    %34 = vector.multi_reduction <add>, %33, %cst_11 [0] : vector<32x512xf32> to vector<512xf32>
    %35 = vector.shape_cast %34 : vector<512xf32> to vector<1x512xf32>
    %36 = arith.mulf %33, %8 : vector<32x512xf32>
    %cst_12 = arith.constant dense<0.000000e+00> : vector<512xf32>
    %37 = vector.multi_reduction <add>, %36, %cst_12 [0] : vector<32x512xf32> to vector<512xf32>
    %38 = vector.shape_cast %37 : vector<512xf32> to vector<1x512xf32>
    %cst_13 = arith.constant 1.250000e-01 : f32
    %39 = vector.broadcast %cst_13 : f32 to vector<1x512xf32>
    %40 = arith.mulf %35, %39 : vector<1x512xf32>
    %cst_14 = arith.constant 1.250000e-01 : f32
    %41 = vector.broadcast %cst_14 : f32 to vector<1x512xf32>
    %42 = arith.mulf %38, %41 : vector<1x512xf32>
    %43 = arith.mulf %40, %40 : vector<1x512xf32>
    %44 = arith.subf %42, %43 : vector<1x512xf32>
    %cst_15 = arith.constant 9.99999974E-6 : f32
    %45 = vector.broadcast %cst_15 : f32 to vector<1x512xf32>
    %46 = arith.addf %44, %45 : vector<1x512xf32>
    %47 = math.rsqrt %46 : vector<1x512xf32>
    %48 = arith.mulf %9, %47 : vector<1x512xf32>
    %49 = arith.mulf %40, %48 : vector<1x512xf32>
    %50 = arith.subf %10, %49 : vector<1x512xf32>
    %51 = vector.broadcast %48 : vector<1x512xf32> to vector<32x512xf32>
    %52 = arith.mulf %8, %51 : vector<32x512xf32>
    %53 = vector.broadcast %50 : vector<1x512xf32> to vector<32x512xf32>
    %54 = arith.addf %52, %53 : vector<32x512xf32>
    %cst_16 = arith.constant 0.000000e+00 : f32
    %55 = vector.broadcast %cst_16 : f32 to vector<32x512xf32>
    %56 = arith.cmpf oge, %54, %55 : vector<32x512xf32>
    %cst_17 = arith.constant 2.000000e-01 : f32
    %57 = vector.broadcast %cst_17 : f32 to vector<32x512xf32>
    %58 = arith.mulf %57, %54 : vector<32x512xf32>
    %59 = arith.select %56, %54, %58 : vector<32x512xi1>, vector<32x512xf32>
    %60 = arith.truncf %59 : vector<32x512xf32> to vector<32x512xbf16>
    %c0_18 = arith.constant 0 : index
    %c0_19 = arith.constant 0 : index
    %61 = vector.load %arg2[%c0_18, %c0_19] : memref<512x1024xbf16, #tpu.memory_space<vmem>>, vector<512x1024xbf16>
    %cst_20 = arith.constant dense<0.000000e+00> : vector<32x1024xf32>
    %62 = tpu.matmul %60, %61, %cst_20 {dimension_numbers = #tpu.dot_dimension_numbers<[1], [0], [0], [1], [0, 0, 1, 1], [], []>} : vector<32x512xbf16>, vector<512x1024xbf16>, vector<32x1024xf32> -> vector<32x1024xf32>
    %63 = vector.extract_strided_slice %62 {offsets = [0, 0], sizes = [32, 256], strides = [1, 1]} : vector<32x1024xf32> to vector<32x256xf32>
    %64 = vector.extract_strided_slice %62 {offsets = [0, 256], sizes = [32, 256], strides = [1, 1]} : vector<32x1024xf32> to vector<32x256xf32>
    %65 = vector.extract_strided_slice %62 {offsets = [0, 512], sizes = [32, 256], strides = [1, 1]} : vector<32x1024xf32> to vector<32x256xf32>
    %66 = vector.extract_strided_slice %62 {offsets = [0, 768], sizes = [32, 256], strides = [1, 1]} : vector<32x1024xf32> to vector<32x256xf32>
    %cst_21 = arith.constant 0.000000e+00 : f32
    %67 = vector.broadcast %cst_21 : f32 to vector<8x256xf32>
    %68 = vector.extract_strided_slice %64 {offsets = [0, 0], sizes = [24, 256], strides = [1, 1]} : vector<32x256xf32> to vector<24x256xf32>
    %69 = tpu.concatenate %67, %68 in 0 : vector<8x256xf32>, vector<24x256xf32> -> vector<32x256xf32>
    %cst_22 = arith.constant 0.000000e+00 : f32
    %70 = vector.broadcast %cst_22 : f32 to vector<8x256xf32>
    %71 = vector.extract_strided_slice %65 {offsets = [8, 0], sizes = [24, 256], strides = [1, 1]} : vector<32x256xf32> to vector<24x256xf32>
    %72 = tpu.concatenate %71, %70 in 0 : vector<24x256xf32>, vector<8x256xf32> -> vector<32x256xf32>
    %73 = arith.addf %63, %69 : vector<32x256xf32>
    %74 = arith.addf %66, %72 : vector<32x256xf32>
    %75 = tpu.concatenate %73, %74 in 0 : vector<32x256xf32>, vector<32x256xf32> -> vector<64x256xf32>
    %c0_23 = arith.constant 0 : index
    %c0_24 = arith.constant 0 : index
    %76 = vector.load %arg8[%c0_23, %c0_24] : memref<1x256xf32, #tpu.memory_space<vmem>>, vector<1x256xf32>
    %c0_25 = arith.constant 0 : index
    %c0_26 = arith.constant 0 : index
    %77 = vector.load %arg9[%c0_25, %c0_26] : memref<1x256xf32, #tpu.memory_space<vmem>>, vector<1x256xf32>
    %78 = tpu.iota {dimensions = array<i32: 0>} : vector<64x1xi32>
    %c8_i32_27 = arith.constant 8 : i32
    %c0_i32_28 = arith.constant 0 : i32
    %79 = arith.cmpi eq, %c8_i32_27, %c0_i32_28 : i32
    %c1_i32_29 = arith.constant 1 : i32
    %80 = arith.select %79, %c1_i32_29, %c8_i32_27 : i32
    %81 = vector.broadcast %80 : i32 to vector<64x1xi32>
    %82 = arith.remsi %78, %81 : vector<64x1xi32>
    %c0_i32_30 = arith.constant 0 : i32
    %83 = vector.broadcast %c0_i32_30 : i32 to vector<64x1xi32>
    %84 = arith.cmpi ne, %82, %83 : vector<64x1xi32>
    %c0_i32_31 = arith.constant 0 : i32
    %85 = vector.broadcast %c0_i32_31 : i32 to vector<64x1xi32>
    %86 = arith.cmpi slt, %82, %85 : vector<64x1xi32>
    %c0_i32_32 = arith.constant 0 : i32
    %87 = arith.cmpi slt, %80, %c0_i32_32 : i32
    %88 = vector.broadcast %87 : i1 to vector<64x1xi1>
    %89 = vector.broadcast %88 : vector<64x1xi1> to vector<64x1xi1>
    %90 = arith.xori %86, %89 : vector<64x1xi1>
    %91 = arith.andi %90, %84 : vector<64x1xi1>
    %92 = vector.broadcast %80 : i32 to vector<64x1xi32>
    %93 = arith.addi %82, %92 : vector<64x1xi32>
    %94 = arith.select %91, %93, %82 : vector<64x1xi1>, vector<64x1xi32>
    %c2_i32_33 = arith.constant 2 : i32
    %95 = vector.broadcast %c2_i32_33 : i32 to vector<64x1xi32>
    %96 = arith.cmpi slt, %94, %95 : vector<64x1xi32>
    %cst_34 = arith.constant 0.000000e+00 : f32
    %97 = vector.shape_cast %96 : vector<64x1xi1> to vector<64x1xi1>
    %98 = vector.broadcast %97 : vector<64x1xi1> to vector<64x256xi1>
    %99 = vector.broadcast %cst_34 : f32 to vector<64x256xf32>
    %100 = arith.select %98, %75, %99 : vector<64x256xi1>, vector<64x256xf32>
    %cst_35 = arith.constant dense<0.000000e+00> : vector<256xf32>
    %101 = vector.multi_reduction <add>, %100, %cst_35 [0] : vector<64x256xf32> to vector<256xf32>
    %102 = vector.shape_cast %101 : vector<256xf32> to vector<1x256xf32>
    %103 = arith.mulf %100, %75 : vector<64x256xf32>
    %cst_36 = arith.constant dense<0.000000e+00> : vector<256xf32>
    %104 = vector.multi_reduction <add>, %103, %cst_36 [0] : vector<64x256xf32> to vector<256xf32>
    %105 = vector.shape_cast %104 : vector<256xf32> to vector<1x256xf32>
    %cst_37 = arith.constant 6.250000e-02 : f32
    %106 = vector.broadcast %cst_37 : f32 to vector<1x256xf32>
    %107 = arith.mulf %102, %106 : vector<1x256xf32>
    %cst_38 = arith.constant 6.250000e-02 : f32
    %108 = vector.broadcast %cst_38 : f32 to vector<1x256xf32>
    %109 = arith.mulf %105, %108 : vector<1x256xf32>
    %110 = arith.mulf %107, %107 : vector<1x256xf32>
    %111 = arith.subf %109, %110 : vector<1x256xf32>
    %cst_39 = arith.constant 9.99999974E-6 : f32
    %112 = vector.broadcast %cst_39 : f32 to vector<1x256xf32>
    %113 = arith.addf %111, %112 : vector<1x256xf32>
    %114 = math.rsqrt %113 : vector<1x256xf32>
    %115 = arith.mulf %76, %114 : vector<1x256xf32>
    %116 = arith.mulf %107, %115 : vector<1x256xf32>
    %117 = arith.subf %77, %116 : vector<1x256xf32>
    %118 = vector.broadcast %115 : vector<1x256xf32> to vector<64x256xf32>
    %119 = arith.mulf %75, %118 : vector<64x256xf32>
    %120 = vector.broadcast %117 : vector<1x256xf32> to vector<64x256xf32>
    %121 = arith.addf %119, %120 : vector<64x256xf32>
    %cst_40 = arith.constant 0.000000e+00 : f32
    %122 = vector.broadcast %cst_40 : f32 to vector<64x256xf32>
    %123 = arith.cmpf oge, %121, %122 : vector<64x256xf32>
    %cst_41 = arith.constant 2.000000e-01 : f32
    %124 = vector.broadcast %cst_41 : f32 to vector<64x256xf32>
    %125 = arith.mulf %124, %121 : vector<64x256xf32>
    %126 = arith.select %123, %121, %125 : vector<64x256xi1>, vector<64x256xf32>
    %127 = arith.truncf %126 : vector<64x256xf32> to vector<64x256xbf16>
    %c0_42 = arith.constant 0 : index
    %c0_43 = arith.constant 0 : index
    %128 = vector.load %arg3[%c0_42, %c0_43] : memref<256x512xbf16, #tpu.memory_space<vmem>>, vector<256x512xbf16>
    %cst_44 = arith.constant dense<0.000000e+00> : vector<64x512xf32>
    %129 = tpu.matmul %127, %128, %cst_44 {dimension_numbers = #tpu.dot_dimension_numbers<[1], [0], [0], [1], [0, 0, 1, 1], [], []>} : vector<64x256xbf16>, vector<256x512xbf16>, vector<64x512xf32> -> vector<64x512xf32>
    %130 = vector.extract_strided_slice %129 {offsets = [0, 0], sizes = [64, 128], strides = [1, 1]} : vector<64x512xf32> to vector<64x128xf32>
    %131 = vector.extract_strided_slice %129 {offsets = [0, 128], sizes = [64, 128], strides = [1, 1]} : vector<64x512xf32> to vector<64x128xf32>
    %132 = vector.extract_strided_slice %129 {offsets = [0, 256], sizes = [64, 128], strides = [1, 1]} : vector<64x512xf32> to vector<64x128xf32>
    %133 = vector.extract_strided_slice %129 {offsets = [0, 384], sizes = [64, 128], strides = [1, 1]} : vector<64x512xf32> to vector<64x128xf32>
    %134 = vector.extract_strided_slice %130 {offsets = [0, 0], sizes = [32, 128], strides = [1, 1]} : vector<64x128xf32> to vector<32x128xf32>
    %135 = vector.extract_strided_slice %133 {offsets = [0, 0], sizes = [32, 128], strides = [1, 1]} : vector<64x128xf32> to vector<32x128xf32>
    %136 = vector.extract_strided_slice %131 {offsets = [32, 0], sizes = [32, 128], strides = [1, 1]} : vector<64x128xf32> to vector<32x128xf32>
    %cst_45 = arith.constant 0.000000e+00 : f32
    %137 = vector.broadcast %cst_45 : f32 to vector<8x128xf32>
    %138 = vector.extract_strided_slice %136 {offsets = [0, 0], sizes = [24, 128], strides = [1, 1]} : vector<32x128xf32> to vector<24x128xf32>
    %139 = tpu.concatenate %137, %138 in 0 : vector<8x128xf32>, vector<24x128xf32> -> vector<32x128xf32>
    %140 = vector.extract_strided_slice %132 {offsets = [32, 0], sizes = [32, 128], strides = [1, 1]} : vector<64x128xf32> to vector<32x128xf32>
    %141 = arith.addf %134, %139 : vector<32x128xf32>
    %142 = arith.addf %135, %140 : vector<32x128xf32>
    %143 = vector.extract_strided_slice %130 {offsets = [32, 0], sizes = [32, 128], strides = [1, 1]} : vector<64x128xf32> to vector<32x128xf32>
    %144 = vector.extract_strided_slice %133 {offsets = [32, 0], sizes = [32, 128], strides = [1, 1]} : vector<64x128xf32> to vector<32x128xf32>
    %145 = vector.extract_strided_slice %131 {offsets = [0, 0], sizes = [32, 128], strides = [1, 1]} : vector<64x128xf32> to vector<32x128xf32>
    %146 = vector.extract_strided_slice %132 {offsets = [0, 0], sizes = [32, 128], strides = [1, 1]} : vector<64x128xf32> to vector<32x128xf32>
    %cst_46 = arith.constant 0.000000e+00 : f32
    %147 = vector.broadcast %cst_46 : f32 to vector<8x128xf32>
    %148 = vector.extract_strided_slice %146 {offsets = [8, 0], sizes = [24, 128], strides = [1, 1]} : vector<32x128xf32> to vector<24x128xf32>
    %149 = tpu.concatenate %148, %147 in 0 : vector<24x128xf32>, vector<8x128xf32> -> vector<32x128xf32>
    %150 = arith.addf %143, %145 : vector<32x128xf32>
    %151 = arith.addf %144, %149 : vector<32x128xf32>
    %152 = tpu.concatenate %141, %142, %150, %151 in 0 : vector<32x128xf32>, vector<32x128xf32>, vector<32x128xf32>, vector<32x128xf32> -> vector<128x128xf32>
    %c0_47 = arith.constant 0 : index
    %c0_48 = arith.constant 0 : index
    %153 = vector.load %arg10[%c0_47, %c0_48] : memref<1x128xf32, #tpu.memory_space<vmem>>, vector<1x128xf32>
    %c0_49 = arith.constant 0 : index
    %c0_50 = arith.constant 0 : index
    %154 = vector.load %arg11[%c0_49, %c0_50] : memref<1x128xf32, #tpu.memory_space<vmem>>, vector<1x128xf32>
    %155 = tpu.iota {dimensions = array<i32: 0>} : vector<128x1xi32>
    %c8_i32_51 = arith.constant 8 : i32
    %c0_i32_52 = arith.constant 0 : i32
    %156 = arith.cmpi eq, %c8_i32_51, %c0_i32_52 : i32
    %c1_i32_53 = arith.constant 1 : i32
    %157 = arith.select %156, %c1_i32_53, %c8_i32_51 : i32
    %158 = vector.broadcast %157 : i32 to vector<128x1xi32>
    %159 = arith.remsi %155, %158 : vector<128x1xi32>
    %c0_i32_54 = arith.constant 0 : i32
    %160 = vector.broadcast %c0_i32_54 : i32 to vector<128x1xi32>
    %161 = arith.cmpi ne, %159, %160 : vector<128x1xi32>
    %c0_i32_55 = arith.constant 0 : i32
    %162 = vector.broadcast %c0_i32_55 : i32 to vector<128x1xi32>
    %163 = arith.cmpi slt, %159, %162 : vector<128x1xi32>
    %c0_i32_56 = arith.constant 0 : i32
    %164 = arith.cmpi slt, %157, %c0_i32_56 : i32
    %165 = vector.broadcast %164 : i1 to vector<128x1xi1>
    %166 = vector.broadcast %165 : vector<128x1xi1> to vector<128x1xi1>
    %167 = arith.xori %163, %166 : vector<128x1xi1>
    %168 = arith.andi %167, %161 : vector<128x1xi1>
    %169 = vector.broadcast %157 : i32 to vector<128x1xi32>
    %170 = arith.addi %159, %169 : vector<128x1xi32>
    %171 = arith.select %168, %170, %159 : vector<128x1xi1>, vector<128x1xi32>
    %c2_i32_57 = arith.constant 2 : i32
    %172 = vector.broadcast %c2_i32_57 : i32 to vector<128x1xi32>
    %173 = arith.cmpi slt, %171, %172 : vector<128x1xi32>
    %cst_58 = arith.constant 0.000000e+00 : f32
    %174 = vector.shape_cast %173 : vector<128x1xi1> to vector<128x1xi1>
    %175 = vector.broadcast %174 : vector<128x1xi1> to vector<128x128xi1>
    %176 = vector.broadcast %cst_58 : f32 to vector<128x128xf32>
    %177 = arith.select %175, %152, %176 : vector<128x128xi1>, vector<128x128xf32>
    %cst_59 = arith.constant dense<0.000000e+00> : vector<128xf32>
    %178 = vector.multi_reduction <add>, %177, %cst_59 [0] : vector<128x128xf32> to vector<128xf32>
    %179 = vector.shape_cast %178 : vector<128xf32> to vector<1x128xf32>
    %180 = arith.mulf %177, %152 : vector<128x128xf32>
    %cst_60 = arith.constant dense<0.000000e+00> : vector<128xf32>
    %181 = vector.multi_reduction <add>, %180, %cst_60 [0] : vector<128x128xf32> to vector<128xf32>
    %182 = vector.shape_cast %181 : vector<128xf32> to vector<1x128xf32>
    %cst_61 = arith.constant 3.125000e-02 : f32
    %183 = vector.broadcast %cst_61 : f32 to vector<1x128xf32>
    %184 = arith.mulf %179, %183 : vector<1x128xf32>
    %cst_62 = arith.constant 3.125000e-02 : f32
    %185 = vector.broadcast %cst_62 : f32 to vector<1x128xf32>
    %186 = arith.mulf %182, %185 : vector<1x128xf32>
    %187 = arith.mulf %184, %184 : vector<1x128xf32>
    %188 = arith.subf %186, %187 : vector<1x128xf32>
    %cst_63 = arith.constant 9.99999974E-6 : f32
    %189 = vector.broadcast %cst_63 : f32 to vector<1x128xf32>
    %190 = arith.addf %188, %189 : vector<1x128xf32>
    %191 = math.rsqrt %190 : vector<1x128xf32>
    %192 = arith.mulf %153, %191 : vector<1x128xf32>
    %193 = arith.mulf %184, %192 : vector<1x128xf32>
    %194 = arith.subf %154, %193 : vector<1x128xf32>
    %195 = vector.broadcast %192 : vector<1x128xf32> to vector<128x128xf32>
    %196 = arith.mulf %152, %195 : vector<128x128xf32>
    %197 = vector.broadcast %194 : vector<1x128xf32> to vector<128x128xf32>
    %198 = arith.addf %196, %197 : vector<128x128xf32>
    %cst_64 = arith.constant 0.000000e+00 : f32
    %199 = vector.broadcast %cst_64 : f32 to vector<128x128xf32>
    %200 = arith.cmpf oge, %198, %199 : vector<128x128xf32>
    %cst_65 = arith.constant 2.000000e-01 : f32
    %201 = vector.broadcast %cst_65 : f32 to vector<128x128xf32>
    %202 = arith.mulf %201, %198 : vector<128x128xf32>
    %203 = arith.select %200, %198, %202 : vector<128x128xi1>, vector<128x128xf32>
    %204 = arith.truncf %203 : vector<128x128xf32> to vector<128x128xbf16>
    %c0_66 = arith.constant 0 : index
    %c0_67 = arith.constant 0 : index
    %205 = vector.load %arg4[%c0_66, %c0_67] : memref<128x256xbf16, #tpu.memory_space<vmem>>, vector<128x256xbf16>
    %cst_68 = arith.constant dense<0.000000e+00> : vector<128x256xf32>
    %206 = tpu.matmul %204, %205, %cst_68 {dimension_numbers = #tpu.dot_dimension_numbers<[1], [0], [0], [1], [0, 0, 1, 1], [], []>} : vector<128x128xbf16>, vector<128x256xbf16>, vector<128x256xf32> -> vector<128x256xf32>
    %207 = vector.extract_strided_slice %206 {offsets = [0, 0], sizes = [128, 128], strides = [1, 1]} : vector<128x256xf32> to vector<128x128xf32>
    %208 = vector.extract_strided_slice %206 {offsets = [0, 128], sizes = [128, 128], strides = [1, 1]} : vector<128x256xf32> to vector<128x128xf32>
    %209 = tpu.iota {dimensions = array<i32: 1>} : vector<32x128xi32>
    %210 = vector.extract_strided_slice %207 {offsets = [0, 0], sizes = [32, 128], strides = [1, 1]} : vector<128x128xf32> to vector<32x128xf32>
    %211 = vector.extract_strided_slice %208 {offsets = [96, 0], sizes = [32, 128], strides = [1, 1]} : vector<128x128xf32> to vector<32x128xf32>
    %cst_69 = arith.constant 0.000000e+00 : f32
    %212 = vector.broadcast %cst_69 : f32 to vector<8x128xf32>
    %213 = vector.extract_strided_slice %211 {offsets = [0, 0], sizes = [24, 128], strides = [1, 1]} : vector<32x128xf32> to vector<24x128xf32>
    %214 = tpu.concatenate %212, %213 in 0 : vector<8x128xf32>, vector<24x128xf32> -> vector<32x128xf32>
    %215 = vector.extract_strided_slice %208 {offsets = [32, 0], sizes = [32, 128], strides = [1, 1]} : vector<128x128xf32> to vector<32x128xf32>
    %c64_i32 = arith.constant 64 : i32
    %216 = vector.broadcast %c64_i32 : i32 to vector<32x128xi32>
    %217 = arith.cmpi slt, %209, %216 : vector<32x128xi32>
    %218 = arith.select %217, %214, %215 : vector<32x128xi1>, vector<32x128xf32>
    %219 = arith.addf %210, %218 : vector<32x128xf32>
    %220 = vector.extract_strided_slice %207 {offsets = [32, 0], sizes = [32, 128], strides = [1, 1]} : vector<128x128xf32> to vector<32x128xf32>
    %221 = vector.extract_strided_slice %208 {offsets = [0, 0], sizes = [32, 128], strides = [1, 1]} : vector<128x128xf32> to vector<32x128xf32>
    %222 = vector.extract_strided_slice %208 {offsets = [64, 0], sizes = [32, 128], strides = [1, 1]} : vector<128x128xf32> to vector<32x128xf32>
    %c64_i32_70 = arith.constant 64 : i32
    %223 = vector.broadcast %c64_i32_70 : i32 to vector<32x128xi32>
    %224 = arith.cmpi slt, %209, %223 : vector<32x128xi32>
    %225 = arith.select %224, %221, %222 : vector<32x128xi1>, vector<32x128xf32>
    %226 = arith.addf %220, %225 : vector<32x128xf32>
    %227 = vector.extract_strided_slice %207 {offsets = [64, 0], sizes = [32, 128], strides = [1, 1]} : vector<128x128xf32> to vector<32x128xf32>
    %228 = vector.extract_strided_slice %208 {offsets = [32, 0], sizes = [32, 128], strides = [1, 1]} : vector<128x128xf32> to vector<32x128xf32>
    %229 = vector.extract_strided_slice %208 {offsets = [96, 0], sizes = [32, 128], strides = [1, 1]} : vector<128x128xf32> to vector<32x128xf32>
    %c64_i32_71 = arith.constant 64 : i32
    %230 = vector.broadcast %c64_i32_71 : i32 to vector<32x128xi32>
    %231 = arith.cmpi slt, %209, %230 : vector<32x128xi32>
    %232 = arith.select %231, %228, %229 : vector<32x128xi1>, vector<32x128xf32>
    %233 = arith.addf %227, %232 : vector<32x128xf32>
    %234 = vector.extract_strided_slice %207 {offsets = [96, 0], sizes = [32, 128], strides = [1, 1]} : vector<128x128xf32> to vector<32x128xf32>
    %235 = vector.extract_strided_slice %208 {offsets = [64, 0], sizes = [32, 128], strides = [1, 1]} : vector<128x128xf32> to vector<32x128xf32>
    %236 = vector.extract_strided_slice %208 {offsets = [0, 0], sizes = [32, 128], strides = [1, 1]} : vector<128x128xf32> to vector<32x128xf32>
    %cst_72 = arith.constant 0.000000e+00 : f32
    %237 = vector.broadcast %cst_72 : f32 to vector<8x128xf32>
    %238 = vector.extract_strided_slice %236 {offsets = [8, 0], sizes = [24, 128], strides = [1, 1]} : vector<32x128xf32> to vector<24x128xf32>
    %239 = tpu.concatenate %238, %237 in 0 : vector<24x128xf32>, vector<8x128xf32> -> vector<32x128xf32>
    %c64_i32_73 = arith.constant 64 : i32
    %240 = vector.broadcast %c64_i32_73 : i32 to vector<32x128xi32>
    %241 = arith.cmpi slt, %209, %240 : vector<32x128xi32>
    %242 = arith.select %241, %235, %239 : vector<32x128xi1>, vector<32x128xf32>
    %243 = arith.addf %234, %242 : vector<32x128xf32>
    %244 = tpu.concatenate %219, %226, %233, %243 in 1 : vector<32x128xf32>, vector<32x128xf32>, vector<32x128xf32>, vector<32x128xf32> -> vector<32x512xf32>
    %c0_74 = arith.constant 0 : index
    %c0_75 = arith.constant 0 : index
    %245 = vector.load %arg12[%c0_74, %c0_75] : memref<1x64xf32, #tpu.memory_space<vmem>>, vector<1x64xf32>
    %c0_76 = arith.constant 0 : index
    %c0_77 = arith.constant 0 : index
    %246 = vector.load %arg13[%c0_76, %c0_77] : memref<1x64xf32, #tpu.memory_space<vmem>>, vector<1x64xf32>
    %247 = tpu.iota {dimensions = array<i32: 0>} : vector<32x1xi32>
    %c8_i32_78 = arith.constant 8 : i32
    %c0_i32_79 = arith.constant 0 : i32
    %248 = arith.cmpi eq, %c8_i32_78, %c0_i32_79 : i32
    %c1_i32_80 = arith.constant 1 : i32
    %249 = arith.select %248, %c1_i32_80, %c8_i32_78 : i32
    %250 = vector.broadcast %249 : i32 to vector<32x1xi32>
    %251 = arith.remsi %247, %250 : vector<32x1xi32>
    %c0_i32_81 = arith.constant 0 : i32
    %252 = vector.broadcast %c0_i32_81 : i32 to vector<32x1xi32>
    %253 = arith.cmpi ne, %251, %252 : vector<32x1xi32>
    %c0_i32_82 = arith.constant 0 : i32
    %254 = vector.broadcast %c0_i32_82 : i32 to vector<32x1xi32>
    %255 = arith.cmpi slt, %251, %254 : vector<32x1xi32>
    %c0_i32_83 = arith.constant 0 : i32
    %256 = arith.cmpi slt, %249, %c0_i32_83 : i32
    %257 = vector.broadcast %256 : i1 to vector<32x1xi1>
    %258 = vector.broadcast %257 : vector<32x1xi1> to vector<32x1xi1>
    %259 = arith.xori %255, %258 : vector<32x1xi1>
    %260 = arith.andi %259, %253 : vector<32x1xi1>
    %261 = vector.broadcast %249 : i32 to vector<32x1xi32>
    %262 = arith.addi %251, %261 : vector<32x1xi32>
    %263 = arith.select %260, %262, %251 : vector<32x1xi1>, vector<32x1xi32>
    %c2_i32_84 = arith.constant 2 : i32
    %264 = vector.broadcast %c2_i32_84 : i32 to vector<32x1xi32>
    %265 = arith.cmpi slt, %263, %264 : vector<32x1xi32>
    %cst_85 = arith.constant 0.000000e+00 : f32
    %266 = vector.shape_cast %265 : vector<32x1xi1> to vector<32x1xi1>
    %267 = vector.broadcast %266 : vector<32x1xi1> to vector<32x512xi1>
    %268 = vector.broadcast %cst_85 : f32 to vector<32x512xf32>
    %269 = arith.select %267, %244, %268 : vector<32x512xi1>, vector<32x512xf32>
    %cst_86 = arith.constant dense<0.000000e+00> : vector<512xf32>
    %270 = vector.multi_reduction <add>, %269, %cst_86 [0] : vector<32x512xf32> to vector<512xf32>
    %271 = vector.shape_cast %270 : vector<512xf32> to vector<1x512xf32>
    %272 = arith.mulf %269, %244 : vector<32x512xf32>
    %cst_87 = arith.constant dense<0.000000e+00> : vector<512xf32>
    %273 = vector.multi_reduction <add>, %272, %cst_87 [0] : vector<32x512xf32> to vector<512xf32>
    %274 = vector.shape_cast %273 : vector<512xf32> to vector<1x512xf32>
    %275 = vector.extract_strided_slice %271 {offsets = [0, 0], sizes = [1, 256], strides = [1, 1]} : vector<1x512xf32> to vector<1x256xf32>
    %276 = vector.extract_strided_slice %271 {offsets = [0, 256], sizes = [1, 256], strides = [1, 1]} : vector<1x512xf32> to vector<1x256xf32>
    %277 = arith.addf %275, %276 : vector<1x256xf32>
    %278 = vector.extract_strided_slice %274 {offsets = [0, 0], sizes = [1, 256], strides = [1, 1]} : vector<1x512xf32> to vector<1x256xf32>
    %279 = vector.extract_strided_slice %274 {offsets = [0, 256], sizes = [1, 256], strides = [1, 1]} : vector<1x512xf32> to vector<1x256xf32>
    %280 = arith.addf %278, %279 : vector<1x256xf32>
    %281 = vector.extract_strided_slice %277 {offsets = [0, 0], sizes = [1, 128], strides = [1, 1]} : vector<1x256xf32> to vector<1x128xf32>
    %282 = vector.extract_strided_slice %277 {offsets = [0, 128], sizes = [1, 128], strides = [1, 1]} : vector<1x256xf32> to vector<1x128xf32>
    %283 = arith.addf %281, %282 : vector<1x128xf32>
    %284 = vector.extract_strided_slice %280 {offsets = [0, 0], sizes = [1, 128], strides = [1, 1]} : vector<1x256xf32> to vector<1x128xf32>
    %285 = vector.extract_strided_slice %280 {offsets = [0, 128], sizes = [1, 128], strides = [1, 1]} : vector<1x256xf32> to vector<1x128xf32>
    %286 = arith.addf %284, %285 : vector<1x128xf32>
    %287 = vector.extract_strided_slice %283 {offsets = [0, 0], sizes = [1, 64], strides = [1, 1]} : vector<1x128xf32> to vector<1x64xf32>
    %288 = vector.extract_strided_slice %283 {offsets = [0, 64], sizes = [1, 64], strides = [1, 1]} : vector<1x128xf32> to vector<1x64xf32>
    %289 = arith.addf %287, %288 : vector<1x64xf32>
    %290 = vector.extract_strided_slice %286 {offsets = [0, 0], sizes = [1, 64], strides = [1, 1]} : vector<1x128xf32> to vector<1x64xf32>
    %291 = vector.extract_strided_slice %286 {offsets = [0, 64], sizes = [1, 64], strides = [1, 1]} : vector<1x128xf32> to vector<1x64xf32>
    %292 = arith.addf %290, %291 : vector<1x64xf32>
    %cst_88 = arith.constant 1.562500e-02 : f32
    %293 = vector.broadcast %cst_88 : f32 to vector<1x64xf32>
    %294 = arith.mulf %289, %293 : vector<1x64xf32>
    %cst_89 = arith.constant 1.562500e-02 : f32
    %295 = vector.broadcast %cst_89 : f32 to vector<1x64xf32>
    %296 = arith.mulf %292, %295 : vector<1x64xf32>
    %297 = arith.mulf %294, %294 : vector<1x64xf32>
    %298 = arith.subf %296, %297 : vector<1x64xf32>
    %cst_90 = arith.constant 9.99999974E-6 : f32
    %299 = vector.broadcast %cst_90 : f32 to vector<1x64xf32>
    %300 = arith.addf %298, %299 : vector<1x64xf32>
    %301 = math.rsqrt %300 : vector<1x64xf32>
    %302 = arith.mulf %245, %301 : vector<1x64xf32>
    %303 = arith.mulf %294, %302 : vector<1x64xf32>
    %304 = arith.subf %246, %303 : vector<1x64xf32>
    %305 = tpu.concatenate %302, %302, %302, %302, %302, %302, %302, %302 in 1 : vector<1x64xf32>, vector<1x64xf32>, vector<1x64xf32>, vector<1x64xf32>, vector<1x64xf32>, vector<1x64xf32>, vector<1x64xf32>, vector<1x64xf32> -> vector<1x512xf32>
    %306 = tpu.concatenate %304, %304, %304, %304, %304, %304, %304, %304 in 1 : vector<1x64xf32>, vector<1x64xf32>, vector<1x64xf32>, vector<1x64xf32>, vector<1x64xf32>, vector<1x64xf32>, vector<1x64xf32>, vector<1x64xf32> -> vector<1x512xf32>
    %307 = vector.broadcast %305 : vector<1x512xf32> to vector<32x512xf32>
    %308 = arith.mulf %244, %307 : vector<32x512xf32>
    %309 = vector.broadcast %306 : vector<1x512xf32> to vector<32x512xf32>
    %310 = arith.addf %308, %309 : vector<32x512xf32>
    %cst_91 = arith.constant 0.000000e+00 : f32
    %311 = vector.broadcast %cst_91 : f32 to vector<32x512xf32>
    %312 = arith.cmpf oge, %310, %311 : vector<32x512xf32>
    %cst_92 = arith.constant 2.000000e-01 : f32
    %313 = vector.broadcast %cst_92 : f32 to vector<32x512xf32>
    %314 = arith.mulf %313, %310 : vector<32x512xf32>
    %315 = arith.select %312, %310, %314 : vector<32x512xi1>, vector<32x512xf32>
    %316 = arith.truncf %315 : vector<32x512xf32> to vector<32x512xbf16>
    %c0_93 = arith.constant 0 : index
    %c0_94 = arith.constant 0 : index
    %317 = vector.load %arg5[%c0_93, %c0_94] : memref<512x18xbf16, #tpu.memory_space<vmem>>, vector<512x18xbf16>
    %cst_95 = arith.constant dense<0.000000e+00> : vector<32x18xf32>
    %318 = tpu.matmul %316, %317, %cst_95 {dimension_numbers = #tpu.dot_dimension_numbers<[1], [0], [0], [1], [0, 0, 1, 1], [], []>} : vector<32x512xbf16>, vector<512x18xbf16>, vector<32x18xf32> -> vector<32x18xf32>
    %319 = tpu.iota {dimensions = array<i32: 1>} : vector<32x16xi32>
    %320 = vector.extract_strided_slice %318 {offsets = [0, 0], sizes = [32, 16], strides = [1, 1]} : vector<32x18xf32> to vector<32x16xf32>
    %c0_i32_96 = arith.constant 0 : i32
    %321 = vector.broadcast %c0_i32_96 : i32 to vector<32x16xi32>
    %322 = arith.cmpi eq, %319, %321 : vector<32x16xi32>
    %323 = vector.extract_strided_slice %318 {offsets = [0, 16], sizes = [32, 1], strides = [1, 1]} : vector<32x18xf32> to vector<32x1xf32>
    %cst_97 = arith.constant 0.000000e+00 : f32
    %324 = vector.broadcast %cst_97 : f32 to vector<8x1xf32>
    %325 = vector.extract_strided_slice %323 {offsets = [0, 0], sizes = [24, 1], strides = [1, 1]} : vector<32x1xf32> to vector<24x1xf32>
    %326 = tpu.concatenate %324, %325 in 0 : vector<8x1xf32>, vector<24x1xf32> -> vector<32x1xf32>
    %cst_98 = arith.constant 0.000000e+00 : f32
    %327 = vector.shape_cast %326 : vector<32x1xf32> to vector<32x1xf32>
    %328 = vector.broadcast %327 : vector<32x1xf32> to vector<32x16xf32>
    %329 = vector.broadcast %cst_98 : f32 to vector<32x16xf32>
    %330 = arith.select %322, %328, %329 : vector<32x16xi1>, vector<32x16xf32>
    %331 = arith.addf %320, %330 : vector<32x16xf32>
    %c15_i32 = arith.constant 15 : i32
    %332 = vector.broadcast %c15_i32 : i32 to vector<32x16xi32>
    %333 = arith.cmpi eq, %319, %332 : vector<32x16xi32>
    %334 = vector.extract_strided_slice %318 {offsets = [0, 17], sizes = [32, 1], strides = [1, 1]} : vector<32x18xf32> to vector<32x1xf32>
    %cst_99 = arith.constant 0.000000e+00 : f32
    %335 = vector.broadcast %cst_99 : f32 to vector<8x1xf32>
    %336 = vector.extract_strided_slice %334 {offsets = [8, 0], sizes = [24, 1], strides = [1, 1]} : vector<32x1xf32> to vector<24x1xf32>
    %337 = tpu.concatenate %336, %335 in 0 : vector<24x1xf32>, vector<8x1xf32> -> vector<32x1xf32>
    %cst_100 = arith.constant 0.000000e+00 : f32
    %338 = vector.shape_cast %337 : vector<32x1xf32> to vector<32x1xf32>
    %339 = vector.broadcast %338 : vector<32x1xf32> to vector<32x16xf32>
    %340 = vector.broadcast %cst_100 : f32 to vector<32x16xf32>
    %341 = arith.select %333, %339, %340 : vector<32x16xi1>, vector<32x16xf32>
    %342 = arith.addf %331, %341 : vector<32x16xf32>
    %343 = vector.extract_strided_slice %342 {offsets = [0, 0], sizes = [8, 16], strides = [1, 1]} : vector<32x16xf32> to vector<8x16xf32>
    %344 = vector.extract_strided_slice %342 {offsets = [8, 0], sizes = [8, 16], strides = [1, 1]} : vector<32x16xf32> to vector<8x16xf32>
    %345 = vector.extract_strided_slice %342 {offsets = [16, 0], sizes = [8, 16], strides = [1, 1]} : vector<32x16xf32> to vector<8x16xf32>
    %346 = vector.extract_strided_slice %342 {offsets = [24, 0], sizes = [8, 16], strides = [1, 1]} : vector<32x16xf32> to vector<8x16xf32>
    %347 = tpu.concatenate %343, %344, %345, %346 in 1 : vector<8x16xf32>, vector<8x16xf32>, vector<8x16xf32>, vector<8x16xf32> -> vector<8x64xf32>
    %348 = math.tanh %347 : vector<8x64xf32>
    %c0_101 = arith.constant 0 : index
    %c0_102 = arith.constant 0 : index
    %349 = vector.load %arg14[%c0_101, %c0_102] : memref<8x64xf32, #tpu.memory_space<vmem>>, vector<8x64xf32>
    tpu.vector_store %arg14[%c0_101, %c0_102], %348 {strides = array<i32>} : memref<8x64xf32, #tpu.memory_space<vmem>>, vector<8x64xf32>,
    return
  }
}

</mosaic_0001>

<llo_original>
// kernel: generator_forward.1
$region0: #{generator_forward.1}
  #allocation0 [shape = 'u32[]', space=smem, size = 0x4, offset = 0x4, fixed_abs, tag = 'smem constant byte address 0x4 - core index']
  #allocation1 [shape = 'u32[144,128]{1,0:T(1,128)}', space=vmem, size = 0x12000, scoped, tag = 'internal scratch']
  %s0 = inlined_call_operand.hbm [shape: f32[8,16], index: 0, kind: input, shape index: {}]
  %s1 = inlined_call_operand.hbm [shape: bf16[16,2048], index: 1, kind: input, shape index: {}]
  %s2 = inlined_call_operand.hbm [shape: bf16[512,1024], index: 2, kind: input, shape index: {}]
  %s3 = inlined_call_operand.hbm [shape: bf16[256,512], index: 3, kind: input, shape index: {}]
  %s4 = inlined_call_operand.hbm [shape: bf16[128,256], index: 4, kind: input, shape index: {}]
  %s5 = inlined_call_operand.hbm [shape: bf16[512,18], index: 5, kind: input, shape index: {}]
  %s6 = inlined_call_operand.hbm [shape: f32[1,512], index: 6, kind: input, shape index: {}]
  %s7 = inlined_call_operand.hbm [shape: f32[1,512], index: 7, kind: input, shape index: {}]
  %s8 = inlined_call_operand.hbm [shape: f32[1,256], index: 8, kind: input, shape index: {}]
  %s9 = inlined_call_operand.hbm [shape: f32[1,256], index: 9, kind: input, shape index: {}]
  %s10 = inlined_call_operand.hbm [shape: f32[1,128], index: 10, kind: input, shape index: {}]
  %s11 = inlined_call_operand.hbm [shape: f32[1,128], index: 11, kind: input, shape index: {}]
  %s12 = inlined_call_operand.hbm [shape: f32[1,64], index: 12, kind: input, shape index: {}]
  %s13 = inlined_call_operand.hbm [shape: f32[1,64], index: 13, kind: input, shape index: {}]
  %s14 = inlined_call_operand.hbm [shape: f32[8,64], index: 14, kind: output, shape index: {}]
  %s15 = sld [smem:[#allocation0]]
  $region122: #{generator_forward.1} parent=0
    _
  %s17 = ssub.s32 1, %s15
  %s18 = scalar_select 0, %s17, %s15
  $region1: #{generator_forward.1} parent=0
    #allocation2 [shape = 'u8[4096]{0}', space=vmem, size = 0x1000, scoped, tag = 'input window, operand 0, single buffered']
    #allocation3 [shape = 's32[1]{0}', space=sflag, size = 0x4, scoped, tag = 'scoped memory for generator_forward.1']
    #allocation4 [shape = 's32[1]{0}', space=sflag, size = 0x4, scoped, tag = 'scoped memory for generator_forward.1']
    #allocation5 [shape = 'u8[65536]{0}', space=vmem, size = 0x10000, scoped, tag = 'input window, operand 1, single buffered']
    #allocation6 [shape = 's32[1]{0}', space=sflag, size = 0x4, scoped, tag = 'scoped memory for generator_forward.1']
    #allocation7 [shape = 'u8[1048576]{0}', space=vmem, size = 0x100000, scoped, tag = 'input window, operand 2, single buffered']
    #allocation8 [shape = 'u8[262144]{0}', space=vmem, size = 0x40000, scoped, tag = 'input window, operand 3, single buffered']
    #allocation9 [shape = 's32[1]{0}', space=sflag, size = 0x4, scoped, tag = 'scoped memory for generator_forward.1']
    #allocation10 [shape = 'u8[65536]{0}', space=vmem, size = 0x10000, scoped, tag = 'input window, operand 4, single buffered']
    #allocation11 [shape = 'u8[131072]{0}', space=vmem, size = 0x20000, scoped, tag = 'input window, operand 5, single buffered']
    #allocation12 [shape = 's32[1]{0}', space=sflag, size = 0x4, scoped, tag = 'scoped memory for generator_forward.1']
    #allocation13 [shape = 'u8[2048]{0}', space=vmem, size = 0x800, scoped, tag = 'input window, operand 6, single buffered']
    #allocation14 [shape = 'u8[2048]{0}', space=vmem, size = 0x800, scoped, tag = 'input window, operand 7, single buffered']
    #allocation15 [shape = 's32[1]{0}', space=sflag, size = 0x4, scoped, tag = 'scoped memory for generator_forward.1']
    #allocation16 [shape = 'u8[1024]{0}', space=vmem, size = 0x400, scoped, tag = 'input window, operand 8, single buffered']
    #allocation17 [shape = 'u8[1024]{0}', space=vmem, size = 0x400, scoped, tag = 'input window, operand 9, single buffered']
    #allocation18 [shape = 's32[1]{0}', space=sflag, size = 0x4, scoped, tag = 'scoped memory for generator_forward.1']
    #allocation19 [shape = 'u8[512]{0}', space=vmem, size = 0x400, scoped, tag = 'input window, operand 10, single buffered']
    #allocation20 [shape = 'u8[512]{0}', space=vmem, size = 0x400, scoped, tag = 'input window, operand 11, single buffered']
    #allocation21 [shape = 's32[1]{0}', space=sflag, size = 0x4, scoped, tag = 'scoped memory for generator_forward.1']
    #allocation22 [shape = 'u8[512]{0}', space=vmem, size = 0x400, scoped, tag = 'input window, operand 12, single buffered']
    #allocation23 [shape = 'u8[512]{0}', space=vmem, size = 0x400, scoped, tag = 'input window, operand 13, single buffered']
    #allocation24 [shape = 's32[1]{0}', space=sflag, size = 0x4, scoped, tag = 'scoped memory for generator_forward.1']
    #allocation25 [shape = 'u8[4096]{0}', space=vmem, size = 0x1000, scoped, tag = 'output window, operand 0, single buffered']
    %19 = vsyncpa [#allocation3], 0
    %20 = vsyncpa [#allocation6], 0
    %21 = vsyncpa [#allocation9], 0
    %22 = vsyncpa [#allocation12], 0
    %23 = vsyncpa [#allocation15], 0
    %24 = vsyncpa [#allocation18], 0
    %25 = vsyncpa [#allocation21], 0
    %26 = vsyncpa [#allocation24], 0
    %27 = vsyncpa [#allocation4], 0
    // Predicated region
    $region2: #{generator_forward.1} parent=1 // pred_check
      _
    $region3: #{generator_forward.1} parent=1 // pred_check_branch
      %29 = sbr.rel (0) target = $region5
    $region4: #{generator_forward.1} parent=1 // pred_region
      %s31 = ssub.s32 128, 128
      %32 = vsyncadd [#allocation3], %s31
      %s34 = sshll.u32 [#allocation2], 4
      %s35 = int_to_ptr.vmem [resolvable:$true] %s34
      %37 = dma.hbm_to_vmem [thread:$0]  %s0, 128, %s35, [#allocation3]
    $region5: #{generator_forward.1} parent=1 // pred_fallthru
      _
    // Predicated region
    $region6: #{generator_forward.1} parent=1 // pred_check
      _
    $region7: #{generator_forward.1} parent=1 // pred_check_branch
      %39 = sbr.rel (0) target = $region9
    $region8: #{generator_forward.1} parent=1 // pred_region
      %s41 = ssub.s32 2048, 2048
      %42 = vsyncadd [#allocation6], %s41
      %s43 = sshll.u32 [#allocation5], 4
      %s44 = int_to_ptr.vmem [resolvable:$true] %s43
      %49 = dma.hbm_to_vmem [thread:$0]  %s1, 2048, %s44, [#allocation6], 1024, 1024, 64
    $region9: #{generator_forward.1} parent=1 // pred_fallthru
      _
    // Predicated region
    $region10: #{generator_forward.1} parent=1 // pred_check
      _
    $region11: #{generator_forward.1} parent=1 // pred_check_branch
      %51 = sbr.rel (0) target = $region13
    $region12: #{generator_forward.1} parent=1 // pred_region
      %s53 = ssub.s32 32768, 32768
      %54 = vsyncadd [#allocation6], %s53
      %s55 = sshll.u32 [#allocation7], 4
      %s56 = int_to_ptr.vmem [resolvable:$true] %s55
      %61 = dma.hbm_to_vmem [thread:$0]  %s2, 32768, %s56, [#allocation6], 512, 512, 32
    $region13: #{generator_forward.1} parent=1 // pred_fallthru
      _
    // Predicated region
    $region14: #{generator_forward.1} parent=1 // pred_check
      _
    $region15: #{generator_forward.1} parent=1 // pred_check_branch
      %63 = sbr.rel (0) target = $region17
    $region16: #{generator_forward.1} parent=1 // pred_region
      %s65 = ssub.s32 8192, 8192
      %66 = vsyncadd [#allocation9], %s65
      %s67 = sshll.u32 [#allocation8], 4
      %s68 = int_to_ptr.vmem [resolvable:$true] %s67
      %73 = dma.hbm_to_vmem [thread:$0]  %s3, 8192, %s68, [#allocation9], 256, 256, 16
    $region17: #{generator_forward.1} parent=1 // pred_fallthru
      _
    // Predicated region
    $region18: #{generator_forward.1} parent=1 // pred_check
      _
    $region19: #{generator_forward.1} parent=1 // pred_check_branch
      %75 = sbr.rel (0) target = $region21
    $region20: #{generator_forward.1} parent=1 // pred_region
      %s77 = ssub.s32 2048, 2048
      %78 = vsyncadd [#allocation9], %s77
      %s79 = sshll.u32 [#allocation10], 4
      %s80 = int_to_ptr.vmem [resolvable:$true] %s79
      %85 = dma.hbm_to_vmem [thread:$0]  %s4, 2048, %s80, [#allocation9], 128, 128, 8
    $region21: #{generator_forward.1} parent=1 // pred_fallthru
      _
    // Predicated region
    $region22: #{generator_forward.1} parent=1 // pred_check
      _
    $region23: #{generator_forward.1} parent=1 // pred_check_branch
      %87 = sbr.rel (0) target = $region25
    $region24: #{generator_forward.1} parent=1 // pred_region
      %s89 = ssub.s32 4096, 4096
      %90 = vsyncadd [#allocation12], %s89
      %s91 = sshll.u32 [#allocation11], 4
      %s92 = int_to_ptr.vmem [resolvable:$true] %s91
      %97 = dma.hbm_to_vmem [thread:$0]  %s5, 4096, %s92, [#allocation12], 64, 64, 4
    $region25: #{generator_forward.1} parent=1 // pred_fallthru
      _
    // Predicated region
    $region26: #{generator_forward.1} parent=1 // pred_check
      _
    $region27: #{generator_forward.1} parent=1 // pred_check_branch
      %99 = sbr.rel (0) target = $region29
    $region28: #{generator_forward.1} parent=1 // pred_region
      %s101 = ssub.s32 64, 64
      %102 = vsyncadd [#allocation12], %s101
      %s104 = sshll.u32 [#allocation13], 4
      %s105 = int_to_ptr.vmem [resolvable:$true] %s104
      %107 = dma.hbm_to_vmem [thread:$0]  %s6, 64, %s105, [#allocation12]
    $region29: #{generator_forward.1} parent=1 // pred_fallthru
      _
    // Predicated region
    $region30: #{generator_forward.1} parent=1 // pred_check
      _
    $region31: #{generator_forward.1} parent=1 // pred_check_branch
      %109 = sbr.rel (0) target = $region33
    $region32: #{generator_forward.1} parent=1 // pred_region
      %s111 = ssub.s32 64, 64
      %112 = vsyncadd [#allocation15], %s111
      %s114 = sshll.u32 [#allocation14], 4
      %s115 = int_to_ptr.vmem [resolvable:$true] %s114
      %117 = dma.hbm_to_vmem [thread:$0]  %s7, 64, %s115, [#allocation15]
    $region33: #{generator_forward.1} parent=1 // pred_fallthru
      _
    // Predicated region
    $region34: #{generator_forward.1} parent=1 // pred_check
      _
    $region35: #{generator_forward.1} parent=1 // pred_check_branch
      %119 = sbr.rel (0) target = $region37
    $region36: #{generator_forward.1} parent=1 // pred_region
      %s121 = ssub.s32 32, 32
      %122 = vsyncadd [#allocation15], %s121
      %s124 = sshll.u32 [#allocation16], 4
      %s125 = int_to_ptr.vmem [resolvable:$true] %s124
      %127 = dma.hbm_to_vmem [thread:$0]  %s8, 32, %s125, [#allocation15]
    $region37: #{generator_forward.1} parent=1 // pred_fallthru
      _
    // Predicated region
    $region38: #{generator_forward.1} parent=1 // pred_check
      _
    $region39: #{generator_forward.1} parent=1 // pred_check_branch
      %129 = sbr.rel (0) target = $region41
    $region40: #{generator_forward.1} parent=1 // pred_region
      %s131 = ssub.s32 32, 32
      %132 = vsyncadd [#allocation18], %s131
      %s134 = sshll.u32 [#allocation17], 4
      %s135 = int_to_ptr.vmem [resolvable:$true] %s134
      %137 = dma.hbm_to_vmem [thread:$0]  %s9, 32, %s135, [#allocation18]
    $region41: #{generator_forward.1} parent=1 // pred_fallthru
      _
    // Predicated region
    $region42: #{generator_forward.1} parent=1 // pred_check
      _
    $region43: #{generator_forward.1} parent=1 // pred_check_branch
      %139 = sbr.rel (0) target = $region45
    $region44: #{generator_forward.1} parent=1 // pred_region
      %s141 = ssub.s32 16, 16
      %142 = vsyncadd [#allocation18], %s141
      %s144 = sshll.u32 [#allocation19], 4
      %s145 = int_to_ptr.vmem [resolvable:$true] %s144
      %147 = dma.hbm_to_vmem [thread:$0]  %s10, 16, %s145, [#allocation18]
    $region45: #{generator_forward.1} parent=1 // pred_fallthru
      _
    // Predicated region
    $region46: #{generator_forward.1} parent=1 // pred_check
      _
    $region47: #{generator_forward.1} parent=1 // pred_check_branch
      %149 = sbr.rel (0) target = $region49
    $region48: #{generator_forward.1} parent=1 // pred_region
      %s151 = ssub.s32 16, 16
      %152 = vsyncadd [#allocation21], %s151
      %s154 = sshll.u32 [#allocation20], 4
      %s155 = int_to_ptr.vmem [resolvable:$true] %s154
      %157 = dma.hbm_to_vmem [thread:$0]  %s11, 16, %s155, [#allocation21]
    $region49: #{generator_forward.1} parent=1 // pred_fallthru
      _
    // Predicated region
    $region50: #{generator_forward.1} parent=1 // pred_check
      _
    $region51: #{generator_forward.1} parent=1 // pred_check_branch
      %159 = sbr.rel (0) target = $region53
    $region52: #{generator_forward.1} parent=1 // pred_region
      %s161 = ssub.s32 16, 16
      %162 = vsyncadd [#allocation21], %s161
      %s164 = sshll.u32 [#allocation22], 4
      %s165 = int_to_ptr.vmem [resolvable:$true] %s164
      %167 = dma.hbm_to_vmem [thread:$0]  %s12, 16, %s165, [#allocation21]
    $region53: #{generator_forward.1} parent=1 // pred_fallthru
      _
    // Predicated region
    $region54: #{generator_forward.1} parent=1 // pred_check
      _
    $region55: #{generator_forward.1} parent=1 // pred_check_branch
      %169 = sbr.rel (0) target = $region57
    $region56: #{generator_forward.1} parent=1 // pred_region
      %s171 = ssub.s32 16, 16
      %172 = vsyncadd [#allocation24], %s171
      %s174 = sshll.u32 [#allocation23], 4
      %s175 = int_to_ptr.vmem [resolvable:$true] %s174
      %177 = dma.hbm_to_vmem [thread:$0]  %s13, 16, %s175, [#allocation24]
    $region57: #{generator_forward.1} parent=1 // pred_fallthru
      _
    // Predicated region
    $region58: #{generator_forward.1} parent=1 // pred_check
      _
    $region59: #{generator_forward.1} parent=1 // pred_check_branch
      %179 = sbr.rel (0) target = $region61
    $region60: #{generator_forward.1} parent=1 // pred_region
      %180 = dma.done [#allocation3], 128
    $region61: #{generator_forward.1} parent=1 // pred_fallthru
      _
    // Predicated region
    $region62: #{generator_forward.1} parent=1 // pred_check
      _
    $region63: #{generator_forward.1} parent=1 // pred_check_branch
      %182 = sbr.rel (0) target = $region65
    $region64: #{generator_forward.1} parent=1 // pred_region
      %183 = dma.done [#allocation6], 2048
    $region65: #{generator_forward.1} parent=1 // pred_fallthru
      _
    // Predicated region
    $region66: #{generator_forward.1} parent=1 // pred_check
      _
    $region67: #{generator_forward.1} parent=1 // pred_check_branch
      %185 = sbr.rel (0) target = $region69
    $region68: #{generator_forward.1} parent=1 // pred_region
      %186 = dma.done [#allocation6], 32768
    $region69: #{generator_forward.1} parent=1 // pred_fallthru
      _
    // Predicated region
    $region70: #{generator_forward.1} parent=1 // pred_check
      _
    $region71: #{generator_forward.1} parent=1 // pred_check_branch
      %188 = sbr.rel (0) target = $region73
    $region72: #{generator_forward.1} parent=1 // pred_region
      %189 = dma.done [#allocation9], 8192
    $region73: #{generator_forward.1} parent=1 // pred_fallthru
      _
    // Predicated region
    $region74: #{generator_forward.1} parent=1 // pred_check
      _
    $region75: #{generator_forward.1} parent=1 // pred_check_branch
      %191 = sbr.rel (0) target = $region77
    $region76: #{generator_forward.1} parent=1 // pred_region
      %192 = dma.done [#allocation9], 2048
    $region77: #{generator_forward.1} parent=1 // pred_fallthru
      _
    // Predicated region
    $region78: #{generator_forward.1} parent=1 // pred_check
      _
    $region79: #{generator_forward.1} parent=1 // pred_check_branch
      %194 = sbr.rel (0) target = $region81
    $region80: #{generator_forward.1} parent=1 // pred_region
      %195 = dma.done [#allocation12], 4096
    $region81: #{generator_forward.1} parent=1 // pred_fallthru
      _
    // Predicated region
    $region82: #{generator_forward.1} parent=1 // pred_check
      _
    $region83: #{generator_forward.1} parent=1 // pred_check_branch
      %197 = sbr.rel (0) target = $region85
    $region84: #{generator_forward.1} parent=1 // pred_region
      %198 = dma.done [#allocation12], 64
    $region85: #{generator_forward.1} parent=1 // pred_fallthru
      _
    // Predicated region
    $region86: #{generator_forward.1} parent=1 // pred_check
      _
    $region87: #{generator_forward.1} parent=1 // pred_check_branch
      %200 = sbr.rel (0) target = $region89
    $region88: #{generator_forward.1} parent=1 // pred_region
      %201 = dma.done [#allocation15], 64
    $region89: #{generator_forward.1} parent=1 // pred_fallthru
      _
    // Predicated region
    $region90: #{generator_forward.1} parent=1 // pred_check
      _
    $region91: #{generator_forward.1} parent=1 // pred_check_branch
      %203 = sbr.rel (0) target = $region93
    $region92: #{generator_forward.1} parent=1 // pred_region
      %204 = dma.done [#allocation15], 32
    $region93: #{generator_forward.1} parent=1 // pred_fallthru
      _
    // Predicated region
    $region94: #{generator_forward.1} parent=1 // pred_check
      _
    $region95: #{generator_forward.1} parent=1 // pred_check_branch
      %206 = sbr.rel (0) target = $region97
    $region96: #{generator_forward.1} parent=1 // pred_region
      %207 = dma.done [#allocation18], 32
    $region97: #{generator_forward.1} parent=1 // pred_fallthru
      _
    // Predicated region
    $region98: #{generator_forward.1} parent=1 // pred_check
      _
    $region99: #{generator_forward.1} parent=1 // pred_check_branch
      %209 = sbr.rel (0) target = $region101
    $region100: #{generator_forward.1} parent=1 // pred_region
      %210 = dma.done [#allocation18], 16
    $region101: #{generator_forward.1} parent=1 // pred_fallthru
      _
    // Predicated region
    $region102: #{generator_forward.1} parent=1 // pred_check
      _
    $region103: #{generator_forward.1} parent=1 // pred_check_branch
      %212 = sbr.rel (0) target = $region105
    $region104: #{generator_forward.1} parent=1 // pred_region
      %213 = dma.done [#allocation21], 16
    $region105: #{generator_forward.1} parent=1 // pred_fallthru
      _
    // Predicated region
    $region106: #{generator_forward.1} parent=1 // pred_check
      _
    $region107: #{generator_forward.1} parent=1 // pred_check_branch
      %215 = sbr.rel (0) target = $region109
    $region108: #{generator_forward.1} parent=1 // pred_region
      %216 = dma.done [#allocation21], 16
    $region109: #{generator_forward.1} parent=1 // pred_fallthru
      _
    // Predicated region
    $region110: #{generator_forward.1} parent=1 // pred_check
      _
    $region111: #{generator_forward.1} parent=1 // pred_check_branch
      %218 = sbr.rel (0) target = $region113
    $region112: #{generator_forward.1} parent=1 // pred_region
      %219 = dma.done [#allocation24], 16
    $region113: #{generator_forward.1} parent=1 // pred_fallthru
      _
    %v221 = vld [vmem:[#allocation2] sm:$0xff]
    %v222 = vpack.c.bf16 %v221, %v221
    %v223 = vld [vmem:[#allocation5] sm:$0xff]
    %v224 = vld [vmem:[#allocation5 + $0x8] sm:$0xff]
    %v225 = vld [vmem:[#allocation5 + $0x10] sm:$0xff]
    %v226 = vld [vmem:[#allocation5 + $0x18] sm:$0xff]
    %v227 = vld [vmem:[#allocation5 + $0x20] sm:$0xff]
    %v228 = vld [vmem:[#allocation5 + $0x28] sm:$0xff]
    %v229 = vld [vmem:[#allocation5 + $0x30] sm:$0xff]
    %v230 = vld [vmem:[#allocation5 + $0x38] sm:$0xff]
    %v231 = vld [vmem:[#allocation5 + $0x40] sm:$0xff]
    %v232 = vld [vmem:[#allocation5 + $0x48] sm:$0xff]
    %v233 = vld [vmem:[#allocation5 + $0x50] sm:$0xff]
    %v234 = vld [vmem:[#allocation5 + $0x58] sm:$0xff]
    %v235 = vld [vmem:[#allocation5 + $0x60] sm:$0xff]
    %v236 = vld [vmem:[#allocation5 + $0x68] sm:$0xff]
    %v237 = vld [vmem:[#allocation5 + $0x70] sm:$0xff]
    %v238 = vld [vmem:[#allocation5 + $0x78] sm:$0xff]
    %v255 = vunpack.c.l.b16 %v223
    %v256 = vunpack.c.h.b16 %v223
    %v257 = vunpack.c.l.b16 %v224
    %v258 = vunpack.c.h.b16 %v224
    %v259 = vunpack.c.l.b16 %v225
    %v260 = vunpack.c.h.b16 %v225
    %v261 = vunpack.c.l.b16 %v226
    %v262 = vunpack.c.h.b16 %v226
    %v263 = vunpack.c.l.b16 %v227
    %v264 = vunpack.c.h.b16 %v227
    %v265 = vunpack.c.l.b16 %v228
    %v266 = vunpack.c.h.b16 %v228
    %v267 = vunpack.c.l.b16 %v229
    %v268 = vunpack.c.h.b16 %v229
    %v269 = vunpack.c.l.b16 %v230
    %v270 = vunpack.c.h.b16 %v230
    %v271 = vunpack.c.l.b16 %v231
    %v272 = vunpack.c.h.b16 %v231
    %v273 = vunpack.c.l.b16 %v232
    %v274 = vunpack.c.h.b16 %v232
    %v275 = vunpack.c.l.b16 %v233
    %v276 = vunpack.c.h.b16 %v233
    %v277 = vunpack.c.l.b16 %v234
    %v278 = vunpack.c.h.b16 %v234
    %v279 = vunpack.c.l.b16 %v235
    %v280 = vunpack.c.h.b16 %v235
    %v281 = vunpack.c.l.b16 %v236
    %v282 = vunpack.c.h.b16 %v236
    %v283 = vunpack.c.l.b16 %v237
    %v284 = vunpack.c.h.b16 %v237
    %v285 = vunpack.c.l.b16 %v238
    %v286 = vunpack.c.h.b16 %v238
    %v287 = vpack.c.b16 %v271, %v255
    %v288 = vpack.c.b16 %v272, %v256
    %v289 = vpack.c.b16 %v273, %v257
    %v290 = vpack.c.b16 %v274, %v258
    %v291 = vpack.c.b16 %v275, %v259
    %v292 = vpack.c.b16 %v276, %v260
    %v293 = vpack.c.b16 %v277, %v261
    %v294 = vpack.c.b16 %v278, %v262
    %v295 = vpack.c.b16 %v279, %v263
    %v296 = vpack.c.b16 %v280, %v264
    %v297 = vpack.c.b16 %v281, %v265
    %v298 = vpack.c.b16 %v282, %v266
    %v299 = vpack.c.b16 %v283, %v267
    %v300 = vpack.c.b16 %v284, %v268
    %v301 = vpack.c.b16 %v285, %v269
    %v302 = vpack.c.b16 %v286, %v270
    %vm319 = vcmask 130048
    %v321 = vsel %vm319, %v222, 0
    %323 = vmatprep.subr.bf16.mxu0 %v288
    %324 = vmatpush1.bf16.msra.mxu0 %v287
    %325 = vmatprep.subr.bf16.mxu0 0
    %326 = vmatpush1.bf16.msra.mxu0 0
    %327 = vmatprep.subr.bf16.mxu0 0
    %328 = vmatpush1.bf16.msra.mxu0 0
    %329 = vmatprep.subr.bf16.mxu0 0
    %330 = vmatpush1.bf16.msra.mxu0 0
    %331 = vmatprep.subr.bf16.mxu0 0
    %332 = vmatpush1.bf16.msra.mxu0 0
    %333 = vmatprep.subr.bf16.mxu0 0
    %334 = vmatpush1.bf16.msra.mxu0 0
    %335 = vmatprep.subr.bf16.mxu0 0
    %336 = vmatpush1.bf16.msra.mxu0 0
    %337 = vmatprep.subr.bf16.mxu0 0
    %338 = vmatpush1.bf16.msra.mxu0 0
    %339 = vmatprep.subr.bf16.mxu0 0
    %340 = vmatpush1.bf16.msra.mxu0 0
    %341 = vmatprep.subr.bf16.mxu0 0
    %342 = vmatpush1.bf16.msra.mxu0 0
    %343 = vmatprep.subr.bf16.mxu0 0
    %344 = vmatpush1.bf16.msra.mxu0 0
    %345 = vmatprep.subr.bf16.mxu0 0
    %346 = vmatpush1.bf16.msra.mxu0 0
    %347 = vmatprep.subr.bf16.mxu0 0
    %348 = vmatpush1.bf16.msra.mxu0 0
    %349 = vmatprep.subr.bf16.mxu0 0
    %350 = vmatpush1.bf16.msra.mxu0 0
    %351 = vmatprep.subr.bf16.mxu0 0
    %352 = vmatpush1.bf16.msra.mxu0 0
    %353 = vmatprep.subr.bf16.mxu0 0
    %354 = vmatpush1.bf16.msra.mxu0 0
    %355 = vmatprep.mubr.bf16.mxu0 0
    %356 = vmatmul.mubr.bf16.gmra.mrb[0].mxu0 %v321
    %v357 = vpop.f32.mrb[0].mxu0
    %v358 = vadd.f32 0.0, %v357
    %v359 = vpop.f32.mrb[0].mxu0
    %v360 = vadd.f32 0.0, %v359
    %v361 = vpop.f32.mrb[0].mxu0
    %v362 = vpop.f32.mrb[0].mxu0
    %363 = vdwg.mxu0
    %364 = vmatprep.subr.bf16.mxu0 %v290
    %365 = vmatpush1.bf16.msra.mxu0 %v289
    %366 = vmatprep.subr.bf16.mxu0 0
    %367 = vmatpush1.bf16.msra.mxu0 0
    %368 = vmatprep.subr.bf16.mxu0 0
    %369 = vmatpush1.bf16.msra.mxu0 0
    %370 = vmatprep.subr.bf16.mxu0 0
    %371 = vmatpush1.bf16.msra.mxu0 0
    %372 = vmatprep.subr.bf16.mxu0 0
    %373 = vmatpush1.bf16.msra.mxu0 0
    %374 = vmatprep.subr.bf16.mxu0 0
    %375 = vmatpush1.bf16.msra.mxu0 0
    %376 = vmatprep.subr.bf16.mxu0 0
    %377 = vmatpush1.bf16.msra.mxu0 0
    %378 = vmatprep.subr.bf16.mxu0 0
    %379 = vmatpush1.bf16.msra.mxu0 0
    %380 = vmatprep.subr.bf16.mxu0 0
    %381 = vmatpush1.bf16.msra.mxu0 0
    %382 = vmatprep.subr.bf16.mxu0 0
    %383 = vmatpush1.bf16.msra.mxu0 0
    %384 = vmatprep.subr.bf16.mxu0 0
    %385 = vmatpush1.bf16.msra.mxu0 0
    %386 = vmatprep.subr.bf16.mxu0 0
    %387 = vmatpush1.bf16.msra.mxu0 0
    %388 = vmatprep.subr.bf16.mxu0 0
    %389 = vmatpush1.bf16.msra.mxu0 0
    %390 = vmatprep.subr.bf16.mxu0 0
    %391 = vmatpush1.bf16.msra.mxu0 0
    %392 = vmatprep.subr.bf16.mxu0 0
    %393 = vmatpush1.bf16.msra.mxu0 0
    %394 = vmatprep.subr.bf16.mxu0 0
    %395 = vmatpush1.bf16.msra.mxu0 0
    %396 = vmatprep.mubr.bf16.mxu0 0
    %397 = vmatmul.mubr.bf16.gmra.mrb[0].mxu0 %v321
    %v398 = vpop.f32.mrb[0].mxu0
    %v399 = vadd.f32 0.0, %v398
    %v400 = vpop.f32.mrb[0].mxu0
    %v401 = vadd.f32 0.0, %v400
    %v402 = vpop.f32.mrb[0].mxu0
    %v403 = vpop.f32.mrb[0].mxu0
    %404 = vdwg.mxu0
    %405 = vmatprep.subr.bf16.mxu0 %v292
    %406 = vmatpush1.bf16.msra.mxu0 %v291
    %407 = vmatprep.subr.bf16.mxu0 0
    %408 = vmatpush1.bf16.msra.mxu0 0
    %409 = vmatprep.subr.bf16.mxu0 0
    %410 = vmatpush1.bf16.msra.mxu0 0
    %411 = vmatprep.subr.bf16.mxu0 0
    %412 = vmatpush1.bf16.msra.mxu0 0
    %413 = vmatprep.subr.bf16.mxu0 0
    %414 = vmatpush1.bf16.msra.mxu0 0
    %415 = vmatprep.subr.bf16.mxu0 0
    %416 = vmatpush1.bf16.msra.mxu0 0
    %417 = vmatprep.subr.bf16.mxu0 0
    %418 = vmatpush1.bf16.msra.mxu0 0
    %419 = vmatprep.subr.bf16.mxu0 0
    %420 = vmatpush1.bf16.msra.mxu0 0
    %421 = vmatprep.subr.bf16.mxu0 0
    %422 = vmatpush1.bf16.msra.mxu0 0
    %423 = vmatprep.subr.bf16.mxu0 0
    %424 = vmatpush1.bf16.msra.mxu0 0
    %425 = vmatprep.subr.bf16.mxu0 0
    %426 = vmatpush1.bf16.msra.mxu0 0
    %427 = vmatprep.subr.bf16.mxu0 0
    %428 = vmatpush1.bf16.msra.mxu0 0
    %429 = vmatprep.subr.bf16.mxu0 0
    %430 = vmatpush1.bf16.msra.mxu0 0
    %431 = vmatprep.subr.bf16.mxu0 0
    %432 = vmatpush1.bf16.msra.mxu0 0
    %433 = vmatprep.subr.bf16.mxu0 0
    %434 = vmatpush1.bf16.msra.mxu0 0
    %435 = vmatprep.subr.bf16.mxu0 0
    %436 = vmatpush1.bf16.msra.mxu0 0
    %437 = vmatprep.mubr.bf16.mxu0 0
    %438 = vmatmul.mubr.bf16.gmra.mrb[0].mxu0 %v321
    %v439 = vpop.f32.mrb[0].mxu0
    %v440 = vadd.f32 0.0, %v439
    %v441 = vpop.f32.mrb[0].mxu0
    %v442 = vadd.f32 0.0, %v441
    %v443 = vpop.f32.mrb[0].mxu0
    %v444 = vpop.f32.mrb[0].mxu0
    %445 = vdwg.mxu0
    %446 = vmatprep.subr.bf16.mxu0 %v294
    %447 = vmatpush1.bf16.msra.mxu0 %v293
    %448 = vmatprep.subr.bf16.mxu0 0
    %449 = vmatpush1.bf16.msra.mxu0 0
    %450 = vmatprep.subr.bf16.mxu0 0
    %451 = vmatpush1.bf16.msra.mxu0 0
    %452 = vmatprep.subr.bf16.mxu0 0
    %453 = vmatpush1.bf16.msra.mxu0 0
    %454 = vmatprep.subr.bf16.mxu0 0
    %455 = vmatpush1.bf16.msra.mxu0 0
    %456 = vmatprep.subr.bf16.mxu0 0
    %457 = vmatpush1.bf16.msra.mxu0 0
    %458 = vmatprep.subr.bf16.mxu0 0
    %459 = vmatpush1.bf16.msra.mxu0 0
    %460 = vmatprep.subr.bf16.mxu0 0
    %461 = vmatpush1.bf16.msra.mxu0 0
    %462 = vmatprep.subr.bf16.mxu0 0
    %463 = vmatpush1.bf16.msra.mxu0 0
    %464 = vmatprep.subr.bf16.mxu0 0
    %465 = vmatpush1.bf16.msra.mxu0 0
    %466 = vmatprep.subr.bf16.mxu0 0
    %467 = vmatpush1.bf16.msra.mxu0 0
    %468 = vmatprep.subr.bf16.mxu0 0
    %469 = vmatpush1.bf16.msra.mxu0 0
    %470 = vmatprep.subr.bf16.mxu0 0
    %471 = vmatpush1.bf16.msra.mxu0 0
    %472 = vmatprep.subr.bf16.mxu0 0
    %473 = vmatpush1.bf16.msra.mxu0 0
    %474 = vmatprep.subr.bf16.mxu0 0
    %475 = vmatpush1.bf16.msra.mxu0 0
    %476 = vmatprep.subr.bf16.mxu0 0
    %477 = vmatpush1.bf16.msra.mxu0 0
    %478 = vmatprep.mubr.bf16.mxu0 0
    %479 = vmatmul.mubr.bf16.gmra.mrb[0].mxu0 %v321
    %v480 = vpop.f32.mrb[0].mxu0
    %v481 = vadd.f32 0.0, %v480
    %v482 = vpop.f32.mrb[0].mxu0
    %v483 = vadd.f32 0.0, %v482
    %v484 = vpop.f32.mrb[0].mxu0
    %v485 = vpop.f32.mrb[0].mxu0
    %486 = vdwg.mxu0
    %487 = vmatprep.subr.bf16.mxu0 %v296
    %488 = vmatpush1.bf16.msra.mxu0 %v295
    %489 = vmatprep.subr.bf16.mxu0 0
    %490 = vmatpush1.bf16.msra.mxu0 0
    %491 = vmatprep.subr.bf16.mxu0 0
    %492 = vmatpush1.bf16.msra.mxu0 0
    %493 = vmatprep.subr.bf16.mxu0 0
    %494 = vmatpush1.bf16.msra.mxu0 0
    %495 = vmatprep.subr.bf16.mxu0 0
    %496 = vmatpush1.bf16.msra.mxu0 0
    %497 = vmatprep.subr.bf16.mxu0 0
    %498 = vmatpush1.bf16.msra.mxu0 0
    %499 = vmatprep.subr.bf16.mxu0 0
    %500 = vmatpush1.bf16.msra.mxu0 0
    %501 = vmatprep.subr.bf16.mxu0 0
    %502 = vmatpush1.bf16.msra.mxu0 0
    %503 = vmatprep.subr.bf16.mxu0 0
    %504 = vmatpush1.bf16.msra.mxu0 0
    %505 = vmatprep.subr.bf16.mxu0 0
    %506 = vmatpush1.bf16.msra.mxu0 0
    %507 = vmatprep.subr.bf16.mxu0 0
    %508 = vmatpush1.bf16.msra.mxu0 0
    %509 = vmatprep.subr.bf16.mxu0 0
    %510 = vmatpush1.bf16.msra.mxu0 0
    %511 = vmatprep.subr.bf16.mxu0 0
    %512 = vmatpush1.bf16.msra.mxu0 0
    %513 = vmatprep.subr.bf16.mxu0 0
    %514 = vmatpush1.bf16.msra.mxu0 0
    %515 = vmatprep.subr.bf16.mxu0 0
    %516 = vmatpush1.bf16.msra.mxu0 0
    %517 = vmatprep.subr.bf16.mxu0 0
    %518 = vmatpush1.bf16.msra.mxu0 0
    %519 = vmatprep.mubr.bf16.mxu0 0
    %520 = vmatmul.mubr.bf16.gmra.mrb[0].mxu0 %v321
    %v521 = vpop.f32.mrb[0].mxu0
    %v522 = vadd.f32 0.0, %v521
    %v523 = vpop.f32.mrb[0].mxu0
    %v524 = vadd.f32 0.0, %v523
    %v525 = vpop.f32.mrb[0].mxu0
    %v526 = vpop.f32.mrb[0].mxu0
    %527 = vdwg.mxu0
    %528 = vmatprep.subr.bf16.mxu0 %v298
    %529 = vmatpush1.bf16.msra.mxu0 %v297
    %530 = vmatprep.subr.bf16.mxu0 0
    %531 = vmatpush1.bf16.msra.mxu0 0
    %532 = vmatprep.subr.bf16.mxu0 0
    %533 = vmatpush1.bf16.msra.mxu0 0
    %534 = vmatprep.subr.bf16.mxu0 0
    %535 = vmatpush1.bf16.msra.mxu0 0
    %536 = vmatprep.subr.bf16.mxu0 0
    %537 = vmatpush1.bf16.msra.mxu0 0
    %538 = vmatprep.subr.bf16.mxu0 0
    %539 = vmatpush1.bf16.msra.mxu0 0
    %540 = vmatprep.subr.bf16.mxu0 0
    %541 = vmatpush1.bf16.msra.mxu0 0
    %542 = vmatprep.subr.bf16.mxu0 0
    %543 = vmatpush1.bf16.msra.mxu0 0
    %544 = vmatprep.subr.bf16.mxu0 0
    %545 = vmatpush1.bf16.msra.mxu0 0
    %546 = vmatprep.subr.bf16.mxu0 0
    %547 = vmatpush1.bf16.msra.mxu0 0
    %548 = vmatprep.subr.bf16.mxu0 0
    %549 = vmatpush1.bf16.msra.mxu0 0
    %550 = vmatprep.subr.bf16.mxu0 0
    %551 = vmatpush1.bf16.msra.mxu0 0
    %552 = vmatprep.subr.bf16.mxu0 0
    %553 = vmatpush1.bf16.msra.mxu0 0
    %554 = vmatprep.subr.bf16.mxu0 0
    %555 = vmatpush1.bf16.msra.mxu0 0
    %556 = vmatprep.subr.bf16.mxu0 0
    %557 = vmatpush1.bf16.msra.mxu0 0
    %558 = vmatprep.subr.bf16.mxu0 0
    %559 = vmatpush1.bf16.msra.mxu0 0
    %560 = vmatprep.mubr.bf16.mxu0 0
    %561 = vmatmul.mubr.bf16.gmra.mrb[0].mxu0 %v321
    %v562 = vpop.f32.mrb[0].mxu0
    %v563 = vadd.f32 0.0, %v562
    %v564 = vpop.f32.mrb[0].mxu0
    %v565 = vadd.f32 0.0, %v564
    %v566 = vpop.f32.mrb[0].mxu0
    %v567 = vpop.f32.mrb[0].mxu0
    %568 = vdwg.mxu0
    %569 = vmatprep.subr.bf16.mxu0 %v300
    %570 = vmatpush1.bf16.msra.mxu0 %v299
    %571 = vmatprep.subr.bf16.mxu0 0
    %572 = vmatpush1.bf16.msra.mxu0 0
    %573 = vmatprep.subr.bf16.mxu0 0
    %574 = vmatpush1.bf16.msra.mxu0 0
    %575 = vmatprep.subr.bf16.mxu0 0
    %576 = vmatpush1.bf16.msra.mxu0 0
    %577 = vmatprep.subr.bf16.mxu0 0
    %578 = vmatpush1.bf16.msra.mxu0 0
    %579 = vmatprep.subr.bf16.mxu0 0
    %580 = vmatpush1.bf16.msra.mxu0 0
    %581 = vmatprep.subr.bf16.mxu0 0
    %582 = vmatpush1.bf16.msra.mxu0 0
    %583 = vmatprep.subr.bf16.mxu0 0
    %584 = vmatpush1.bf16.msra.mxu0 0
    %585 = vmatprep.subr.bf16.mxu0 0
    %586 = vmatpush1.bf16.msra.mxu0 0
    %587 = vmatprep.subr.bf16.mxu0 0
    %588 = vmatpush1.bf16.msra.mxu0 0
    %589 = vmatprep.subr.bf16.mxu0 0
    %590 = vmatpush1.bf16.msra.mxu0 0
    %591 = vmatprep.subr.bf16.mxu0 0
    %592 = vmatpush1.bf16.msra.mxu0 0
    %593 = vmatprep.subr.bf16.mxu0 0
    %594 = vmatpush1.bf16.msra.mxu0 0
    %595 = vmatprep.subr.bf16.mxu0 0
    %596 = vmatpush1.bf16.msra.mxu0 0
    %597 = vmatprep.subr.bf16.mxu0 0
    %598 = vmatpush1.bf16.msra.mxu0 0
    %599 = vmatprep.subr.bf16.mxu0 0
    %600 = vmatpush1.bf16.msra.mxu0 0
    %601 = vmatprep.mubr.bf16.mxu0 0
    %602 = vmatmul.mubr.bf16.gmra.mrb[0].mxu0 %v321
    %v603 = vpop.f32.mrb[0].mxu0
    %v604 = vadd.f32 0.0, %v603
    %v605 = vpop.f32.mrb[0].mxu0
    %v606 = vadd.f32 0.0, %v605
    %v607 = vpop.f32.mrb[0].mxu0
    %v608 = vpop.f32.mrb[0].mxu0
    %609 = vdwg.mxu0
    %610 = vmatprep.subr.bf16.mxu0 %v302
    %611 = vmatpush1.bf16.msra.mxu0 %v301
    %612 = vmatprep.subr.bf16.mxu0 0
    %613 = vmatpush1.bf16.msra.mxu0 0
    %614 = vmatprep.subr.bf16.mxu0 0
    %615 = vmatpush1.bf16.msra.mxu0 0
    %616 = vmatprep.subr.bf16.mxu0 0
    %617 = vmatpush1.bf16.msra.mxu0 0
    %618 = vmatprep.subr.bf16.mxu0 0
    %619 = vmatpush1.bf16.msra.mxu0 0
    %620 = vmatprep.subr.bf16.mxu0 0
    %621 = vmatpush1.bf16.msra.mxu0 0
    %622 = vmatprep.subr.bf16.mxu0 0
    %623 = vmatpush1.bf16.msra.mxu0 0
    %624 = vmatprep.subr.bf16.mxu0 0
    %625 = vmatpush1.bf16.msra.mxu0 0
    %626 = vmatprep.subr.bf16.mxu0 0
    %627 = vmatpush1.bf16.msra.mxu0 0
    %628 = vmatprep.subr.bf16.mxu0 0
    %629 = vmatpush1.bf16.msra.mxu0 0
    %630 = vmatprep.subr.bf16.mxu0 0
    %631 = vmatpush1.bf16.msra.mxu0 0
    %632 = vmatprep.subr.bf16.mxu0 0
    %633 = vmatpush1.bf16.msra.mxu0 0
    %634 = vmatprep.subr.bf16.mxu0 0
    %635 = vmatpush1.bf16.msra.mxu0 0
    %636 = vmatprep.subr.bf16.mxu0 0
    %637 = vmatpush1.bf16.msra.mxu0 0
    %638 = vmatprep.subr.bf16.mxu0 0
    %639 = vmatpush1.bf16.msra.mxu0 0
    %640 = vmatprep.subr.bf16.mxu0 0
    %641 = vmatpush1.bf16.msra.mxu0 0
    %642 = vmatprep.mubr.bf16.mxu0 0
    %643 = vmatmul.mubr.bf16.gmra.mrb[0].mxu0 %v321
    %v644 = vpop.f32.mrb[0].mxu0
    %v645 = vadd.f32 0.0, %v644
    %v646 = vpop.f32.mrb[0].mxu0
    %v647 = vadd.f32 0.0, %v646
    %v648 = vpop.f32.mrb[0].mxu0
    %v649 = vpop.f32.mrb[0].mxu0
    %650 = vdwg.mxu0
    %v651 = vld [vmem:[#allocation13] sm:$0xf]
    %v652 = vld [vmem:[#allocation14] sm:$0xf]
    %v653 = vlaneseq
    %v654 = vshrl.u32 %v653, 7
    %v655 = vadd.s32 %v654, 8
    %v656 = vadd.s32 %v654, 16
    %v657 = vadd.s32 %v654, 24
    %vm658 = vcmp.lt.s32.totalorder %v654, 0
    %v659 = vsub.s32 0, %v654
    %v660 = vsel %vm658, %v659, %v654
    %v661 = vshrl.u32 %v660, 3
    %v662 = vand.u32 %v660, 7
    %v663 = vsub.s32 0, %v662
    %v664 = vsel %vm658, %v663, %v662
    %vm665 = vcmp.lt.s32.totalorder %v655, 0
    %v666 = vsub.s32 0, %v655
    %v667 = vsel %vm665, %v666, %v655
    %v668 = vshrl.u32 %v667, 3
    %v669 = vand.u32 %v667, 7
    %v670 = vsub.s32 0, %v669
    %v671 = vsel %vm665, %v670, %v669
    %vm672 = vcmp.lt.s32.totalorder %v656, 0
    %v673 = vsub.s32 0, %v656
    %v674 = vsel %vm672, %v673, %v656
    %v675 = vshrl.u32 %v674, 3
    %v676 = vand.u32 %v674, 7
    %v677 = vsub.s32 0, %v676
    %v678 = vsel %vm672, %v677, %v676
    %vm679 = vcmp.lt.s32.totalorder %v657, 0
    %v680 = vsub.s32 0, %v657
    %v681 = vsel %vm679, %v680, %v657
    %v682 = vshrl.u32 %v681, 3
    %v683 = vand.u32 %v681, 7
    %v684 = vsub.s32 0, %v683
    %v685 = vsel %vm679, %v684, %v683
    %vm686 = vcmp.ne.s32.totalorder %v664, 0
    %vm687 = vcmp.ne.s32.totalorder %v671, 0
    %vm688 = vcmp.ne.s32.totalorder %v678, 0
    %vm689 = vcmp.ne.s32.totalorder %v685, 0
    %vm690 = vcmp.lt.s32.totalorder %v664, 0
    %vm691 = vcmp.lt.s32.totalorder %v671, 0
    %vm692 = vcmp.lt.s32.totalorder %v678, 0
    %vm693 = vcmp.lt.s32.totalorder %v685, 0
    %vm694 = vmand %vm690, %vm686
    %vm695 = vmand %vm691, %vm687
    %vm696 = vmand %vm692, %vm688
    %vm697 = vmand %vm693, %vm689
    %v698 = vadd.s32 %v664, 8
    %v699 = vadd.s32 %v671, 8
    %v700 = vadd.s32 %v678, 8
    %v701 = vadd.s32 %v685, 8
    %v702 = vsel %vm694, %v698, %v664
    %v703 = vsel %vm695, %v699, %v671
    %v704 = vsel %vm696, %v700, %v678
    %v705 = vsel %vm697, %v701, %v685
    %vm706 = vcmp.lt.s32.totalorder %v702, 2
    %vm707 = vcmp.lt.s32.totalorder %v703, 2
    %vm708 = vcmp.lt.s32.totalorder %v704, 2
    %vm709 = vcmp.lt.s32.totalorder %v705, 2
    %v710 = vsel %vm706, 1, 0
    %v711 = vsel %vm707, 1, 0
    %v712 = vsel %vm708, 1, 0
    %v713 = vsel %vm709, 1, 0
    %vm714 = vcmp.eq.s32.totalorder %v710, 1
    %vm715 = vcmp.eq.s32.totalorder %v711, 1
    %vm716 = vcmp.eq.s32.totalorder %v712, 1
    %vm717 = vcmp.eq.s32.totalorder %v713, 1
    %v718 = vsel %vm714, %v358, 0.0
    %v719 = vsel %vm714, %v360, 0.0
    %v720 = vsel %vm714, %v399, 0.0
    %v721 = vsel %vm714, %v401, 0.0
    %v722 = vsel %vm715, %v440, 0.0
    %v723 = vsel %vm715, %v442, 0.0
    %v724 = vsel %vm715, %v481, 0.0
    %v725 = vsel %vm715, %v483, 0.0
    %v726 = vsel %vm716, %v522, 0.0
    %v727 = vsel %vm716, %v524, 0.0
    %v728 = vsel %vm716, %v563, 0.0
    %v729 = vsel %vm716, %v565, 0.0
    %v730 = vsel %vm717, %v604, 0.0
    %v731 = vsel %vm717, %v606, 0.0
    %v732 = vsel %vm717, %v645, 0.0
    %v733 = vsel %vm717, %v647, 0.0
    %v734 = vadd.f32 %v718, %v722
    %v735 = vadd.f32 %v734, %v726
    %v736 = vadd.f32 %v735, %v730
    %v737 = vrot.slane %v736, 4
    %v738 = vadd.f32 %v736, %v737
    %v739 = vrot.slane %v738, 2
    %v740 = vadd.f32 %v738, %v739
    %v741 = vrot.slane %v740, 1
    %v742 = vadd.f32 %v740, %v741
    %v743 = vadd.f32 %v719, %v723
    %v744 = vadd.f32 %v743, %v727
    %v745 = vadd.f32 %v744, %v731
    %v746 = vrot.slane %v745, 4
    %v747 = vadd.f32 %v745, %v746
    %v748 = vrot.slane %v747, 2
    %v749 = vadd.f32 %v747, %v748
    %v750 = vrot.slane %v749, 1
    %v751 = vadd.f32 %v749, %v750
    %v752 = vadd.f32 %v720, %v724
    %v753 = vadd.f32 %v752, %v728
    %v754 = vadd.f32 %v753, %v732
    %v755 = vrot.slane %v754, 4
    %v756 = vadd.f32 %v754, %v755
    %v757 = vrot.slane %v756, 2
    %v758 = vadd.f32 %v756, %v757
    %v759 = vrot.slane %v758, 1
    %v760 = vadd.f32 %v758, %v759
    %v761 = vadd.f32 %v721, %v725
    %v762 = vadd.f32 %v761, %v729
    %v763 = vadd.f32 %v762, %v733
    %v764 = vrot.slane %v763, 4
    %v765 = vadd.f32 %v763, %v764
    %v766 = vrot.slane %v765, 2
    %v767 = vadd.f32 %v765, %v766
    %v768 = vrot.slane %v767, 1
    %v769 = vadd.f32 %v767, %v768
    %v770 = vmul.f32 %v718, %v358
    %v771 = vmul.f32 %v719, %v360
    %v772 = vmul.f32 %v720, %v399
    %v773 = vmul.f32 %v721, %v401
    %v774 = vmul.f32 %v722, %v440
    %v775 = vmul.f32 %v723, %v442
    %v776 = vmul.f32 %v724, %v481
    %v777 = vmul.f32 %v725, %v483
    %v778 = vmul.f32 %v726, %v522
    %v779 = vmul.f32 %v727, %v524
    %v780 = vmul.f32 %v728, %v563
    %v781 = vmul.f32 %v729, %v565
    %v782 = vmul.f32 %v730, %v604
    %v783 = vmul.f32 %v731, %v606
    %v784 = vmul.f32 %v732, %v645
    %v785 = vmul.f32 %v733, %v647
    %v786 = vadd.f32 %v770, %v774
    %v787 = vadd.f32 %v786, %v778
    %v788 = vadd.f32 %v787, %v782
    %v789 = vrot.slane %v788, 4
    %v790 = vadd.f32 %v788, %v789
    %v791 = vrot.slane %v790, 2
    %v792 = vadd.f32 %v790, %v791
    %v793 = vrot.slane %v792, 1
    %v794 = vadd.f32 %v792, %v793
    %v795 = vadd.f32 %v771, %v775
    %v796 = vadd.f32 %v795, %v779
    %v797 = vadd.f32 %v796, %v783
    %v798 = vrot.slane %v797, 4
    %v799 = vadd.f32 %v797, %v798
    %v800 = vrot.slane %v799, 2
    %v801 = vadd.f32 %v799, %v800
    %v802 = vrot.slane %v801, 1
    %v803 = vadd.f32 %v801, %v802
    %v804 = vadd.f32 %v772, %v776
    %v805 = vadd.f32 %v804, %v780
    %v806 = vadd.f32 %v805, %v784
    %v807 = vrot.slane %v806, 4
    %v808 = vadd.f32 %v806, %v807
    %v809 = vrot.slane %v808, 2
    %v810 = vadd.f32 %v808, %v809
    %v811 = vrot.slane %v810, 1
    %v812 = vadd.f32 %v810, %v811
    %v813 = vadd.f32 %v773, %v777
    %v814 = vadd.f32 %v813, %v781
    %v815 = vadd.f32 %v814, %v785
    %v816 = vrot.slane %v815, 4
    %v817 = vadd.f32 %v815, %v816
    %v818 = vrot.slane %v817, 2
    %v819 = vadd.f32 %v817, %v818
    %v820 = vrot.slane %v819, 1
    %v821 = vadd.f32 %v819, %v820
    %v822 = vmul.f32 %v742, 0.125
    %v823 = vmul.f32 %v751, 0.125
    %v824 = vmul.f32 %v760, 0.125
    %v825 = vmul.f32 %v769, 0.125
    %v826 = vmul.f32 %v794, 0.125
    %v827 = vmul.f32 %v803, 0.125
    %v828 = vmul.f32 %v812, 0.125
    %v829 = vmul.f32 %v821, 0.125
    %v830 = vmul.f32 %v822, %v822
    %v831 = vmul.f32 %v823, %v823
    %v832 = vmul.f32 %v824, %v824
    %v833 = vmul.f32 %v825, %v825
    %v834 = vsub.f32 %v826, %v830
    %v835 = vsub.f32 %v827, %v831
    %v836 = vsub.f32 %v828, %v832
    %v837 = vsub.f32 %v829, %v833
    %v838 = vadd.f32 %v834, 1e-05
    %v839 = vadd.f32 %v835, 1e-05
    %v840 = vadd.f32 %v836, 1e-05
    %v841 = vadd.f32 %v837, 1e-05
    %v842 = vrsqrt.pop %v838
    %v843 = vrsqrt.pop %v839
    %v844 = vrsqrt.pop %v840
    %v845 = vrsqrt.pop %v841
    %v850 = vcombine.low %v842, %v843
    %v851 = vcombine.low %v844, %v845
    %v853 = vunpack.c.l.s4 1966171168
    %v854 = vunpack.c.0.s8 %v853
    %v855 = vlaneseq
    %v856 = vshrl.u32 %v855, 7
    %v857 = vsub.s32 %v854, %v856
    %v858 = vrot.slane %v850, %v857
    %v860 = vunpack.c.l.s4 1966171168
    %v861 = vunpack.c.0.s8 %v860
    %v862 = vlaneseq
    %v863 = vshrl.u32 %v862, 7
    %v864 = vsub.s32 %v861, %v863
    %v865 = vrot.slane %v851, %v864
    %v866 = vcombine.low %v858, %v865
    %v868 = vunpack.c.l.s4 1966171168
    %v869 = vunpack.c.0.s8 %v868
    %v870 = vlaneseq
    %v871 = vshrl.u32 %v870, 7
    %v872 = vsub.s32 %v869, %v871
    %v873 = vrot.slane %v866, %v872
    %v875 = vmul.f32 %v651, %v873
    %v877 = vlaneseq
    %v878 = vshrl.u32 %v877, 7
    %v879 = vsub.s32 0, %v878
    %v880 = vrot.slane %v875, %v879
    %v881 = vlaneseq
    %v882 = vshrl.u32 %v881, 7
    %v883 = vsub.s32 1, %v882
    %v884 = vrot.slane %v875, %v883
    %v885 = vlaneseq
    %v886 = vshrl.u32 %v885, 7
    %v887 = vsub.s32 2, %v886
    %v888 = vrot.slane %v875, %v887
    %v889 = vlaneseq
    %v890 = vshrl.u32 %v889, 7
    %v891 = vsub.s32 3, %v890
    %v892 = vrot.slane %v875, %v891
    %v897 = vmul.f32 %v822, %v880
    %v898 = vmul.f32 %v823, %v884
    %v899 = vmul.f32 %v824, %v888
    %v900 = vmul.f32 %v825, %v892
    %v905 = vcombine.low %v897, %v898
    %v906 = vcombine.low %v899, %v900
    %v908 = vunpack.c.l.s4 1966171168
    %v909 = vunpack.c.0.s8 %v908
    %v910 = vlaneseq
    %v911 = vshrl.u32 %v910, 7
    %v912 = vsub.s32 %v909, %v911
    %v913 = vrot.slane %v905, %v912
    %v915 = vunpack.c.l.s4 1966171168
    %v916 = vunpack.c.0.s8 %v915
    %v917 = vlaneseq
    %v918 = vshrl.u32 %v917, 7
    %v919 = vsub.s32 %v916, %v918
    %v920 = vrot.slane %v906, %v919
    %v921 = vcombine.low %v913, %v920
    %v923 = vunpack.c.l.s4 1966171168
    %v924 = vunpack.c.0.s8 %v923
    %v925 = vlaneseq
    %v926 = vshrl.u32 %v925, 7
    %v927 = vsub.s32 %v924, %v926
    %v928 = vrot.slane %v921, %v927
    %v930 = vsub.f32 %v652, %v928
    %v931 = vmul.f32 %v358, %v880
    %v932 = vmul.f32 %v360, %v884
    %v933 = vmul.f32 %v399, %v888
    %v934 = vmul.f32 %v401, %v892
    %v935 = vmul.f32 %v440, %v880
    %v936 = vmul.f32 %v442, %v884
    %v937 = vmul.f32 %v481, %v888
    %v938 = vmul.f32 %v483, %v892
    %v939 = vmul.f32 %v522, %v880
    %v940 = vmul.f32 %v524, %v884
    %v941 = vmul.f32 %v563, %v888
    %v942 = vmul.f32 %v565, %v892
    %v943 = vmul.f32 %v604, %v880
    %v944 = vmul.f32 %v606, %v884
    %v945 = vmul.f32 %v645, %v888
    %v946 = vmul.f32 %v647, %v892
    %v948 = vlaneseq
    %v949 = vshrl.u32 %v948, 7
    %v950 = vsub.s32 0, %v949
    %v951 = vrot.slane %v930, %v950
    %v952 = vlaneseq
    %v953 = vshrl.u32 %v952, 7
    %v954 = vsub.s32 1, %v953
    %v955 = vrot.slane %v930, %v954
    %v956 = vlaneseq
    %v957 = vshrl.u32 %v956, 7
    %v958 = vsub.s32 2, %v957
    %v959 = vrot.slane %v930, %v958
    %v960 = vlaneseq
    %v961 = vshrl.u32 %v960, 7
    %v962 = vsub.s32 3, %v961
    %v963 = vrot.slane %v930, %v962
    %v968 = vadd.f32 %v931, %v951
    %v969 = vadd.f32 %v932, %v955
    %v970 = vadd.f32 %v933, %v959
    %v971 = vadd.f32 %v934, %v963
    %v972 = vadd.f32 %v935, %v951
    %v973 = vadd.f32 %v936, %v955
    %v974 = vadd.f32 %v937, %v959
    %v975 = vadd.f32 %v938, %v963
    %v976 = vadd.f32 %v939, %v951
    %v977 = vadd.f32 %v940, %v955
    %v978 = vadd.f32 %v941, %v959
    %v979 = vadd.f32 %v942, %v963
    %v980 = vadd.f32 %v943, %v951
    %v981 = vadd.f32 %v944, %v955
    %v982 = vadd.f32 %v945, %v959
    %v983 = vadd.f32 %v946, %v963
    %vm984 = vcmp.ge.f32.partialorder %v968, 0.0
    %vm985 = vcmp.ge.f32.partialorder %v969, 0.0
    %vm986 = vcmp.ge.f32.partialorder %v970, 0.0
    %vm987 = vcmp.ge.f32.partialorder %v971, 0.0
    %vm988 = vcmp.ge.f32.partialorder %v972, 0.0
    %vm989 = vcmp.ge.f32.partialorder %v973, 0.0
    %vm990 = vcmp.ge.f32.partialorder %v974, 0.0
    %vm991 = vcmp.ge.f32.partialorder %v975, 0.0
    %vm992 = vcmp.ge.f32.partialorder %v976, 0.0
    %vm993 = vcmp.ge.f32.partialorder %v977, 0.0
    %vm994 = vcmp.ge.f32.partialorder %v978, 0.0
    %vm995 = vcmp.ge.f32.partialorder %v979, 0.0
    %vm996 = vcmp.ge.f32.partialorder %v980, 0.0
    %vm997 = vcmp.ge.f32.partialorder %v981, 0.0
    %vm998 = vcmp.ge.f32.partialorder %v982, 0.0
    %vm999 = vcmp.ge.f32.partialorder %v983, 0.0
    %v1000 = vmul.f32 %v968, 0.2
    %v1001 = vmul.f32 %v969, 0.2
    %v1002 = vmul.f32 %v970, 0.2
    %v1003 = vmul.f32 %v971, 0.2
    %v1004 = vmul.f32 %v972, 0.2
    %v1005 = vmul.f32 %v973, 0.2
    %v1006 = vmul.f32 %v974, 0.2
    %v1007 = vmul.f32 %v975, 0.2
    %v1008 = vmul.f32 %v976, 0.2
    %v1009 = vmul.f32 %v977, 0.2
    %v1010 = vmul.f32 %v978, 0.2
    %v1011 = vmul.f32 %v979, 0.2
    %v1012 = vmul.f32 %v980, 0.2
    %v1013 = vmul.f32 %v981, 0.2
    %v1014 = vmul.f32 %v982, 0.2
    %v1015 = vmul.f32 %v983, 0.2
    %v1016 = vsel %vm984, %v968, %v1000
    %v1017 = vsel %vm985, %v969, %v1001
    %v1018 = vsel %vm986, %v970, %v1002
    %v1019 = vsel %vm987, %v971, %v1003
    %v1020 = vsel %vm988, %v972, %v1004
    %v1021 = vsel %vm989, %v973, %v1005
    %v1022 = vsel %vm990, %v974, %v1006
    %v1023 = vsel %vm991, %v975, %v1007
    %v1024 = vsel %vm992, %v976, %v1008
    %v1025 = vsel %vm993, %v977, %v1009
    %v1026 = vsel %vm994, %v978, %v1010
    %v1027 = vsel %vm995, %v979, %v1011
    %v1028 = vsel %vm996, %v980, %v1012
    %v1029 = vsel %vm997, %v981, %v1013
    %v1030 = vsel %vm998, %v982, %v1014
    %v1031 = vsel %vm999, %v983, %v1015
    %v1032 = vpack.c.bf16 %v1020, %v1016
    %v1033 = vpack.c.bf16 %v1021, %v1017
    %v1034 = vpack.c.bf16 %v1022, %v1018
    %v1035 = vpack.c.bf16 %v1023, %v1019
    %v1036 = vpack.c.bf16 %v1028, %v1024
    %v1037 = vpack.c.bf16 %v1029, %v1025
    %v1038 = vpack.c.bf16 %v1030, %v1026
    %v1039 = vpack.c.bf16 %v1031, %v1027
    %v1040 = vld [vmem:[#allocation7] sm:$0xff]
    %v1041 = vld [vmem:[#allocation7 + $0x8] sm:$0xff]
    %v1042 = vld [vmem:[#allocation7 + $0x10] sm:$0xff]
    %v1043 = vld [vmem:[#allocation7 + $0x18] sm:$0xff]
    %v1044 = vld [vmem:[#allocation7 + $0x20] sm:$0xff]
    %v1045 = vld [vmem:[#allocation7 + $0x28] sm:$0xff]
    %v1046 = vld [vmem:[#allocation7 + $0x30] sm:$0xff]
    %v1047 = vld [vmem:[#allocation7 + $0x38] sm:$0xff]
    %v1048 = vld [vmem:[#allocation7 + $0x40] sm:$0xff]
    %v1049 = vld [vmem:[#allocation7 + $0x48] sm:$0xff]
    %v1050 = vld [vmem:[#allocation7 + $0x50] sm:$0xff]
    %v1051 = vld [vmem:[#allocation7 + $0x58] sm:$0xff]
    %v1052 = vld [vmem:[#allocation7 + $0x60] sm:$0xff]
    %v1053 = vld [vmem:[#allocation7 + $0x68] sm:$0xff]
    %v1054 = vld [vmem:[#allocation7 + $0x70] sm:$0xff]
    %v1055 = vld [vmem:[#allocation7 + $0x78] sm:$0xff]
    %v1056 = vld [vmem:[#allocation7 + $0x80] sm:$0xff]
    %v1057 = vld [vmem:[#allocation7 + $0x88] sm:$0xff]
    %v1058 = vld [vmem:[#allocation7 + $0x90] sm:$0xff]
    %v1059 = vld [vmem:[#allocation7 + $0x98] sm:$0xff]
    %v1060 = vld [vmem:[#allocation7 + $0xa0] sm:$0xff]
    %v1061 = vld [vmem:[#allocation7 + $0xa8] sm:$0xff]
    %v1062 = vld [vmem:[#allocation7 + $0xb0] sm:$0xff]
    %v1063 = vld [vmem:[#allocation7 + $0xb8] sm:$0xff]
    %v1064 = vld [vmem:[#allocation7 + $0xc0] sm:$0xff]
    %v1065 = vld [vmem:[#allocation7 + $0xc8] sm:$0xff]
    %v1066 = vld [vmem:[#allocation7 + $0xd0] sm:$0xff]
    %v1067 = vld [vmem:[#allocation7 + $0xd8] sm:$0xff]
    %v1068 = vld [vmem:[#allocation7 + $0xe0] sm:$0xff]
    %v1069 = vld [vmem:[#allocation7 + $0xe8] sm:$0xff]
    %v1070 = vld [vmem:[#allocation7 + $0xf0] sm:$0xff]
    %v1071 = vld [vmem:[#allocation7 + $0xf8] sm:$0xff]
    %v1072 = vld [vmem:[#allocation7 + $0x100] sm:$0xff]
    %v1073 = vld [vmem:[#allocation7 + $0x108] sm:$0xff]
    %v1074 = vld [vmem:[#allocation7 + $0x110] sm:$0xff]
    %v1075 = vld [vmem:[#allocation7 + $0x118] sm:$0xff]
    %v1076 = vld [vmem:[#allocation7 + $0x120] sm:$0xff]
    %v1077 = vld [vmem:[#allocation7 + $0x128] sm:$0xff]
    %v1078 = vld [vmem:[#allocation7 + $0x130] sm:$0xff]
    %v1079 = vld [vmem:[#allocation7 + $0x138] sm:$0xff]
    %v1080 = vld [vmem:[#allocation7 + $0x140] sm:$0xff]
    %v1081 = vld [vmem:[#allocation7 + $0x148] sm:$0xff]
    %v1082 = vld [vmem:[#allocation7 + $0x150] sm:$0xff]
    %v1083 = vld [vmem:[#allocation7 + $0x158] sm:$0xff]
    %v1084 = vld [vmem:[#allocation7 + $0x160] sm:$0xff]
    %v1085 = vld [vmem:[#allocation7 + $0x168] sm:$0xff]
    %v1086 = vld [vmem:[#allocation7 + $0x170] sm:$0xff]
    %v1087 = vld [vmem:[#allocation7 + $0x178] sm:$0xff]
    %v1088 = vld [vmem:[#allocation7 + $0x180] sm:$0xff]
    %v1089 = vld [vmem:[#allocation7 + $0x188] sm:$0xff]
    %v1090 = vld [vmem:[#allocation7 + $0x190] sm:$0xff]
    %v1091 = vld [vmem:[#allocation7 + $0x198] sm:$0xff]
    %v1092 = vld [vmem:[#allocation7 + $0x1a0] sm:$0xff]
    %v1093 = vld [vmem:[#allocation7 + $0x1a8] sm:$0xff]
    %v1094 = vld [vmem:[#allocation7 + $0x1b0] sm:$0xff]
    %v1095 = vld [vmem:[#allocation7 + $0x1b8] sm:$0xff]
    %v1096 = vld [vmem:[#allocation7 + $0x1c0] sm:$0xff]
    %v1097 = vld [vmem:[#allocation7 + $0x1c8] sm:$0xff]
    %v1098 = vld [vmem:[#allocation7 + $0x1d0] sm:$0xff]
    %v1099 = vld [vmem:[#allocation7 + $0x1d8] sm:$0xff]
    %v1100 = vld [vmem:[#allocation7 + $0x1e0] sm:$0xff]
    %v1101 = vld [vmem:[#allocation7 + $0x1e8] sm:$0xff]
    %v1102 = vld [vmem:[#allocation7 + $0x1f0] sm:$0xff]
    %v1103 = vld [vmem:[#allocation7 + $0x1f8] sm:$0xff]
    %v1104 = vld [vmem:[#allocation7 + $0x200] sm:$0xff]
    %v1105 = vld [vmem:[#allocation7 + $0x208] sm:$0xff]
    %v1106 = vld [vmem:[#allocation7 + $0x210] sm:$0xff]
    %v1107 = vld [vmem:[#allocation7 + $0x218] sm:$0xff]
    %v1108 = vld [vmem:[#allocation7 + $0x220] sm:$0xff]
    %v1109 = vld [vmem:[#allocation7 + $0x228] sm:$0xff]
    %v1110 = vld [vmem:[#allocation7 + $0x230] sm:$0xff]
    %v1111 = vld [vmem:[#allocation7 + $0x238] sm:$0xff]
    %v1112 = vld [vmem:[#allocation7 + $0x240] sm:$0xff]
    %v1113 = vld [vmem:[#allocation7 + $0x248] sm:$0xff]
    %v1114 = vld [vmem:[#allocation7 + $0x250] sm:$0xff]
    %v1115 = vld [vmem:[#allocation7 + $0x258] sm:$0xff]
    %v1116 = vld [vmem:[#allocation7 + $0x260] sm:$0xff]
    %v1117 = vld [vmem:[#allocation7 + $0x268] sm:$0xff]
    %v1118 = vld [vmem:[#allocation7 + $0x270] sm:$0xff]
    %v1119 = vld [vmem:[#allocation7 + $0x278] sm:$0xff]
    %v1120 = vld [vmem:[#allocation7 + $0x280] sm:$0xff]
    %v1121 = vld [vmem:[#allocation7 + $0x288] sm:$0xff]
    %v1122 = vld [vmem:[#allocation7 + $0x290] sm:$0xff]
    %v1123 = vld [vmem:[#allocation7 + $0x298] sm:$0xff]
    %v1124 = vld [vmem:[#allocation7 + $0x2a0] sm:$0xff]
    %v1125 = vld [vmem:[#allocation7 + $0x2a8] sm:$0xff]
    %v1126 = vld [vmem:[#allocation7 + $0x2b0] sm:$0xff]
    %v1127 = vld [vmem:[#allocation7 + $0x2b8] sm:$0xff]
    %v1128 = vld [vmem:[#allocation7 + $0x2c0] sm:$0xff]
    %v1129 = vld [vmem:[#allocation7 + $0x2c8] sm:$0xff]
    %v1130 = vld [vmem:[#allocation7 + $0x2d0] sm:$0xff]
    %v1131 = vld [vmem:[#allocation7 + $0x2d8] sm:$0xff]
    %v1132 = vld [vmem:[#allocation7 + $0x2e0] sm:$0xff]
    %v1133 = vld [vmem:[#allocation7 + $0x2e8] sm:$0xff]
    %v1134 = vld [vmem:[#allocation7 + $0x2f0] sm:$0xff]
    %v1135 = vld [vmem:[#allocation7 + $0x2f8] sm:$0xff]
    %v1136 = vld [vmem:[#allocation7 + $0x300] sm:$0xff]
    %v1137 = vld [vmem:[#allocation7 + $0x308] sm:$0xff]
    %v1138 = vld [vmem:[#allocation7 + $0x310] sm:$0xff]
    %v1139 = vld [vmem:[#allocation7 + $0x318] sm:$0xff]
    %v1140 = vld [vmem:[#allocation7 + $0x320] sm:$0xff]
    %v1141 = vld [vmem:[#allocation7 + $0x328] sm:$0xff]
    %v1142 = vld [vmem:[#allocation7 + $0x330] sm:$0xff]
    %v1143 = vld [vmem:[#allocation7 + $0x338] sm:$0xff]
    %v1144 = vld [vmem:[#allocation7 + $0x340] sm:$0xff]
    %v1145 = vld [vmem:[#allocation7 + $0x348] sm:$0xff]
    %v1146 = vld [vmem:[#allocation7 + $0x350] sm:$0xff]
    %v1147 = vld [vmem:[#allocation7 + $0x358] sm:$0xff]
    %v1148 = vld [vmem:[#allocation7 + $0x360] sm:$0xff]
    %v1149 = vld [vmem:[#allocation7 + $0x368] sm:$0xff]
    %v1150 = vld [vmem:[#allocation7 + $0x370] sm:$0xff]
    %v1151 = vld [vmem:[#allocation7 + $0x378] sm:$0xff]
    %v1152 = vld [vmem:[#allocation7 + $0x380] sm:$0xff]
    %v1153 = vld [vmem:[#allocation7 + $0x388] sm:$0xff]
    %v1154 = vld [vmem:[#allocation7 + $0x390] sm:$0xff]
    %v1155 = vld [vmem:[#allocation7 + $0x398] sm:$0xff]
    %v1156 = vld [vmem:[#allocation7 + $0x3a0] sm:$0xff]
    %v1157 = vld [vmem:[#allocation7 + $0x3a8] sm:$0xff]
    %v1158 = vld [vmem:[#allocation7 + $0x3b0] sm:$0xff]
    %v1159 = vld [vmem:[#allocation7 + $0x3b8] sm:$0xff]
    %v1160 = vld [vmem:[#allocation7 + $0x3c0] sm:$0xff]
    %v1161 = vld [vmem:[#allocation7 + $0x3c8] sm:$0xff]
    %v1162 = vld [vmem:[#allocation7 + $0x3d0] sm:$0xff]
    %v1163 = vld [vmem:[#allocation7 + $0x3d8] sm:$0xff]
    %v1164 = vld [vmem:[#allocation7 + $0x3e0] sm:$0xff]
    %v1165 = vld [vmem:[#allocation7 + $0x3e8] sm:$0xff]
    %v1166 = vld [vmem:[#allocation7 + $0x3f0] sm:$0xff]
    %v1167 = vld [vmem:[#allocation7 + $0x3f8] sm:$0xff]
    %v1168 = vld [vmem:[#allocation7 + $0x400] sm:$0xff]
    %v1169 = vld [vmem:[#allocation7 + $0x408] sm:$0xff]
    %v1170 = vld [vmem:[#allocation7 + $0x410] sm:$0xff]
    %v1171 = vld [vmem:[#allocation7 + $0x418] sm:$0xff]
    %v1172 = vld [vmem:[#allocation7 + $0x420] sm:$0xff]
    %v1173 = vld [vmem:[#allocation7 + $0x428] sm:$0xff]
    %v1174 = vld [vmem:[#allocation7 + $0x430] sm:$0xff]
    %v1175 = vld [vmem:[#allocation7 + $0x438] sm:$0xff]
    %v1176 = vld [vmem:[#allocation7 + $0x440] sm:$0xff]
    %v1177 = vld [vmem:[#allocation7 + $0x448] sm:$0xff]
    %v1178 = vld [vmem:[#allocation7 + $0x450] sm:$0xff]
    %v1179 = vld [vmem:[#allocation7 + $0x458] sm:$0xff]
    %v1180 = vld [vmem:[#allocation7 + $0x460] sm:$0xff]
    %v1181 = vld [vmem:[#allocation7 + $0x468] sm:$0xff]
    %v1182 = vld [vmem:[#allocation7 + $0x470] sm:$0xff]
    %v1183 = vld [vmem:[#allocation7 + $0x478] sm:$0xff]
    %v1184 = vld [vmem:[#allocation7 + $0x480] sm:$0xff]
    %v1185 = vld [vmem:[#allocation7 + $0x488] sm:$0xff]
    %v1186 = vld [vmem:[#allocation7 + $0x490] sm:$0xff]
    %v1187 = vld [vmem:[#allocation7 + $0x498] sm:$0xff]
    %v1188 = vld [vmem:[#allocation7 + $0x4a0] sm:$0xff]
    %v1189 = vld [vmem:[#allocation7 + $0x4a8] sm:$0xff]
    %v1190 = vld [vmem:[#allocation7 + $0x4b0] sm:$0xff]
    %v1191 = vld [vmem:[#allocation7 + $0x4b8] sm:$0xff]
    %v1192 = vld [vmem:[#allocation7 + $0x4c0] sm:$0xff]
    %v1193 = vld [vmem:[#allocation7 + $0x4c8] sm:$0xff]
    %v1194 = vld [vmem:[#allocation7 + $0x4d0] sm:$0xff]
    %v1195 = vld [vmem:[#allocation7 + $0x4d8] sm:$0xff]
    %v1196 = vld [vmem:[#allocation7 + $0x4e0] sm:$0xff]
    %v1197 = vld [vmem:[#allocation7 + $0x4e8] sm:$0xff]
    %v1198 = vld [vmem:[#allocation7 + $0x4f0] sm:$0xff]
    %v1199 = vld [vmem:[#allocation7 + $0x4f8] sm:$0xff]
    %v1200 = vld [vmem:[#allocation7 + $0x500] sm:$0xff]
    %v1201 = vld [vmem:[#allocation7 + $0x508] sm:$0xff]
    %v1202 = vld [vmem:[#allocation7 + $0x510] sm:$0xff]
    %v1203 = vld [vmem:[#allocation7 + $0x518] sm:$0xff]
    %v1204 = vld [vmem:[#allocation7 + $0x520] sm:$0xff]
    %v1205 = vld [vmem:[#allocation7 + $0x528] sm:$0xff]
    %v1206 = vld [vmem:[#allocation7 + $0x530] sm:$0xff]
    %v1207 = vld [vmem:[#allocation7 + $0x538] sm:$0xff]
    %v1208 = vld [vmem:[#allocation7 + $0x540] sm:$0xff]
    %v1209 = vld [vmem:[#allocation7 + $0x548] sm:$0xff]
    %v1210 = vld [vmem:[#allocation7 + $0x550] sm:$0xff]
    %v1211 = vld [vmem:[#allocation7 + $0x558] sm:$0xff]
    %v1212 = vld [vmem:[#allocation7 + $0x560] sm:$0xff]
    %v1213 = vld [vmem:[#allocation7 + $0x568] sm:$0xff]
    %v1214 = vld [vmem:[#allocation7 + $0x570] sm:$0xff]
    %v1215 = vld [vmem:[#allocation7 + $0x578] sm:$0xff]
    %v1216 = vld [vmem:[#allocation7 + $0x580] sm:$0xff]
    %v1217 = vld [vmem:[#allocation7 + $0x588] sm:$0xff]
    %v1218 = vld [vmem:[#allocation7 + $0x590] sm:$0xff]
    %v1219 = vld [vmem:[#allocation7 + $0x598] sm:$0xff]
    %v1220 = vld [vmem:[#allocation7 + $0x5a0] sm:$0xff]
    %v1221 = vld [vmem:[#allocation7 + $0x5a8] sm:$0xff]
    %v1222 = vld [vmem:[#allocation7 + $0x5b0] sm:$0xff]
    %v1223 = vld [vmem:[#allocation7 + $0x5b8] sm:$0xff]
    %v1224 = vld [vmem:[#allocation7 + $0x5c0] sm:$0xff]
    %v1225 = vld [vmem:[#allocation7 + $0x5c8] sm:$0xff]
    %v1226 = vld [vmem:[#allocation7 + $0x5d0] sm:$0xff]
    %v1227 = vld [vmem:[#allocation7 + $0x5d8] sm:$0xff]
    %v1228 = vld [vmem:[#allocation7 + $0x5e0] sm:$0xff]
    %v1229 = vld [vmem:[#allocation7 + $0x5e8] sm:$0xff]
    %v1230 = vld [vmem:[#allocation7 + $0x5f0] sm:$0xff]
    %v1231 = vld [vmem:[#allocation7 + $0x5f8] sm:$0xff]
    %v1232 = vld [vmem:[#allocation7 + $0x600] sm:$0xff]
    %v1233 = vld [vmem:[#allocation7 + $0x608] sm:$0xff]
    %v1234 = vld [vmem:[#allocation7 + $0x610] sm:$0xff]
    %v1235 = vld [vmem:[#allocation7 + $0x618] sm:$0xff]
    %v1236 = vld [vmem:[#allocation7 + $0x620] sm:$0xff]
    %v1237 = vld [vmem:[#allocation7 + $0x628] sm:$0xff]
    %v1238 = vld [vmem:[#allocation7 + $0x630] sm:$0xff]
    %v1239 = vld [vmem:[#allocation7 + $0x638] sm:$0xff]
    %v1240 = vld [vmem:[#allocation7 + $0x640] sm:$0xff]
    %v1241 = vld [vmem:[#allocation7 + $0x648] sm:$0xff]
    %v1242 = vld [vmem:[#allocation7 + $0x650] sm:$0xff]
    %v1243 = vld [vmem:[#allocation7 + $0x658] sm:$0xff]
    %v1244 = vld [vmem:[#allocation7 + $0x660] sm:$0xff]
    %v1245 = vld [vmem:[#allocation7 + $0x668] sm:$0xff]
    %v1246 = vld [vmem:[#allocation7 + $0x670] sm:$0xff]
    %v1247 = vld [vmem:[#allocation7 + $0x678] sm:$0xff]
    %v1248 = vld [vmem:[#allocation7 + $0x680] sm:$0xff]
    %v1249 = vld [vmem:[#allocation7 + $0x688] sm:$0xff]
    %v1250 = vld [vmem:[#allocation7 + $0x690] sm:$0xff]
    %v1251 = vld [vmem:[#allocation7 + $0x698] sm:$0xff]
    %v1252 = vld [vmem:[#allocation7 + $0x6a0] sm:$0xff]
    %v1253 = vld [vmem:[#allocation7 + $0x6a8] sm:$0xff]
    %v1254 = vld [vmem:[#allocation7 + $0x6b0] sm:$0xff]
    %v1255 = vld [vmem:[#allocation7 + $0x6b8] sm:$0xff]
    %v1256 = vld [vmem:[#allocation7 + $0x6c0] sm:$0xff]
    %v1257 = vld [vmem:[#allocation7 + $0x6c8] sm:$0xff]
    %v1258 = vld [vmem:[#allocation7 + $0x6d0] sm:$0xff]
    %v1259 = vld [vmem:[#allocation7 + $0x6d8] sm:$0xff]
    %v1260 = vld [vmem:[#allocation7 + $0x6e0] sm:$0xff]
    %v1261 = vld [vmem:[#allocation7 + $0x6e8] sm:$0xff]
    %v1262 = vld [vmem:[#allocation7 + $0x6f0] sm:$0xff]
    %v1263 = vld [vmem:[#allocation7 + $0x6f8] sm:$0xff]
    %v1264 = vld [vmem:[#allocation7 + $0x700] sm:$0xff]
    %v1265 = vld [vmem:[#allocation7 + $0x708] sm:$0xff]
    %v1266 = vld [vmem:[#allocation7 + $0x710] sm:$0xff]
    %v1267 = vld [vmem:[#allocation7 + $0x718] sm:$0xff]
    %v1268 = vld [vmem:[#allocation7 + $0x720] sm:$0xff]
    %v1269 = vld [vmem:[#allocation7 + $0x728] sm:$0xff]
    %v1270 = vld [vmem:[#allocation7 + $0x730] sm:$0xff]
    %v1271 = vld [vmem:[#allocation7 + $0x738] sm:$0xff]
    %v1272 = vld [vmem:[#allocation7 + $0x740] sm:$0xff]
    %v1273 = vld [vmem:[#allocation7 + $0x748] sm:$0xff]
    %v1274 = vld [vmem:[#allocation7 + $0x750] sm:$0xff]
    %v1275 = vld [vmem:[#allocation7 + $0x758] sm:$0xff]
    %v1276 = vld [vmem:[#allocation7 + $0x760] sm:$0xff]
    %v1277 = vld [vmem:[#allocation7 + $0x768] sm:$0xff]
    %v1278 = vld [vmem:[#allocation7 + $0x770] sm:$0xff]
    %v1279 = vld [vmem:[#allocation7 + $0x778] sm:$0xff]
    %v1280 = vld [vmem:[#allocation7 + $0x780] sm:$0xff]
    %v1281 = vld [vmem:[#allocation7 + $0x788] sm:$0xff]
    %v1282 = vld [vmem:[#allocation7 + $0x790] sm:$0xff]
    %v1283 = vld [vmem:[#allocation7 + $0x798] sm:$0xff]
    %v1284 = vld [vmem:[#allocation7 + $0x7a0] sm:$0xff]
    %v1285 = vld [vmem:[#allocation7 + $0x7a8] sm:$0xff]
    %v1286 = vld [vmem:[#allocation7 + $0x7b0] sm:$0xff]
    %v1287 = vld [vmem:[#allocation7 + $0x7b8] sm:$0xff]
    %v1288 = vld [vmem:[#allocation7 + $0x7c0] sm:$0xff]
    %v1289 = vld [vmem:[#allocation7 + $0x7c8] sm:$0xff]
    %v1290 = vld [vmem:[#allocation7 + $0x7d0] sm:$0xff]
    %v1291 = vld [vmem:[#allocation7 + $0x7d8] sm:$0xff]
    %v1292 = vld [vmem:[#allocation7 + $0x7e0] sm:$0xff]
    %v1293 = vld [vmem:[#allocation7 + $0x7e8] sm:$0xff]
    %v1294 = vld [vmem:[#allocation7 + $0x7f0] sm:$0xff]
    %v1295 = vld [vmem:[#allocation7 + $0x7f8] sm:$0xff]
    %v1552 = vunpack.c.l.b16 %v1040
    %v1553 = vunpack.c.h.b16 %v1040
    %v1554 = vunpack.c.l.b16 %v1041
    %v1555 = vunpack.c.h.b16 %v1041
    %v1556 = vunpack.c.l.b16 %v1042
    %v1557 = vunpack.c.h.b16 %v1042
    %v1558 = vunpack.c.l.b16 %v1043
    %v1559 = vunpack.c.h.b16 %v1043
    %v1560 = vunpack.c.l.b16 %v1044
    %v1561 = vunpack.c.h.b16 %v1044
    %v1562 = vunpack.c.l.b16 %v1045
    %v1563 = vunpack.c.h.b16 %v1045
    %v1564 = vunpack.c.l.b16 %v1046
    %v1565 = vunpack.c.h.b16 %v1046
    %v1566 = vunpack.c.l.b16 %v1047
    %v1567 = vunpack.c.h.b16 %v1047
    %v1568 = vunpack.c.l.b16 %v1048
    %v1569 = vunpack.c.h.b16 %v1048
    %v1570 = vunpack.c.l.b16 %v1049
    %v1571 = vunpack.c.h.b16 %v1049
    %v1572 = vunpack.c.l.b16 %v1050
    %v1573 = vunpack.c.h.b16 %v1050
    %v1574 = vunpack.c.l.b16 %v1051
    %v1575 = vunpack.c.h.b16 %v1051
    %v1576 = vunpack.c.l.b16 %v1052
    %v1577 = vunpack.c.h.b16 %v1052
    %v1578 = vunpack.c.l.b16 %v1053
    %v1579 = vunpack.c.h.b16 %v1053
    %v1580 = vunpack.c.l.b16 %v1054
    %v1581 = vunpack.c.h.b16 %v1054
    %v1582 = vunpack.c.l.b16 %v1055
    %v1583 = vunpack.c.h.b16 %v1055
    %v1584 = vunpack.c.l.b16 %v1056
    %v1585 = vunpack.c.h.b16 %v1056
    %v1586 = vunpack.c.l.b16 %v1057
    %v1587 = vunpack.c.h.b16 %v1057
    %v1588 = vunpack.c.l.b16 %v1058
    %v1589 = vunpack.c.h.b16 %v1058
    %v1590 = vunpack.c.l.b16 %v1059
    %v1591 = vunpack.c.h.b16 %v1059
    %v1592 = vunpack.c.l.b16 %v1060
    %v1593 = vunpack.c.h.b16 %v1060
    %v1594 = vunpack.c.l.b16 %v1061
    %v1595 = vunpack.c.h.b16 %v1061
    %v1596 = vunpack.c.l.b16 %v1062
    %v1597 = vunpack.c.h.b16 %v1062
    %v1598 = vunpack.c.l.b16 %v1063
    %v1599 = vunpack.c.h.b16 %v1063
    %v1600 = vunpack.c.l.b16 %v1064
    %v1601 = vunpack.c.h.b16 %v1064
    %v1602 = vunpack.c.l.b16 %v1065
    %v1603 = vunpack.c.h.b16 %v1065
    %v1604 = vunpack.c.l.b16 %v1066
    %v1605 = vunpack.c.h.b16 %v1066
    %v1606 = vunpack.c.l.b16 %v1067
    %v1607 = vunpack.c.h.b16 %v1067
    %v1608 = vunpack.c.l.b16 %v1068
    %v1609 = vunpack.c.h.b16 %v1068
    %v1610 = vunpack.c.l.b16 %v1069
    %v1611 = vunpack.c.h.b16 %v1069
    %v1612 = vunpack.c.l.b16 %v1070
    %v1613 = vunpack.c.h.b16 %v1070
    %v1614 = vunpack.c.l.b16 %v1071
    %v1615 = vunpack.c.h.b16 %v1071
    %v1616 = vunpack.c.l.b16 %v1072
    %v1617 = vunpack.c.h.b16 %v1072
    %v1618 = vunpack.c.l.b16 %v1073
    %v1619 = vunpack.c.h.b16 %v1073
    %v1620 = vunpack.c.l.b16 %v1074
    %v1621 = vunpack.c.h.b16 %v1074
    %v1622 = vunpack.c.l.b16 %v1075
    %v1623 = vunpack.c.h.b16 %v1075
    %v1624 = vunpack.c.l.b16 %v1076
    %v1625 = vunpack.c.h.b16 %v1076
    %v1626 = vunpack.c.l.b16 %v1077
    %v1627 = vunpack.c.h.b16 %v1077
    %v1628 = vunpack.c.l.b16 %v1078
    %v1629 = vunpack.c.h.b16 %v1078
    %v1630 = vunpack.c.l.b16 %v1079
    %v1631 = vunpack.c.h.b16 %v1079
    %v1632 = vunpack.c.l.b16 %v1080
    %v1633 = vunpack.c.h.b16 %v1080
    %v1634 = vunpack.c.l.b16 %v1081
    %v1635 = vunpack.c.h.b16 %v1081
    %v1636 = vunpack.c.l.b16 %v1082
    %v1637 = vunpack.c.h.b16 %v1082
    %v1638 = vunpack.c.l.b16 %v1083
    %v1639 = vunpack.c.h.b16 %v1083
    %v1640 = vunpack.c.l.b16 %v1084
    %v1641 = vunpack.c.h.b16 %v1084
    %v1642 = vunpack.c.l.b16 %v1085
    %v1643 = vunpack.c.h.b16 %v1085
    %v1644 = vunpack.c.l.b16 %v1086
    %v1645 = vunpack.c.h.b16 %v1086
    %v1646 = vunpack.c.l.b16 %v1087
    %v1647 = vunpack.c.h.b16 %v1087
    %v1648 = vunpack.c.l.b16 %v1088
    %v1649 = vunpack.c.h.b16 %v1088
    %v1650 = vunpack.c.l.b16 %v1089
    %v1651 = vunpack.c.h.b16 %v1089
    %v1652 = vunpack.c.l.b16 %v1090
    %v1653 = vunpack.c.h.b16 %v1090
    %v1654 = vunpack.c.l.b16 %v1091
    %v1655 = vunpack.c.h.b16 %v1091
    %v1656 = vunpack.c.l.b16 %v1092
    %v1657 = vunpack.c.h.b16 %v1092
    %v1658 = vunpack.c.l.b16 %v1093
    %v1659 = vunpack.c.h.b16 %v1093
    %v1660 = vunpack.c.l.b16 %v1094
    %v1661 = vunpack.c.h.b16 %v1094
    %v1662 = vunpack.c.l.b16 %v1095
    %v1663 = vunpack.c.h.b16 %v1095
    %v1664 = vunpack.c.l.b16 %v1096
    %v1665 = vunpack.c.h.b16 %v1096
    %v1666 = vunpack.c.l.b16 %v1097
    %v1667 = vunpack.c.h.b16 %v1097
    %v1668 = vunpack.c.l.b16 %v1098
    %v1669 = vunpack.c.h.b16 %v1098
    %v1670 = vunpack.c.l.b16 %v1099
    %v1671 = vunpack.c.h.b16 %v1099
    %v1672 = vunpack.c.l.b16 %v1100
    %v1673 = vunpack.c.h.b16 %v1100
    %v1674 = vunpack.c.l.b16 %v1101
    %v1675 = vunpack.c.h.b16 %v1101
    %v1676 = vunpack.c.l.b16 %v1102
    %v1677 = vunpack.c.h.b16 %v1102
    %v1678 = vunpack.c.l.b16 %v1103
    %v1679 = vunpack.c.h.b16 %v1103
    %v1680 = vunpack.c.l.b16 %v1104
    %v1681 = vunpack.c.h.b16 %v1104
    %v1682 = vunpack.c.l.b16 %v1105
    %v1683 = vunpack.c.h.b16 %v1105
    %v1684 = vunpack.c.l.b16 %v1106
    %v1685 = vunpack.c.h.b16 %v1106
    %v1686 = vunpack.c.l.b16 %v1107
    %v1687 = vunpack.c.h.b16 %v1107
    %v1688 = vunpack.c.l.b16 %v1108
    %v1689 = vunpack.c.h.b16 %v1108
    %v1690 = vunpack.c.l.b16 %v1109
    %v1691 = vunpack.c.h.b16 %v1109
    %v1692 = vunpack.c.l.b16 %v1110
    %v1693 = vunpack.c.h.b16 %v1110
    %v1694 = vunpack.c.l.b16 %v1111
    %v1695 = vunpack.c.h.b16 %v1111
    %v1696 = vunpack.c.l.b16 %v1112
    %v1697 = vunpack.c.h.b16 %v1112
    %v1698 = vunpack.c.l.b16 %v1113
    %v1699 = vunpack.c.h.b16 %v1113
    %v1700 = vunpack.c.l.b16 %v1114
    %v1701 = vunpack.c.h.b16 %v1114
    %v1702 = vunpack.c.l.b16 %v1115
    %v1703 = vunpack.c.h.b16 %v1115
    %v1704 = vunpack.c.l.b16 %v1116
    %v1705 = vunpack.c.h.b16 %v1116
    %v1706 = vunpack.c.l.b16 %v1117
    %v1707 = vunpack.c.h.b16 %v1117
    %v1708 = vunpack.c.l.b16 %v1118
    %v1709 = vunpack.c.h.b16 %v1118
    %v1710 = vunpack.c.l.b16 %v1119
    %v1711 = vunpack.c.h.b16 %v1119
    %v1712 = vunpack.c.l.b16 %v1120
    %v1713 = vunpack.c.h.b16 %v1120
    %v1714 = vunpack.c.l.b16 %v1121
    %v1715 = vunpack.c.h.b16 %v1121
    %v1716 = vunpack.c.l.b16 %v1122
    %v1717 = vunpack.c.h.b16 %v1122
    %v1718 = vunpack.c.l.b16 %v1123
    %v1719 = vunpack.c.h.b16 %v1123
    %v1720 = vunpack.c.l.b16 %v1124
    %v1721 = vunpack.c.h.b16 %v1124
    %v1722 = vunpack.c.l.b16 %v1125
    %v1723 = vunpack.c.h.b16 %v1125
    %v1724 = vunpack.c.l.b16 %v1126
    %v1725 = vunpack.c.h.b16 %v1126
    %v1726 = vunpack.c.l.b16 %v1127
    %v1727 = vunpack.c.h.b16 %v1127
    %v1728 = vunpack.c.l.b16 %v1128
    %v1729 = vunpack.c.h.b16 %v1128
    %v1730 = vunpack.c.l.b16 %v1129
    %v1731 = vunpack.c.h.b16 %v1129
    %v1732 = vunpack.c.l.b16 %v1130
    %v1733 = vunpack.c.h.b16 %v1130
    %v1734 = vunpack.c.l.b16 %v1131
    %v1735 = vunpack.c.h.b16 %v1131
    %v1736 = vunpack.c.l.b16 %v1132
    %v1737 = vunpack.c.h.b16 %v1132
    %v1738 = vunpack.c.l.b16 %v1133
    %v1739 = vunpack.c.h.b16 %v1133
    %v1740 = vunpack.c.l.b16 %v1134
    %v1741 = vunpack.c.h.b16 %v1134
    %v1742 = vunpack.c.l.b16 %v1135
    %v1743 = vunpack.c.h.b16 %v1135
    %v1744 = vunpack.c.l.b16 %v1136
    %v1745 = vunpack.c.h.b16 %v1136
    %v1746 = vunpack.c.l.b16 %v1137
    %v1747 = vunpack.c.h.b16 %v1137
    %v1748 = vunpack.c.l.b16 %v1138
    %v1749 = vunpack.c.h.b16 %v1138
    %v1750 = vunpack.c.l.b16 %v1139
    %v1751 = vunpack.c.h.b16 %v1139
    %v1752 = vunpack.c.l.b16 %v1140
    %v1753 = vunpack.c.h.b16 %v1140
    %v1754 = vunpack.c.l.b16 %v1141
    %v1755 = vunpack.c.h.b16 %v1141
    %v1756 = vunpack.c.l.b16 %v1142
    %v1757 = vunpack.c.h.b16 %v1142
    %v1758 = vunpack.c.l.b16 %v1143
    %v1759 = vunpack.c.h.b16 %v1143
    %v1760 = vunpack.c.l.b16 %v1144
    %v1761 = vunpack.c.h.b16 %v1144
    %v1762 = vunpack.c.l.b16 %v1145
    %v1763 = vunpack.c.h.b16 %v1145
    %v1764 = vunpack.c.l.b16 %v1146
    %v1765 = vunpack.c.h.b16 %v1146
    %v1766 = vunpack.c.l.b16 %v1147
    %v1767 = vunpack.c.h.b16 %v1147
    %v1768 = vunpack.c.l.b16 %v1148
    %v1769 = vunpack.c.h.b16 %v1148
    %v1770 = vunpack.c.l.b16 %v1149
    %v1771 = vunpack.c.h.b16 %v1149
    %v1772 = vunpack.c.l.b16 %v1150
    %v1773 = vunpack.c.h.b16 %v1150
    %v1774 = vunpack.c.l.b16 %v1151
    %v1775 = vunpack.c.h.b16 %v1151
    %v1776 = vunpack.c.l.b16 %v1152
    %v1777 = vunpack.c.h.b16 %v1152
    %v1778 = vunpack.c.l.b16 %v1153
    %v1779 = vunpack.c.h.b16 %v1153
    %v1780 = vunpack.c.l.b16 %v1154
    %v1781 = vunpack.c.h.b16 %v1154
    %v1782 = vunpack.c.l.b16 %v1155
    %v1783 = vunpack.c.h.b16 %v1155
    %v1784 = vunpack.c.l.b16 %v1156
    %v1785 = vunpack.c.h.b16 %v1156
    %v1786 = vunpack.c.l.b16 %v1157
    %v1787 = vunpack.c.h.b16 %v1157
    %v1788 = vunpack.c.l.b16 %v1158
    %v1789 = vunpack.c.h.b16 %v1158
    %v1790 = vunpack.c.l.b16 %v1159
    %v1791 = vunpack.c.h.b16 %v1159
    %v1792 = vunpack.c.l.b16 %v1160
    %v1793 = vunpack.c.h.b16 %v1160
    %v1794 = vunpack.c.l.b16 %v1161
    %v1795 = vunpack.c.h.b16 %v1161
    %v1796 = vunpack.c.l.b16 %v1162
    %v1797 = vunpack.c.h.b16 %v1162
    %v1798 = vunpack.c.l.b16 %v1163
    %v1799 = vunpack.c.h.b16 %v1163
    %v1800 = vunpack.c.l.b16 %v1164
    %v1801 = vunpack.c.h.b16 %v1164
    %v1802 = vunpack.c.l.b16 %v1165
    %v1803 = vunpack.c.h.b16 %v1165
    %v1804 = vunpack.c.l.b16 %v1166
    %v1805 = vunpack.c.h.b16 %v1166
    %v1806 = vunpack.c.l.b16 %v1167
    %v1807 = vunpack.c.h.b16 %v1167
    %v1808 = vunpack.c.l.b16 %v1168
    %v1809 = vunpack.c.h.b16 %v1168
    %v1810 = vunpack.c.l.b16 %v1169
    %v1811 = vunpack.c.h.b16 %v1169
    %v1812 = vunpack.c.l.b16 %v1170
    %v1813 = vunpack.c.h.b16 %v1170
    %v1814 = vunpack.c.l.b16 %v1171
    %v1815 = vunpack.c.h.b16 %v1171
    %v1816 = vunpack.c.l.b16 %v1172
    %v1817 = vunpack.c.h.b16 %v1172
    %v1818 = vunpack.c.l.b16 %v1173
    %v1819 = vunpack.c.h.b16 %v1173
    %v1820 = vunpack.c.l.b16 %v1174
    %v1821 = vunpack.c.h.b16 %v1174
    %v1822 = vunpack.c.l.b16 %v1175
    %v1823 = vunpack.c.h.b16 %v1175
    %v1824 = vunpack.c.l.b16 %v1176
    %v1825 = vunpack.c.h.b16 %v1176
    %v1826 = vunpack.c.l.b16 %v1177
    %v1827 = vunpack.c.h.b16 %v1177
    %v1828 = vunpack.c.l.b16 %v1178
    %v1829 = vunpack.c.h.b16 %v1178
    %v1830 = vunpack.c.l.b16 %v1179
    %v1831 = vunpack.c.h.b16 %v1179
    %v1832 = vunpack.c.l.b16 %v1180
    %v1833 = vunpack.c.h.b16 %v1180
    %v1834 = vunpack.c.l.b16 %v1181
    %v1835 = vunpack.c.h.b16 %v1181
    %v1836 = vunpack.c.l.b16 %v1182
    %v1837 = vunpack.c.h.b16 %v1182
    %v1838 = vunpack.c.l.b16 %v1183
    %v1839 = vunpack.c.h.b16 %v1183
    %v1840 = vunpack.c.l.b16 %v1184
    %v1841 = vunpack.c.h.b16 %v1184
    %v1842 = vunpack.c.l.b16 %v1185
    %v1843 = vunpack.c.h.b16 %v1185
    %v1844 = vunpack.c.l.b16 %v1186
    %v1845 = vunpack.c.h.b16 %v1186
    %v1846 = vunpack.c.l.b16 %v1187
    %v1847 = vunpack.c.h.b16 %v1187
    %v1848 = vunpack.c.l.b16 %v1188
    %v1849 = vunpack.c.h.b16 %v1188
    %v1850 = vunpack.c.l.b16 %v1189
    %v1851 = vunpack.c.h.b16 %v1189
    %v1852 = vunpack.c.l.b16 %v1190
    %v1853 = vunpack.c.h.b16 %v1190
    %v1854 = vunpack.c.l.b16 %v1191
    %v1855 = vunpack.c.h.b16 %v1191
    %v1856 = vunpack.c.l.b16 %v1192
    %v1857 = vunpack.c.h.b16 %v1192
    %v1858 = vunpack.c.l.b16 %v1193
    %v1859 = vunpack.c.h.b16 %v1193
    %v1860 = vunpack.c.l.b16 %v1194
    %v1861 = vunpack.c.h.b16 %v1194
    %v1862 = vunpack.c.l.b16 %v1195
    %v1863 = vunpack.c.h.b16 %v1195
    %v1864 = vunpack.c.l.b16 %v1196
    %v1865 = vunpack.c.h.b16 %v1196
    %v1866 = vunpack.c.l.b16 %v1197
    %v1867 = vunpack.c.h.b16 %v1197
    %v1868 = vunpack.c.l.b16 %v1198
    %v1869 = vunpack.c.h.b16 %v1198
    %v1870 = vunpack.c.l.b16 %v1199
    %v1871 = vunpack.c.h.b16 %v1199
    %v1872 = vunpack.c.l.b16 %v1200
    %v1873 = vunpack.c.h.b16 %v1200
    %v1874 = vunpack.c.l.b16 %v1201
    %v1875 = vunpack.c.h.b16 %v1201
    %v1876 = vunpack.c.l.b16 %v1202
    %v1877 = vunpack.c.h.b16 %v1202
    %v1878 = vunpack.c.l.b16 %v1203
    %v1879 = vunpack.c.h.b16 %v1203
    %v1880 = vunpack.c.l.b16 %v1204
    %v1881 = vunpack.c.h.b16 %v1204
    %v1882 = vunpack.c.l.b16 %v1205
    %v1883 = vunpack.c.h.b16 %v1205
    %v1884 = vunpack.c.l.b16 %v1206
    %v1885 = vunpack.c.h.b16 %v1206
    %v1886 = vunpack.c.l.b16 %v1207
    %v1887 = vunpack.c.h.b16 %v1207
    %v1888 = vunpack.c.l.b16 %v1208
    %v1889 = vunpack.c.h.b16 %v1208
    %v1890 = vunpack.c.l.b16 %v1209
    %v1891 = vunpack.c.h.b16 %v1209
    %v1892 = vunpack.c.l.b16 %v1210
    %v1893 = vunpack.c.h.b16 %v1210
    %v1894 = vunpack.c.l.b16 %v1211
    %v1895 = vunpack.c.h.b16 %v1211
    %v1896 = vunpack.c.l.b16 %v1212
    %v1897 = vunpack.c.h.b16 %v1212
    %v1898 = vunpack.c.l.b16 %v1213
    %v1899 = vunpack.c.h.b16 %v1213
    %v1900 = vunpack.c.l.b16 %v1214
    %v1901 = vunpack.c.h.b16 %v1214
    %v1902 = vunpack.c.l.b16 %v1215
    %v1903 = vunpack.c.h.b16 %v1215
    %v1904 = vunpack.c.l.b16 %v1216
    %v1905 = vunpack.c.h.b16 %v1216
    %v1906 = vunpack.c.l.b16 %v1217
    %v1907 = vunpack.c.h.b16 %v1217
    %v1908 = vunpack.c.l.b16 %v1218
    %v1909 = vunpack.c.h.b16 %v1218
    %v1910 = vunpack.c.l.b16 %v1219
    %v1911 = vunpack.c.h.b16 %v1219
    %v1912 = vunpack.c.l.b16 %v1220
    %v1913 = vunpack.c.h.b16 %v1220
    %v1914 = vunpack.c.l.b16 %v1221
    %v1915 = vunpack.c.h.b16 %v1221
    %v1916 = vunpack.c.l.b16 %v1222
    %v1917 = vunpack.c.h.b16 %v1222
    %v1918 = vunpack.c.l.b16 %v1223
    %v1919 = vunpack.c.h.b16 %v1223
    %v1920 = vunpack.c.l.b16 %v1224
    %v1921 = vunpack.c.h.b16 %v1224
    %v1922 = vunpack.c.l.b16 %v1225
    %v1923 = vunpack.c.h.b16 %v1225
    %v1924 = vunpack.c.l.b16 %v1226
    %v1925 = vunpack.c.h.b16 %v1226
    %v1926 = vunpack.c.l.b16 %v1227
    %v1927 = vunpack.c.h.b16 %v1227
    %v1928 = vunpack.c.l.b16 %v1228
    %v1929 = vunpack.c.h.b16 %v1228
    %v1930 = vunpack.c.l.b16 %v1229
    %v1931 = vunpack.c.h.b16 %v1229
    %v1932 = vunpack.c.l.b16 %v1230
    %v1933 = vunpack.c.h.b16 %v1230
    %v1934 = vunpack.c.l.b16 %v1231
    %v1935 = vunpack.c.h.b16 %v1231
    %v1936 = vunpack.c.l.b16 %v1232
    %v1937 = vunpack.c.h.b16 %v1232
    %v1938 = vunpack.c.l.b16 %v1233
    %v1939 = vunpack.c.h.b16 %v1233
    %v1940 = vunpack.c.l.b16 %v1234
    %v1941 = vunpack.c.h.b16 %v1234
    %v1942 = vunpack.c.l.b16 %v1235
    %v1943 = vunpack.c.h.b16 %v1235
    %v1944 = vunpack.c.l.b16 %v1236
    %v1945 = vunpack.c.h.b16 %v1236
    %v1946 = vunpack.c.l.b16 %v1237
    %v1947 = vunpack.c.h.b16 %v1237
    %v1948 = vunpack.c.l.b16 %v1238
    %v1949 = vunpack.c.h.b16 %v1238
    %v1950 = vunpack.c.l.b16 %v1239
    %v1951 = vunpack.c.h.b16 %v1239
    %v1952 = vunpack.c.l.b16 %v1240
    %v1953 = vunpack.c.h.b16 %v1240
    %v1954 = vunpack.c.l.b16 %v1241
    %v1955 = vunpack.c.h.b16 %v1241
    %v1956 = vunpack.c.l.b16 %v1242
    %v1957 = vunpack.c.h.b16 %v1242
    %v1958 = vunpack.c.l.b16 %v1243
    %v1959 = vunpack.c.h.b16 %v1243
    %v1960 = vunpack.c.l.b16 %v1244
    %v1961 = vunpack.c.h.b16 %v1244
    %v1962 = vunpack.c.l.b16 %v1245
    %v1963 = vunpack.c.h.b16 %v1245
    %v1964 = vunpack.c.l.b16 %v1246
    %v1965 = vunpack.c.h.b16 %v1246
    %v1966 = vunpack.c.l.b16 %v1247
    %v1967 = vunpack.c.h.b16 %v1247
    %v1968 = vunpack.c.l.b16 %v1248
    %v1969 = vunpack.c.h.b16 %v1248
    %v1970 = vunpack.c.l.b16 %v1249
    %v1971 = vunpack.c.h.b16 %v1249
    %v1972 = vunpack.c.l.b16 %v1250
    %v1973 = vunpack.c.h.b16 %v1250
    %v1974 = vunpack.c.l.b16 %v1251
    %v1975 = vunpack.c.h.b16 %v1251
    %v1976 = vunpack.c.l.b16 %v1252
    %v1977 = vunpack.c.h.b16 %v1252
    %v1978 = vunpack.c.l.b16 %v1253
    %v1979 = vunpack.c.h.b16 %v1253
    %v1980 = vunpack.c.l.b16 %v1254
    %v1981 = vunpack.c.h.b16 %v1254
    %v1982 = vunpack.c.l.b16 %v1255
    %v1983 = vunpack.c.h.b16 %v1255
    %v1984 = vunpack.c.l.b16 %v1256
    %v1985 = vunpack.c.h.b16 %v1256
    %v1986 = vunpack.c.l.b16 %v1257
    %v1987 = vunpack.c.h.b16 %v1257
    %v1988 = vunpack.c.l.b16 %v1258
    %v1989 = vunpack.c.h.b16 %v1258
    %v1990 = vunpack.c.l.b16 %v1259
    %v1991 = vunpack.c.h.b16 %v1259
    %v1992 = vunpack.c.l.b16 %v1260
    %v1993 = vunpack.c.h.b16 %v1260
    %v1994 = vunpack.c.l.b16 %v1261
    %v1995 = vunpack.c.h.b16 %v1261
    %v1996 = vunpack.c.l.b16 %v1262
    %v1997 = vunpack.c.h.b16 %v1262
    %v1998 = vunpack.c.l.b16 %v1263
    %v1999 = vunpack.c.h.b16 %v1263
    %v2000 = vunpack.c.l.b16 %v1264
    %v2001 = vunpack.c.h.b16 %v1264
    %v2002 = vunpack.c.l.b16 %v1265
    %v2003 = vunpack.c.h.b16 %v1265
    %v2004 = vunpack.c.l.b16 %v1266
    %v2005 = vunpack.c.h.b16 %v1266
    %v2006 = vunpack.c.l.b16 %v1267
    %v2007 = vunpack.c.h.b16 %v1267
    %v2008 = vunpack.c.l.b16 %v1268
    %v2009 = vunpack.c.h.b16 %v1268
    %v2010 = vunpack.c.l.b16 %v1269
    %v2011 = vunpack.c.h.b16 %v1269
    %v2012 = vunpack.c.l.b16 %v1270
    %v2013 = vunpack.c.h.b16 %v1270
    %v2014 = vunpack.c.l.b16 %v1271
    %v2015 = vunpack.c.h.b16 %v1271
    %v2016 = vunpack.c.l.b16 %v1272
    %v2017 = vunpack.c.h.b16 %v1272
    %v2018 = vunpack.c.l.b16 %v1273
    %v2019 = vunpack.c.h.b16 %v1273
    %v2020 = vunpack.c.l.b16 %v1274
    %v2021 = vunpack.c.h.b16 %v1274
    %v2022 = vunpack.c.l.b16 %v1275
    %v2023 = vunpack.c.h.b16 %v1275
    %v2024 = vunpack.c.l.b16 %v1276
    %v2025 = vunpack.c.h.b16 %v1276
    %v2026 = vunpack.c.l.b16 %v1277
    %v2027 = vunpack.c.h.b16 %v1277
    %v2028 = vunpack.c.l.b16 %v1278
    %v2029 = vunpack.c.h.b16 %v1278
    %v2030 = vunpack.c.l.b16 %v1279
    %v2031 = vunpack.c.h.b16 %v1279
    %v2032 = vunpack.c.l.b16 %v1280
    %v2033 = vunpack.c.h.b16 %v1280
    %v2034 = vunpack.c.l.b16 %v1281
    %v2035 = vunpack.c.h.b16 %v1281
    %v2036 = vunpack.c.l.b16 %v1282
    %v2037 = vunpack.c.h.b16 %v1282
    %v2038 = vunpack.c.l.b16 %v1283
    %v2039 = vunpack.c.h.b16 %v1283
    %v2040 = vunpack.c.l.b16 %v1284
    %v2041 = vunpack.c.h.b16 %v1284
    %v2042 = vunpack.c.l.b16 %v1285
    %v2043 = vunpack.c.h.b16 %v1285
    %v2044 = vunpack.c.l.b16 %v1286
    %v2045 = vunpack.c.h.b16 %v1286
    %v2046 = vunpack.c.l.b16 %v1287
    %v2047 = vunpack.c.h.b16 %v1287
    %v2048 = vunpack.c.l.b16 %v1288
    %v2049 = vunpack.c.h.b16 %v1288
    %v2050 = vunpack.c.l.b16 %v1289
    %v2051 = vunpack.c.h.b16 %v1289
    %v2052 = vunpack.c.l.b16 %v1290
    %v2053 = vunpack.c.h.b16 %v1290
    %v2054 = vunpack.c.l.b16 %v1291
    %v2055 = vunpack.c.h.b16 %v1291
    %v2056 = vunpack.c.l.b16 %v1292
    %v2057 = vunpack.c.h.b16 %v1292
    %v2058 = vunpack.c.l.b16 %v1293
    %v2059 = vunpack.c.h.b16 %v1293
    %v2060 = vunpack.c.l.b16 %v1294
    %v2061 = vunpack.c.h.b16 %v1294
    %v2062 = vunpack.c.l.b16 %v1295
    %v2063 = vunpack.c.h.b16 %v1295
    %v2064 = vpack.c.b16 %v1560, %v1552
    %v2065 = vpack.c.b16 %v1561, %v1553
    %v2066 = vpack.c.b16 %v1562, %v1554
    %v2067 = vpack.c.b16 %v1563, %v1555
    %v2068 = vpack.c.b16 %v1564, %v1556
    %v2069 = vpack.c.b16 %v1565, %v1557
    %v2070 = vpack.c.b16 %v1566, %v1558
    %v2071 = vpack.c.b16 %v1567, %v1559
    %v2072 = vpack.c.b16 %v1576, %v1568
    %v2073 = vpack.c.b16 %v1577, %v1569
    %v2074 = vpack.c.b16 %v1578, %v1570
    %v2075 = vpack.c.b16 %v1579, %v1571
    %v2076 = vpack.c.b16 %v1580, %v1572
    %v2077 = vpack.c.b16 %v1581, %v1573
    %v2078 = vpack.c.b16 %v1582, %v1574
    %v2079 = vpack.c.b16 %v1583, %v1575
    %v2080 = vpack.c.b16 %v1592, %v1584
    %v2081 = vpack.c.b16 %v1593, %v1585
    %v2082 = vpack.c.b16 %v1594, %v1586
    %v2083 = vpack.c.b16 %v1595, %v1587
    %v2084 = vpack.c.b16 %v1596, %v1588
    %v2085 = vpack.c.b16 %v1597, %v1589
    %v2086 = vpack.c.b16 %v1598, %v1590
    %v2087 = vpack.c.b16 %v1599, %v1591
    %v2088 = vpack.c.b16 %v1608, %v1600
    %v2089 = vpack.c.b16 %v1609, %v1601
    %v2090 = vpack.c.b16 %v1610, %v1602
    %v2091 = vpack.c.b16 %v1611, %v1603
    %v2092 = vpack.c.b16 %v1612, %v1604
    %v2093 = vpack.c.b16 %v1613, %v1605
    %v2094 = vpack.c.b16 %v1614, %v1606
    %v2095 = vpack.c.b16 %v1615, %v1607
    %v2096 = vpack.c.b16 %v1624, %v1616
    %v2097 = vpack.c.b16 %v1625, %v1617
    %v2098 = vpack.c.b16 %v1626, %v1618
    %v2099 = vpack.c.b16 %v1627, %v1619
    %v2100 = vpack.c.b16 %v1628, %v1620
    %v2101 = vpack.c.b16 %v1629, %v1621
    %v2102 = vpack.c.b16 %v1630, %v1622
    %v2103 = vpack.c.b16 %v1631, %v1623
    %v2104 = vpack.c.b16 %v1640, %v1632
    %v2105 = vpack.c.b16 %v1641, %v1633
    %v2106 = vpack.c.b16 %v1642, %v1634
    %v2107 = vpack.c.b16 %v1643, %v1635
    %v2108 = vpack.c.b16 %v1644, %v1636
    %v2109 = vpack.c.b16 %v1645, %v1637
    %v2110 = vpack.c.b16 %v1646, %v1638
    %v2111 = vpack.c.b16 %v1647, %v1639
    %v2112 = vpack.c.b16 %v1656, %v1648
    %v2113 = vpack.c.b16 %v1657, %v1649
    %v2114 = vpack.c.b16 %v1658, %v1650
    %v2115 = vpack.c.b16 %v1659, %v1651
    %v2116 = vpack.c.b16 %v1660, %v1652
    %v2117 = vpack.c.b16 %v1661, %v1653
    %v2118 = vpack.c.b16 %v1662, %v1654
    %v2119 = vpack.c.b16 %v1663, %v1655
    %v2120 = vpack.c.b16 %v1672, %v1664
    %v2121 = vpack.c.b16 %v1673, %v1665
    %v2122 = vpack.c.b16 %v1674, %v1666
    %v2123 = vpack.c.b16 %v1675, %v1667
    %v2124 = vpack.c.b16 %v1676, %v1668
    %v2125 = vpack.c.b16 %v1677, %v1669
    %v2126 = vpack.c.b16 %v1678, %v1670
    %v2127 = vpack.c.b16 %v1679, %v1671
    %v2128 = vpack.c.b16 %v1688, %v1680
    %v2129 = vpack.c.b16 %v1689, %v1681
    %v2130 = vpack.c.b16 %v1690, %v1682
    %v2131 = vpack.c.b16 %v1691, %v1683
    %v2132 = vpack.c.b16 %v1692, %v1684
    %v2133 = vpack.c.b16 %v1693, %v1685
    %v2134 = vpack.c.b16 %v1694, %v1686
    %v2135 = vpack.c.b16 %v1695, %v1687
    %v2136 = vpack.c.b16 %v1704, %v1696
    %v2137 = vpack.c.b16 %v1705, %v1697
    %v2138 = vpack.c.b16 %v1706, %v1698
    %v2139 = vpack.c.b16 %v1707, %v1699
    %v2140 = vpack.c.b16 %v1708, %v1700
    %v2141 = vpack.c.b16 %v1709, %v1701
    %v2142 = vpack.c.b16 %v1710, %v1702
    %v2143 = vpack.c.b16 %v1711, %v1703
    %v2144 = vpack.c.b16 %v1720, %v1712
    %v2145 = vpack.c.b16 %v1721, %v1713
    %v2146 = vpack.c.b16 %v1722, %v1714
    %v2147 = vpack.c.b16 %v1723, %v1715
    %v2148 = vpack.c.b16 %v1724, %v1716
    %v2149 = vpack.c.b16 %v1725, %v1717
    %v2150 = vpack.c.b16 %v1726, %v1718
    %v2151 = vpack.c.b16 %v1727, %v1719
    %v2152 = vpack.c.b16 %v1736, %v1728
    %v2153 = vpack.c.b16 %v1737, %v1729
    %v2154 = vpack.c.b16 %v1738, %v1730
    %v2155 = vpack.c.b16 %v1739, %v1731
    %v2156 = vpack.c.b16 %v1740, %v1732
    %v2157 = vpack.c.b16 %v1741, %v1733
    %v2158 = vpack.c.b16 %v1742, %v1734
    %v2159 = vpack.c.b16 %v1743, %v1735
    %v2160 = vpack.c.b16 %v1752, %v1744
    %v2161 = vpack.c.b16 %v1753, %v1745
    %v2162 = vpack.c.b16 %v1754, %v1746
    %v2163 = vpack.c.b16 %v1755, %v1747
    %v2164 = vpack.c.b16 %v1756, %v1748
    %v2165 = vpack.c.b16 %v1757, %v1749
    %v2166 = vpack.c.b16 %v1758, %v1750
    %v2167 = vpack.c.b16 %v1759, %v1751
    %v2168 = vpack.c.b16 %v1768, %v1760
    %v2169 = vpack.c.b16 %v1769, %v1761
    %v2170 = vpack.c.b16 %v1770, %v1762
    %v2171 = vpack.c.b16 %v1771, %v1763
    %v2172 = vpack.c.b16 %v1772, %v1764
    %v2173 = vpack.c.b16 %v1773, %v1765
    %v2174 = vpack.c.b16 %v1774, %v1766
    %v2175 = vpack.c.b16 %v1775, %v1767
    %v2176 = vpack.c.b16 %v1784, %v1776
    %v2177 = vpack.c.b16 %v1785, %v1777
    %v2178 = vpack.c.b16 %v1786, %v1778
    %v2179 = vpack.c.b16 %v1787, %v1779
    %v2180 = vpack.c.b16 %v1788, %v1780
    %v2181 = vpack.c.b16 %v1789, %v1781
    %v2182 = vpack.c.b16 %v1790, %v1782
    %v2183 = vpack.c.b16 %v1791, %v1783
    %v2184 = vpack.c.b16 %v1800, %v1792
    %v2185 = vpack.c.b16 %v1801, %v1793
    %v2186 = vpack.c.b16 %v1802, %v1794
    %v2187 = vpack.c.b16 %v1803, %v1795
    %v2188 = vpack.c.b16 %v1804, %v1796
    %v2189 = vpack.c.b16 %v1805, %v1797
    %v2190 = vpack.c.b16 %v1806, %v1798
    %v2191 = vpack.c.b16 %v1807, %v1799
    %v2192 = vpack.c.b16 %v1816, %v1808
    %v2193 = vpack.c.b16 %v1817, %v1809
    %v2194 = vpack.c.b16 %v1818, %v1810
    %v2195 = vpack.c.b16 %v1819, %v1811
    %v2196 = vpack.c.b16 %v1820, %v1812
    %v2197 = vpack.c.b16 %v1821, %v1813
    %v2198 = vpack.c.b16 %v1822, %v1814
    %v2199 = vpack.c.b16 %v1823, %v1815
    %v2200 = vpack.c.b16 %v1832, %v1824
    %v2201 = vpack.c.b16 %v1833, %v1825
    %v2202 = vpack.c.b16 %v1834, %v1826
    %v2203 = vpack.c.b16 %v1835, %v1827
    %v2204 = vpack.c.b16 %v1836, %v1828
    %v2205 = vpack.c.b16 %v1837, %v1829
    %v2206 = vpack.c.b16 %v1838, %v1830
    %v2207 = vpack.c.b16 %v1839, %v1831
    %v2208 = vpack.c.b16 %v1848, %v1840
    %v2209 = vpack.c.b16 %v1849, %v1841
    %v2210 = vpack.c.b16 %v1850, %v1842
    %v2211 = vpack.c.b16 %v1851, %v1843
    %v2212 = vpack.c.b16 %v1852, %v1844
    %v2213 = vpack.c.b16 %v1853, %v1845
    %v2214 = vpack.c.b16 %v1854, %v1846
    %v2215 = vpack.c.b16 %v1855, %v1847
    %v2216 = vpack.c.b16 %v1864, %v1856
    %v2217 = vpack.c.b16 %v1865, %v1857
    %v2218 = vpack.c.b16 %v1866, %v1858
    %v2219 = vpack.c.b16 %v1867, %v1859
    %v2220 = vpack.c.b16 %v1868, %v1860
    %v2221 = vpack.c.b16 %v1869, %v1861
    %v2222 = vpack.c.b16 %v1870, %v1862
    %v2223 = vpack.c.b16 %v1871, %v1863
    %v2224 = vpack.c.b16 %v1880, %v1872
    %v2225 = vpack.c.b16 %v1881, %v1873
    %v2226 = vpack.c.b16 %v1882, %v1874
    %v2227 = vpack.c.b16 %v1883, %v1875
    %v2228 = vpack.c.b16 %v1884, %v1876
    %v2229 = vpack.c.b16 %v1885, %v1877
    %v2230 = vpack.c.b16 %v1886, %v1878
    %v2231 = vpack.c.b16 %v1887, %v1879
    %v2232 = vpack.c.b16 %v1896, %v1888
    %v2233 = vpack.c.b16 %v1897, %v1889
    %v2234 = vpack.c.b16 %v1898, %v1890
    %v2235 = vpack.c.b16 %v1899, %v1891
    %v2236 = vpack.c.b16 %v1900, %v1892
    %v2237 = vpack.c.b16 %v1901, %v1893
    %v2238 = vpack.c.b16 %v1902, %v1894
    %v2239 = vpack.c.b16 %v1903, %v1895
    %v2240 = vpack.c.b16 %v1912, %v1904
    %v2241 = vpack.c.b16 %v1913, %v1905
    %v2242 = vpack.c.b16 %v1914, %v1906
    %v2243 = vpack.c.b16 %v1915, %v1907
    %v2244 = vpack.c.b16 %v1916, %v1908
    %v2245 = vpack.c.b16 %v1917, %v1909
    %v2246 = vpack.c.b16 %v1918, %v1910
    %v2247 = vpack.c.b16 %v1919, %v1911
    %v2248 = vpack.c.b16 %v1928, %v1920
    %v2249 = vpack.c.b16 %v1929, %v1921
    %v2250 = vpack.c.b16 %v1930, %v1922
    %v2251 = vpack.c.b16 %v1931, %v1923
    %v2252 = vpack.c.b16 %v1932, %v1924
    %v2253 = vpack.c.b16 %v1933, %v1925
    %v2254 = vpack.c.b16 %v1934, %v1926
    %v2255 = vpack.c.b16 %v1935, %v1927
    %v2256 = vpack.c.b16 %v1944, %v1936
    %v2257 = vpack.c.b16 %v1945, %v1937
    %v2258 = vpack.c.b16 %v1946, %v1938
    %v2259 = vpack.c.b16 %v1947, %v1939
    %v2260 = vpack.c.b16 %v1948, %v1940
    %v2261 = vpack.c.b16 %v1949, %v1941
    %v2262 = vpack.c.b16 %v1950, %v1942
    %v2263 = vpack.c.b16 %v1951, %v1943
    %v2264 = vpack.c.b16 %v1960, %v1952
    %v2265 = vpack.c.b16 %v1961, %v1953
    %v2266 = vpack.c.b16 %v1962, %v1954
    %v2267 = vpack.c.b16 %v1963, %v1955
    %v2268 = vpack.c.b16 %v1964, %v1956
    %v2269 = vpack.c.b16 %v1965, %v1957
    %v2270 = vpack.c.b16 %v1966, %v1958
    %v2271 = vpack.c.b16 %v1967, %v1959
    %v2272 = vpack.c.b16 %v1976, %v1968
    %v2273 = vpack.c.b16 %v1977, %v1969
    %v2274 = vpack.c.b16 %v1978, %v1970
    %v2275 = vpack.c.b16 %v1979, %v1971
    %v2276 = vpack.c.b16 %v1980, %v1972
    %v2277 = vpack.c.b16 %v1981, %v1973
    %v2278 = vpack.c.b16 %v1982, %v1974
    %v2279 = vpack.c.b16 %v1983, %v1975
    %v2280 = vpack.c.b16 %v1992, %v1984
    %v2281 = vpack.c.b16 %v1993, %v1985
    %v2282 = vpack.c.b16 %v1994, %v1986
    %v2283 = vpack.c.b16 %v1995, %v1987
    %v2284 = vpack.c.b16 %v1996, %v1988
    %v2285 = vpack.c.b16 %v1997, %v1989
    %v2286 = vpack.c.b16 %v1998, %v1990
    %v2287 = vpack.c.b16 %v1999, %v1991
    %v2288 = vpack.c.b16 %v2008, %v2000
    %v2289 = vpack.c.b16 %v2009, %v2001
    %v2290 = vpack.c.b16 %v2010, %v2002
    %v2291 = vpack.c.b16 %v2011, %v2003
    %v2292 = vpack.c.b16 %v2012, %v2004
    %v2293 = vpack.c.b16 %v2013, %v2005
    %v2294 = vpack.c.b16 %v2014, %v2006
    %v2295 = vpack.c.b16 %v2015, %v2007
    %v2296 = vpack.c.b16 %v2024, %v2016
    %v2297 = vpack.c.b16 %v2025, %v2017
    %v2298 = vpack.c.b16 %v2026, %v2018
    %v2299 = vpack.c.b16 %v2027, %v2019
    %v2300 = vpack.c.b16 %v2028, %v2020
    %v2301 = vpack.c.b16 %v2029, %v2021
    %v2302 = vpack.c.b16 %v2030, %v2022
    %v2303 = vpack.c.b16 %v2031, %v2023
    %v2304 = vpack.c.b16 %v2040, %v2032
    %v2305 = vpack.c.b16 %v2041, %v2033
    %v2306 = vpack.c.b16 %v2042, %v2034
    %v2307 = vpack.c.b16 %v2043, %v2035
    %v2308 = vpack.c.b16 %v2044, %v2036
    %v2309 = vpack.c.b16 %v2045, %v2037
    %v2310 = vpack.c.b16 %v2046, %v2038
    %v2311 = vpack.c.b16 %v2047, %v2039
    %v2312 = vpack.c.b16 %v2056, %v2048
    %v2313 = vpack.c.b16 %v2057, %v2049
    %v2314 = vpack.c.b16 %v2058, %v2050
    %v2315 = vpack.c.b16 %v2059, %v2051
    %v2316 = vpack.c.b16 %v2060, %v2052
    %v2317 = vpack.c.b16 %v2061, %v2053
    %v2318 = vpack.c.b16 %v2062, %v2054
    %v2319 = vpack.c.b16 %v2063, %v2055
    %2576 = vmatprep.subr.bf16.mxu0 %v2065
    %2577 = vmatpush1.bf16.msra.mxu0 %v2064
    %2578 = vmatprep.subr.bf16.mxu0 %v2073
    %2579 = vmatpush1.bf16.msra.mxu0 %v2072
    %2580 = vmatprep.subr.bf16.mxu0 %v2081
    %2581 = vmatpush1.bf16.msra.mxu0 %v2080
    %2582 = vmatprep.subr.bf16.mxu0 %v2089
    %2583 = vmatpush1.bf16.msra.mxu0 %v2088
    %2584 = vmatprep.subr.bf16.mxu0 %v2097
    %2585 = vmatpush1.bf16.msra.mxu0 %v2096
    %2586 = vmatprep.subr.bf16.mxu0 %v2105
    %2587 = vmatpush1.bf16.msra.mxu0 %v2104
    %2588 = vmatprep.subr.bf16.mxu0 %v2113
    %2589 = vmatpush1.bf16.msra.mxu0 %v2112
    %2590 = vmatprep.subr.bf16.mxu0 %v2121
    %2591 = vmatpush1.bf16.msra.mxu0 %v2120
    %2592 = vmatprep.subr.bf16.mxu0 %v2129
    %2593 = vmatpush1.bf16.msra.mxu0 %v2128
    %2594 = vmatprep.subr.bf16.mxu0 %v2137
    %2595 = vmatpush1.bf16.msra.mxu0 %v2136
    %2596 = vmatprep.subr.bf16.mxu0 %v2145
    %2597 = vmatpush1.bf16.msra.mxu0 %v2144
    %2598 = vmatprep.subr.bf16.mxu0 %v2153
    %2599 = vmatpush1.bf16.msra.mxu0 %v2152
    %2600 = vmatprep.subr.bf16.mxu0 %v2161
    %2601 = vmatpush1.bf16.msra.mxu0 %v2160
    %2602 = vmatprep.subr.bf16.mxu0 %v2169
    %2603 = vmatpush1.bf16.msra.mxu0 %v2168
    %2604 = vmatprep.subr.bf16.mxu0 %v2177
    %2605 = vmatpush1.bf16.msra.mxu0 %v2176
    %2606 = vmatprep.subr.bf16.mxu0 %v2185
    %2607 = vmatpush1.bf16.msra.mxu0 %v2184
    %2608 = vmatprep.mubr.bf16.mxu0 %v1033
    %2609 = vmatmul.mubr.bf16.gmra.mrb[0].mxu0 %v1032
    %v2610 = vpop.f32.mrb[0].mxu0
    %v2611 = vadd.f32 0.0, %v2610
    %v2612 = vpop.f32.mrb[0].mxu0
    %v2613 = vadd.f32 0.0, %v2612
    %v2614 = vpop.f32.mrb[0].mxu0
    %v2615 = vadd.f32 0.0, %v2614
    %v2616 = vpop.f32.mrb[0].mxu0
    %v2617 = vadd.f32 0.0, %v2616
    %2618 = vmatprep.mubr.bf16.mxu0 %v1037
    %2619 = vmatmul.mubr.bf16.gmra.mrb[0].mxu0 %v1036
    %v2620 = vpop.f32.mrb[0].mxu0
    %v2621 = vadd.f32 0.0, %v2620
    %v2622 = vpop.f32.mrb[0].mxu0
    %v2623 = vadd.f32 0.0, %v2622
    %v2624 = vpop.f32.mrb[0].mxu0
    %v2625 = vadd.f32 0.0, %v2624
    %v2626 = vpop.f32.mrb[0].mxu0
    %v2627 = vadd.f32 0.0, %v2626
    %2628 = vdwg.mxu0
    %2629 = vmatprep.subr.bf16.mxu0 %v2193
    %2630 = vmatpush1.bf16.msra.mxu0 %v2192
    %2631 = vmatprep.subr.bf16.mxu0 %v2201
    %2632 = vmatpush1.bf16.msra.mxu0 %v2200
    %2633 = vmatprep.subr.bf16.mxu0 %v2209
    %2634 = vmatpush1.bf16.msra.mxu0 %v2208
    %2635 = vmatprep.subr.bf16.mxu0 %v2217
    %2636 = vmatpush1.bf16.msra.mxu0 %v2216
    %2637 = vmatprep.subr.bf16.mxu0 %v2225
    %2638 = vmatpush1.bf16.msra.mxu0 %v2224
    %2639 = vmatprep.subr.bf16.mxu0 %v2233
    %2640 = vmatpush1.bf16.msra.mxu0 %v2232
    %2641 = vmatprep.subr.bf16.mxu0 %v2241
    %2642 = vmatpush1.bf16.msra.mxu0 %v2240
    %2643 = vmatprep.subr.bf16.mxu0 %v2249
    %2644 = vmatpush1.bf16.msra.mxu0 %v2248
    %2645 = vmatprep.subr.bf16.mxu0 %v2257
    %2646 = vmatpush1.bf16.msra.mxu0 %v2256
    %2647 = vmatprep.subr.bf16.mxu0 %v2265
    %2648 = vmatpush1.bf16.msra.mxu0 %v2264
    %2649 = vmatprep.subr.bf16.mxu0 %v2273
    %2650 = vmatpush1.bf16.msra.mxu0 %v2272
    %2651 = vmatprep.subr.bf16.mxu0 %v2281
    %2652 = vmatpush1.bf16.msra.mxu0 %v2280
    %2653 = vmatprep.subr.bf16.mxu0 %v2289
    %2654 = vmatpush1.bf16.msra.mxu0 %v2288
    %2655 = vmatprep.subr.bf16.mxu0 %v2297
    %2656 = vmatpush1.bf16.msra.mxu0 %v2296
    %2657 = vmatprep.subr.bf16.mxu0 %v2305
    %2658 = vmatpush1.bf16.msra.mxu0 %v2304
    %2659 = vmatprep.subr.bf16.mxu0 %v2313
    %2660 = vmatpush1.bf16.msra.mxu0 %v2312
    %2661 = vmatprep.mubr.bf16.mxu0 %v1035
    %2662 = vmatmul.mubr.bf16.gmra.mrb[0].mxu0 %v1034
    %v2663 = vpop.f32.mrb[0].mxu0
    %v2664 = vadd.f32 %v2611, %v2663
    %v2665 = vpop.f32.mrb[0].mxu0
    %v2666 = vadd.f32 %v2613, %v2665
    %v2667 = vpop.f32.mrb[0].mxu0
    %v2668 = vadd.f32 %v2615, %v2667
    %v2669 = vpop.f32.mrb[0].mxu0
    %v2670 = vadd.f32 %v2617, %v2669
    %2671 = vmatprep.mubr.bf16.mxu0 %v1039
    %2672 = vmatmul.mubr.bf16.gmra.mrb[0].mxu0 %v1038
    %v2673 = vpop.f32.mrb[0].mxu0
    %v2674 = vadd.f32 %v2621, %v2673
    %v2675 = vpop.f32.mrb[0].mxu0
    %v2676 = vadd.f32 %v2623, %v2675
    %v2677 = vpop.f32.mrb[0].mxu0
    %v2678 = vadd.f32 %v2625, %v2677
    %v2679 = vpop.f32.mrb[0].mxu0
    %v2680 = vadd.f32 %v2627, %v2679
    %2681 = vdwg.mxu0
    %2682 = vmatprep.subr.bf16.mxu0 %v2067
    %2683 = vmatpush1.bf16.msra.mxu0 %v2066
    %2684 = vmatprep.subr.bf16.mxu0 %v2075
    %2685 = vmatpush1.bf16.msra.mxu0 %v2074
    %2686 = vmatprep.subr.bf16.mxu0 %v2083
    %2687 = vmatpush1.bf16.msra.mxu0 %v2082
    %2688 = vmatprep.subr.bf16.mxu0 %v2091
    %2689 = vmatpush1.bf16.msra.mxu0 %v2090
    %2690 = vmatprep.subr.bf16.mxu0 %v2099
    %2691 = vmatpush1.bf16.msra.mxu0 %v2098
    %2692 = vmatprep.subr.bf16.mxu0 %v2107
    %2693 = vmatpush1.bf16.msra.mxu0 %v2106
    %2694 = vmatprep.subr.bf16.mxu0 %v2115
    %2695 = vmatpush1.bf16.msra.mxu0 %v2114
    %2696 = vmatprep.subr.bf16.mxu0 %v2123
    %2697 = vmatpush1.bf16.msra.mxu0 %v2122
    %2698 = vmatprep.subr.bf16.mxu0 %v2131
    %2699 = vmatpush1.bf16.msra.mxu0 %v2130
    %2700 = vmatprep.subr.bf16.mxu0 %v2139
    %2701 = vmatpush1.bf16.msra.mxu0 %v2138
    %2702 = vmatprep.subr.bf16.mxu0 %v2147
    %2703 = vmatpush1.bf16.msra.mxu0 %v2146
    %2704 = vmatprep.subr.bf16.mxu0 %v2155
    %2705 = vmatpush1.bf16.msra.mxu0 %v2154
    %2706 = vmatprep.subr.bf16.mxu0 %v2163
    %2707 = vmatpush1.bf16.msra.mxu0 %v2162
    %2708 = vmatprep.subr.bf16.mxu0 %v2171
    %2709 = vmatpush1.bf16.msra.mxu0 %v2170
    %2710 = vmatprep.subr.bf16.mxu0 %v2179
    %2711 = vmatpush1.bf16.msra.mxu0 %v2178
    %2712 = vmatprep.subr.bf16.mxu0 %v2187
    %2713 = vmatpush1.bf16.msra.mxu0 %v2186
    %2714 = vmatprep.mubr.bf16.mxu0 %v1033
    %2715 = vmatmul.mubr.bf16.gmra.mrb[0].mxu0 %v1032
    %v2716 = vpop.f32.mrb[0].mxu0
    %v2717 = vadd.f32 0.0, %v2716
    %v2718 = vpop.f32.mrb[0].mxu0
    %v2719 = vadd.f32 0.0, %v2718
    %v2720 = vpop.f32.mrb[0].mxu0
    %v2721 = vadd.f32 0.0, %v2720
    %v2722 = vpop.f32.mrb[0].mxu0
    %v2723 = vadd.f32 0.0, %v2722
    %2724 = vmatprep.mubr.bf16.mxu0 %v1037
    %2725 = vmatmul.mubr.bf16.gmra.mrb[0].mxu0 %v1036
    %v2726 = vpop.f32.mrb[0].mxu0
    %v2727 = vadd.f32 0.0, %v2726
    %v2728 = vpop.f32.mrb[0].mxu0
    %v2729 = vadd.f32 0.0, %v2728
    %v2730 = vpop.f32.mrb[0].mxu0
    %v2731 = vpop.f32.mrb[0].mxu0
    %2732 = vdwg.mxu0
    %2733 = vmatprep.subr.bf16.mxu0 %v2195
    %2734 = vmatpush1.bf16.msra.mxu0 %v2194
    %2735 = vmatprep.subr.bf16.mxu0 %v2203
    %2736 = vmatpush1.bf16.msra.mxu0 %v2202
    %2737 = vmatprep.subr.bf16.mxu0 %v2211
    %2738 = vmatpush1.bf16.msra.mxu0 %v2210
    %2739 = vmatprep.subr.bf16.mxu0 %v2219
    %2740 = vmatpush1.bf16.msra.mxu0 %v2218
    %2741 = vmatprep.subr.bf16.mxu0 %v2227
    %2742 = vmatpush1.bf16.msra.mxu0 %v2226
    %2743 = vmatprep.subr.bf16.mxu0 %v2235
    %2744 = vmatpush1.bf16.msra.mxu0 %v2234
    %2745 = vmatprep.subr.bf16.mxu0 %v2243
    %2746 = vmatpush1.bf16.msra.mxu0 %v2242
    %2747 = vmatprep.subr.bf16.mxu0 %v2251
    %2748 = vmatpush1.bf16.msra.mxu0 %v2250
    %2749 = vmatprep.subr.bf16.mxu0 %v2259
    %2750 = vmatpush1.bf16.msra.mxu0 %v2258
    %2751 = vmatprep.subr.bf16.mxu0 %v2267
    %2752 = vmatpush1.bf16.msra.mxu0 %v2266
    %2753 = vmatprep.subr.bf16.mxu0 %v2275
    %2754 = vmatpush1.bf16.msra.mxu0 %v2274
    %2755 = vmatprep.subr.bf16.mxu0 %v2283
    %2756 = vmatpush1.bf16.msra.mxu0 %v2282
    %2757 = vmatprep.subr.bf16.mxu0 %v2291
    %2758 = vmatpush1.bf16.msra.mxu0 %v2290
    %2759 = vmatprep.subr.bf16.mxu0 %v2299
    %2760 = vmatpush1.bf16.msra.mxu0 %v2298
    %2761 = vmatprep.subr.bf16.mxu0 %v2307
    %2762 = vmatpush1.bf16.msra.mxu0 %v2306
    %2763 = vmatprep.subr.bf16.mxu0 %v2315
    %2764 = vmatpush1.bf16.msra.mxu0 %v2314
    %2765 = vmatprep.mubr.bf16.mxu0 %v1035
    %2766 = vmatmul.mubr.bf16.gmra.mrb[0].mxu0 %v1034
    %v2767 = vpop.f32.mrb[0].mxu0
    %v2768 = vadd.f32 %v2717, %v2767
    %v2769 = vpop.f32.mrb[0].mxu0
    %v2770 = vadd.f32 %v2719, %v2769
    %v2771 = vpop.f32.mrb[0].mxu0
    %v2772 = vadd.f32 %v2721, %v2771
    %v2773 = vpop.f32.mrb[0].mxu0
    %v2774 = vadd.f32 %v2723, %v2773
    %2775 = vmatprep.mubr.bf16.mxu0 %v1039
    %2776 = vmatmul.mubr.bf16.gmra.mrb[0].mxu0 %v1038
    %v2777 = vpop.f32.mrb[0].mxu0
    %v2778 = vadd.f32 %v2727, %v2777
    %v2779 = vpop.f32.mrb[0].mxu0
    %v2780 = vadd.f32 %v2729, %v2779
    %v2781 = vpop.f32.mrb[0].mxu0
    %v2782 = vpop.f32.mrb[0].mxu0
    %2783 = vdwg.mxu0
    %2784 = vmatprep.subr.bf16.mxu0 %v2069
    %2785 = vmatpush1.bf16.msra.mxu0 %v2068
    %2786 = vmatprep.subr.bf16.mxu0 %v2077
    %2787 = vmatpush1.bf16.msra.mxu0 %v2076
    %2788 = vmatprep.subr.bf16.mxu0 %v2085
    %2789 = vmatpush1.bf16.msra.mxu0 %v2084
    %2790 = vmatprep.subr.bf16.mxu0 %v2093
    %2791 = vmatpush1.bf16.msra.mxu0 %v2092
    %2792 = vmatprep.subr.bf16.mxu0 %v2101
    %2793 = vmatpush1.bf16.msra.mxu0 %v2100
    %2794 = vmatprep.subr.bf16.mxu0 %v2109
    %2795 = vmatpush1.bf16.msra.mxu0 %v2108
    %2796 = vmatprep.subr.bf16.mxu0 %v2117
    %2797 = vmatpush1.bf16.msra.mxu0 %v2116
    %2798 = vmatprep.subr.bf16.mxu0 %v2125
    %2799 = vmatpush1.bf16.msra.mxu0 %v2124
    %2800 = vmatprep.subr.bf16.mxu0 %v2133
    %2801 = vmatpush1.bf16.msra.mxu0 %v2132
    %2802 = vmatprep.subr.bf16.mxu0 %v2141
    %2803 = vmatpush1.bf16.msra.mxu0 %v2140
    %2804 = vmatprep.subr.bf16.mxu0 %v2149
    %2805 = vmatpush1.bf16.msra.mxu0 %v2148
    %2806 = vmatprep.subr.bf16.mxu0 %v2157
    %2807 = vmatpush1.bf16.msra.mxu0 %v2156
    %2808 = vmatprep.subr.bf16.mxu0 %v2165
    %2809 = vmatpush1.bf16.msra.mxu0 %v2164
    %2810 = vmatprep.subr.bf16.mxu0 %v2173
    %2811 = vmatpush1.bf16.msra.mxu0 %v2172
    %2812 = vmatprep.subr.bf16.mxu0 %v2181
    %2813 = vmatpush1.bf16.msra.mxu0 %v2180
    %2814 = vmatprep.subr.bf16.mxu0 %v2189
    %2815 = vmatpush1.bf16.msra.mxu0 %v2188
    %2816 = vmatprep.mubr.bf16.mxu0 %v1033
    %2817 = vmatmul.mubr.bf16.gmra.mrb[0].mxu0 %v1032
    %v2818 = vpop.f32.mrb[0].mxu0
    %v2819 = vpop.f32.mrb[0].mxu0
    %v2820 = vpop.f32.mrb[0].mxu0
    %v2821 = vadd.f32 0.0, %v2820
    %v2822 = vpop.f32.mrb[0].mxu0
    %v2823 = vadd.f32 0.0, %v2822
    %2824 = vmatprep.mubr.bf16.mxu0 %v1037
    %2825 = vmatmul.mubr.bf16.gmra.mrb[0].mxu0 %v1036
    %v2826 = vpop.f32.mrb[0].mxu0
    %v2827 = vadd.f32 0.0, %v2826
    %v2828 = vpop.f32.mrb[0].mxu0
    %v2829 = vadd.f32 0.0, %v2828
    %v2830 = vpop.f32.mrb[0].mxu0
    %v2831 = vadd.f32 0.0, %v2830
    %v2832 = vpop.f32.mrb[0].mxu0
    %v2833 = vadd.f32 0.0, %v2832
    %2834 = vdwg.mxu0
    %2835 = vmatprep.subr.bf16.mxu0 %v2197
    %2836 = vmatpush1.bf16.msra.mxu0 %v2196
    %2837 = vmatprep.subr.bf16.mxu0 %v2205
    %2838 = vmatpush1.bf16.msra.mxu0 %v2204
    %2839 = vmatprep.subr.bf16.mxu0 %v2213
    %2840 = vmatpush1.bf16.msra.mxu0 %v2212
    %2841 = vmatprep.subr.bf16.mxu0 %v2221
    %2842 = vmatpush1.bf16.msra.mxu0 %v2220
    %2843 = vmatprep.subr.bf16.mxu0 %v2229
    %2844 = vmatpush1.bf16.msra.mxu0 %v2228
    %2845 = vmatprep.subr.bf16.mxu0 %v2237
    %2846 = vmatpush1.bf16.msra.mxu0 %v2236
    %2847 = vmatprep.subr.bf16.mxu0 %v2245
    %2848 = vmatpush1.bf16.msra.mxu0 %v2244
    %2849 = vmatprep.subr.bf16.mxu0 %v2253
    %2850 = vmatpush1.bf16.msra.mxu0 %v2252
    %2851 = vmatprep.subr.bf16.mxu0 %v2261
    %2852 = vmatpush1.bf16.msra.mxu0 %v2260
    %2853 = vmatprep.subr.bf16.mxu0 %v2269
    %2854 = vmatpush1.bf16.msra.mxu0 %v2268
    %2855 = vmatprep.subr.bf16.mxu0 %v2277
    %2856 = vmatpush1.bf16.msra.mxu0 %v2276
    %2857 = vmatprep.subr.bf16.mxu0 %v2285
    %2858 = vmatpush1.bf16.msra.mxu0 %v2284
    %2859 = vmatprep.subr.bf16.mxu0 %v2293
    %2860 = vmatpush1.bf16.msra.mxu0 %v2292
    %2861 = vmatprep.subr.bf16.mxu0 %v2301
    %2862 = vmatpush1.bf16.msra.mxu0 %v2300
    %2863 = vmatprep.subr.bf16.mxu0 %v2309
    %2864 = vmatpush1.bf16.msra.mxu0 %v2308
    %2865 = vmatprep.subr.bf16.mxu0 %v2317
    %2866 = vmatpush1.bf16.msra.mxu0 %v2316
    %2867 = vmatprep.mubr.bf16.mxu0 %v1035
    %2868 = vmatmul.mubr.bf16.gmra.mrb[0].mxu0 %v1034
    %v2869 = vpop.f32.mrb[0].mxu0
    %v2870 = vpop.f32.mrb[0].mxu0
    %v2871 = vpop.f32.mrb[0].mxu0
    %v2872 = vadd.f32 %v2821, %v2871
    %v2873 = vpop.f32.mrb[0].mxu0
    %v2874 = vadd.f32 %v2823, %v2873
    %2875 = vmatprep.mubr.bf16.mxu0 %v1039
    %2876 = vmatmul.mubr.bf16.gmra.mrb[0].mxu0 %v1038
    %v2877 = vpop.f32.mrb[0].mxu0
    %v2878 = vadd.f32 %v2827, %v2877
    %v2879 = vpop.f32.mrb[0].mxu0
    %v2880 = vadd.f32 %v2829, %v2879
    %v2881 = vpop.f32.mrb[0].mxu0
    %v2882 = vadd.f32 %v2831, %v2881
    %v2883 = vpop.f32.mrb[0].mxu0
    %v2884 = vadd.f32 %v2833, %v2883
    %2885 = vdwg.mxu0
    %2886 = vmatprep.subr.bf16.mxu0 %v2071
    %2887 = vmatpush1.bf16.msra.mxu0 %v2070
    %2888 = vmatprep.subr.bf16.mxu0 %v2079
    %2889 = vmatpush1.bf16.msra.mxu0 %v2078
    %2890 = vmatprep.subr.bf16.mxu0 %v2087
    %2891 = vmatpush1.bf16.msra.mxu0 %v2086
    %2892 = vmatprep.subr.bf16.mxu0 %v2095
    %2893 = vmatpush1.bf16.msra.mxu0 %v2094
    %2894 = vmatprep.subr.bf16.mxu0 %v2103
    %2895 = vmatpush1.bf16.msra.mxu0 %v2102
    %2896 = vmatprep.subr.bf16.mxu0 %v2111
    %2897 = vmatpush1.bf16.msra.mxu0 %v2110
    %2898 = vmatprep.subr.bf16.mxu0 %v2119
    %2899 = vmatpush1.bf16.msra.mxu0 %v2118
    %2900 = vmatprep.subr.bf16.mxu0 %v2127
    %2901 = vmatpush1.bf16.msra.mxu0 %v2126
    %2902 = vmatprep.subr.bf16.mxu0 %v2135
    %2903 = vmatpush1.bf16.msra.mxu0 %v2134
    %2904 = vmatprep.subr.bf16.mxu0 %v2143
    %2905 = vmatpush1.bf16.msra.mxu0 %v2142
    %2906 = vmatprep.subr.bf16.mxu0 %v2151
    %2907 = vmatpush1.bf16.msra.mxu0 %v2150
    %2908 = vmatprep.subr.bf16.mxu0 %v2159
    %2909 = vmatpush1.bf16.msra.mxu0 %v2158
    %2910 = vmatprep.subr.bf16.mxu0 %v2167
    %2911 = vmatpush1.bf16.msra.mxu0 %v2166
    %2912 = vmatprep.subr.bf16.mxu0 %v2175
    %2913 = vmatpush1.bf16.msra.mxu0 %v2174
    %2914 = vmatprep.subr.bf16.mxu0 %v2183
    %2915 = vmatpush1.bf16.msra.mxu0 %v2182
    %2916 = vmatprep.subr.bf16.mxu0 %v2191
    %2917 = vmatpush1.bf16.msra.mxu0 %v2190
    %2918 = vmatprep.mubr.bf16.mxu0 %v1033
    %2919 = vmatmul.mubr.bf16.gmra.mrb[0].mxu0 %v1032
    %v2920 = vpop.f32.mrb[0].mxu0
    %v2921 = vadd.f32 0.0, %v2920
    %v2922 = vpop.f32.mrb[0].mxu0
    %v2923 = vadd.f32 0.0, %v2922
    %v2924 = vpop.f32.mrb[0].mxu0
    %v2925 = vadd.f32 0.0, %v2924
    %v2926 = vpop.f32.mrb[0].mxu0
    %v2927 = vadd.f32 0.0, %v2926
    %2928 = vmatprep.mubr.bf16.mxu0 %v1037
    %2929 = vmatmul.mubr.bf16.gmra.mrb[0].mxu0 %v1036
    %v2930 = vpop.f32.mrb[0].mxu0
    %v2931 = vadd.f32 0.0, %v2930
    %v2932 = vpop.f32.mrb[0].mxu0
    %v2933 = vadd.f32 0.0, %v2932
    %v2934 = vpop.f32.mrb[0].mxu0
    %v2935 = vadd.f32 0.0, %v2934
    %v2936 = vpop.f32.mrb[0].mxu0
    %v2937 = vadd.f32 0.0, %v2936
    %2938 = vdwg.mxu0
    %2939 = vmatprep.subr.bf16.mxu0 %v2199
    %2940 = vmatpush1.bf16.msra.mxu0 %v2198
    %2941 = vmatprep.subr.bf16.mxu0 %v2207
    %2942 = vmatpush1.bf16.msra.mxu0 %v2206
    %2943 = vmatprep.subr.bf16.mxu0 %v2215
    %2944 = vmatpush1.bf16.msra.mxu0 %v2214
    %2945 = vmatprep.subr.bf16.mxu0 %v2223
    %2946 = vmatpush1.bf16.msra.mxu0 %v2222
    %2947 = vmatprep.subr.bf16.mxu0 %v2231
    %2948 = vmatpush1.bf16.msra.mxu0 %v2230
    %2949 = vmatprep.subr.bf16.mxu0 %v2239
    %2950 = vmatpush1.bf16.msra.mxu0 %v2238
    %2951 = vmatprep.subr.bf16.mxu0 %v2247
    %2952 = vmatpush1.bf16.msra.mxu0 %v2246
    %2953 = vmatprep.subr.bf16.mxu0 %v2255
    %2954 = vmatpush1.bf16.msra.mxu0 %v2254
    %2955 = vmatprep.subr.bf16.mxu0 %v2263
    %2956 = vmatpush1.bf16.msra.mxu0 %v2262
    %2957 = vmatprep.subr.bf16.mxu0 %v2271
    %2958 = vmatpush1.bf16.msra.mxu0 %v2270
    %2959 = vmatprep.subr.bf16.mxu0 %v2279
    %2960 = vmatpush1.bf16.msra.mxu0 %v2278
    %2961 = vmatprep.subr.bf16.mxu0 %v2287
    %2962 = vmatpush1.bf16.msra.mxu0 %v2286
    %2963 = vmatprep.subr.bf16.mxu0 %v2295
    %2964 = vmatpush1.bf16.msra.mxu0 %v2294
    %2965 = vmatprep.subr.bf16.mxu0 %v2303
    %2966 = vmatpush1.bf16.msra.mxu0 %v2302
    %2967 = vmatprep.subr.bf16.mxu0 %v2311
    %2968 = vmatpush1.bf16.msra.mxu0 %v2310
    %2969 = vmatprep.subr.bf16.mxu0 %v2319
    %2970 = vmatpush1.bf16.msra.mxu0 %v2318
    %2971 = vmatprep.mubr.bf16.mxu0 %v1035
    %2972 = vmatmul.mubr.bf16.gmra.mrb[0].mxu0 %v1034
    %v2973 = vpop.f32.mrb[0].mxu0
    %v2974 = vadd.f32 %v2921, %v2973
    %v2975 = vpop.f32.mrb[0].mxu0
    %v2976 = vadd.f32 %v2923, %v2975
    %v2977 = vpop.f32.mrb[0].mxu0
    %v2978 = vadd.f32 %v2925, %v2977
    %v2979 = vpop.f32.mrb[0].mxu0
    %v2980 = vadd.f32 %v2927, %v2979
    %2981 = vmatprep.mubr.bf16.mxu0 %v1039
    %2982 = vmatmul.mubr.bf16.gmra.mrb[0].mxu0 %v1038
    %v2983 = vpop.f32.mrb[0].mxu0
    %v2984 = vadd.f32 %v2931, %v2983
    %v2985 = vpop.f32.mrb[0].mxu0
    %v2986 = vadd.f32 %v2933, %v2985
    %v2987 = vpop.f32.mrb[0].mxu0
    %v2988 = vadd.f32 %v2935, %v2987
    %v2989 = vpop.f32.mrb[0].mxu0
    %v2990 = vadd.f32 %v2937, %v2989
    %2991 = vdwg.mxu0
    %v2992 = vadd.f32 %v2664, 0.0
    %v2993 = vadd.f32 %v2666, 0.0
    %v2994 = vadd.f32 %v2668, %v2768
    %v2995 = vadd.f32 %v2670, %v2770
    %v2996 = vadd.f32 %v2674, %v2772
    %v2997 = vadd.f32 %v2676, %v2774
    %v2998 = vadd.f32 %v2678, %v2778
    %v2999 = vadd.f32 %v2680, %v2780
    %v3000 = vadd.f32 %v2974, %v2872
    %v3001 = vadd.f32 %v2976, %v2874
    %v3002 = vadd.f32 %v2978, %v2878
    %v3003 = vadd.f32 %v2980, %v2880
    %v3004 = vadd.f32 %v2984, %v2882
    %v3005 = vadd.f32 %v2986, %v2884
    %v3006 = vadd.f32 %v2988, 0.0
    %v3007 = vadd.f32 %v2990, 0.0
    %v3008 = vld [vmem:[#allocation16] sm:$0x3]
    %v3009 = vld [vmem:[#allocation17] sm:$0x3]
    %v3010 = vadd.s32 %v654, 32
    %v3011 = vadd.s32 %v654, 40
    %v3012 = vadd.s32 %v654, 48
    %v3013 = vadd.s32 %v654, 56
    %vm3014 = vcmp.lt.s32.totalorder %v3010, 0
    %v3015 = vsub.s32 0, %v3010
    %v3016 = vsel %vm3014, %v3015, %v3010
    %v3017 = vshrl.u32 %v3016, 3
    %v3018 = vand.u32 %v3016, 7
    %v3019 = vsub.s32 0, %v3018
    %v3020 = vsel %vm3014, %v3019, %v3018
    %vm3021 = vcmp.lt.s32.totalorder %v3011, 0
    %v3022 = vsub.s32 0, %v3011
    %v3023 = vsel %vm3021, %v3022, %v3011
    %v3024 = vshrl.u32 %v3023, 3
    %v3025 = vand.u32 %v3023, 7
    %v3026 = vsub.s32 0, %v3025
    %v3027 = vsel %vm3021, %v3026, %v3025
    %vm3028 = vcmp.lt.s32.totalorder %v3012, 0
    %v3029 = vsub.s32 0, %v3012
    %v3030 = vsel %vm3028, %v3029, %v3012
    %v3031 = vshrl.u32 %v3030, 3
    %v3032 = vand.u32 %v3030, 7
    %v3033 = vsub.s32 0, %v3032
    %v3034 = vsel %vm3028, %v3033, %v3032
    %vm3035 = vcmp.lt.s32.totalorder %v3013, 0
    %v3036 = vsub.s32 0, %v3013
    %v3037 = vsel %vm3035, %v3036, %v3013
    %v3038 = vshrl.u32 %v3037, 3
    %v3039 = vand.u32 %v3037, 7
    %v3040 = vsub.s32 0, %v3039
    %v3041 = vsel %vm3035, %v3040, %v3039
    %vm3042 = vcmp.ne.s32.totalorder %v3020, 0
    %vm3043 = vcmp.ne.s32.totalorder %v3027, 0
    %vm3044 = vcmp.ne.s32.totalorder %v3034, 0
    %vm3045 = vcmp.ne.s32.totalorder %v3041, 0
    %vm3046 = vcmp.lt.s32.totalorder %v3020, 0
    %vm3047 = vcmp.lt.s32.totalorder %v3027, 0
    %vm3048 = vcmp.lt.s32.totalorder %v3034, 0
    %vm3049 = vcmp.lt.s32.totalorder %v3041, 0
    %vm3050 = vmand %vm3046, %vm3042
    %vm3051 = vmand %vm3047, %vm3043
    %vm3052 = vmand %vm3048, %vm3044
    %vm3053 = vmand %vm3049, %vm3045
    %v3054 = vadd.s32 %v3020, 8
    %v3055 = vadd.s32 %v3027, 8
    %v3056 = vadd.s32 %v3034, 8
    %v3057 = vadd.s32 %v3041, 8
    %v3058 = vsel %vm3050, %v3054, %v3020
    %v3059 = vsel %vm3051, %v3055, %v3027
    %v3060 = vsel %vm3052, %v3056, %v3034
    %v3061 = vsel %vm3053, %v3057, %v3041
    %vm3062 = vcmp.lt.s32.totalorder %v3058, 2
    %vm3063 = vcmp.lt.s32.totalorder %v3059, 2
    %vm3064 = vcmp.lt.s32.totalorder %v3060, 2
    %vm3065 = vcmp.lt.s32.totalorder %v3061, 2
    %v3066 = vsel %vm3062, 1, 0
    %v3067 = vsel %vm3063, 1, 0
    %v3068 = vsel %vm3064, 1, 0
    %v3069 = vsel %vm3065, 1, 0
    %vm3070 = vcmp.eq.s32.totalorder %v3066, 1
    %vm3071 = vcmp.eq.s32.totalorder %v3067, 1
    %vm3072 = vcmp.eq.s32.totalorder %v3068, 1
    %vm3073 = vcmp.eq.s32.totalorder %v3069, 1
    %v3074 = vsel %vm714, %v2992, 0.0
    %v3075 = vsel %vm714, %v2993, 0.0
    %v3076 = vsel %vm715, %v2994, 0.0
    %v3077 = vsel %vm715, %v2995, 0.0
    %v3078 = vsel %vm716, %v2996, 0.0
    %v3079 = vsel %vm716, %v2997, 0.0
    %v3080 = vsel %vm717, %v2998, 0.0
    %v3081 = vsel %vm717, %v2999, 0.0
    %v3082 = vsel %vm3070, %v3000, 0.0
    %v3083 = vsel %vm3070, %v3001, 0.0
    %v3084 = vsel %vm3071, %v3002, 0.0
    %v3085 = vsel %vm3071, %v3003, 0.0
    %v3086 = vsel %vm3072, %v3004, 0.0
    %v3087 = vsel %vm3072, %v3005, 0.0
    %v3088 = vsel %vm3073, %v3006, 0.0
    %v3089 = vsel %vm3073, %v3007, 0.0
    %v3090 = vadd.f32 %v3074, %v3076
    %v3091 = vadd.f32 %v3090, %v3078
    %v3092 = vadd.f32 %v3091, %v3080
    %v3093 = vadd.f32 %v3092, %v3082
    %v3094 = vadd.f32 %v3093, %v3084
    %v3095 = vadd.f32 %v3094, %v3086
    %v3096 = vadd.f32 %v3095, %v3088
    %v3097 = vrot.slane %v3096, 4
    %v3098 = vadd.f32 %v3096, %v3097
    %v3099 = vrot.slane %v3098, 2
    %v3100 = vadd.f32 %v3098, %v3099
    %v3101 = vrot.slane %v3100, 1
    %v3102 = vadd.f32 %v3100, %v3101
    %v3103 = vadd.f32 %v3075, %v3077
    %v3104 = vadd.f32 %v3103, %v3079
    %v3105 = vadd.f32 %v3104, %v3081
    %v3106 = vadd.f32 %v3105, %v3083
    %v3107 = vadd.f32 %v3106, %v3085
    %v3108 = vadd.f32 %v3107, %v3087
    %v3109 = vadd.f32 %v3108, %v3089
    %v3110 = vrot.slane %v3109, 4
    %v3111 = vadd.f32 %v3109, %v3110
    %v3112 = vrot.slane %v3111, 2
    %v3113 = vadd.f32 %v3111, %v3112
    %v3114 = vrot.slane %v3113, 1
    %v3115 = vadd.f32 %v3113, %v3114
    %v3116 = vmul.f32 %v3074, %v2992
    %v3117 = vmul.f32 %v3075, %v2993
    %v3118 = vmul.f32 %v3076, %v2994
    %v3119 = vmul.f32 %v3077, %v2995
    %v3120 = vmul.f32 %v3078, %v2996
    %v3121 = vmul.f32 %v3079, %v2997
    %v3122 = vmul.f32 %v3080, %v2998
    %v3123 = vmul.f32 %v3081, %v2999
    %v3124 = vmul.f32 %v3082, %v3000
    %v3125 = vmul.f32 %v3083, %v3001
    %v3126 = vmul.f32 %v3084, %v3002
    %v3127 = vmul.f32 %v3085, %v3003
    %v3128 = vmul.f32 %v3086, %v3004
    %v3129 = vmul.f32 %v3087, %v3005
    %v3130 = vmul.f32 %v3088, %v3006
    %v3131 = vmul.f32 %v3089, %v3007
    %v3132 = vadd.f32 %v3116, %v3118
    %v3133 = vadd.f32 %v3132, %v3120
    %v3134 = vadd.f32 %v3133, %v3122
    %v3135 = vadd.f32 %v3134, %v3124
    %v3136 = vadd.f32 %v3135, %v3126
    %v3137 = vadd.f32 %v3136, %v3128
    %v3138 = vadd.f32 %v3137, %v3130
    %v3139 = vrot.slane %v3138, 4
    %v3140 = vadd.f32 %v3138, %v3139
    %v3141 = vrot.slane %v3140, 2
    %v3142 = vadd.f32 %v3140, %v3141
    %v3143 = vrot.slane %v3142, 1
    %v3144 = vadd.f32 %v3142, %v3143
    %v3145 = vadd.f32 %v3117, %v3119
    %v3146 = vadd.f32 %v3145, %v3121
    %v3147 = vadd.f32 %v3146, %v3123
    %v3148 = vadd.f32 %v3147, %v3125
    %v3149 = vadd.f32 %v3148, %v3127
    %v3150 = vadd.f32 %v3149, %v3129
    %v3151 = vadd.f32 %v3150, %v3131
    %v3152 = vrot.slane %v3151, 4
    %v3153 = vadd.f32 %v3151, %v3152
    %v3154 = vrot.slane %v3153, 2
    %v3155 = vadd.f32 %v3153, %v3154
    %v3156 = vrot.slane %v3155, 1
    %v3157 = vadd.f32 %v3155, %v3156
    %v3158 = vmul.f32 %v3102, 0.0625
    %v3159 = vmul.f32 %v3115, 0.0625
    %v3160 = vmul.f32 %v3144, 0.0625
    %v3161 = vmul.f32 %v3157, 0.0625
    %v3162 = vmul.f32 %v3158, %v3158
    %v3163 = vmul.f32 %v3159, %v3159
    %v3164 = vsub.f32 %v3160, %v3162
    %v3165 = vsub.f32 %v3161, %v3163
    %v3166 = vadd.f32 %v3164, 1e-05
    %v3167 = vadd.f32 %v3165, 1e-05
    %v3168 = vrsqrt.pop %v3166
    %v3169 = vrsqrt.pop %v3167
    %v3172 = vcombine.low %v3168, %v3169
    %v3174 = vunpack.c.l.s4 1966171168
    %v3175 = vunpack.c.0.s8 %v3174
    %v3176 = vlaneseq
    %v3177 = vshrl.u32 %v3176, 7
    %v3178 = vsub.s32 %v3175, %v3177
    %v3179 = vrot.slane %v3172, %v3178
    %v3181 = vunpack.c.l.s4 1966171168
    %v3182 = vunpack.c.0.s8 %v3181
    %v3183 = vlaneseq
    %v3184 = vshrl.u32 %v3183, 7
    %v3185 = vsub.s32 %v3182, %v3184
    %v3186 = vrot.slane %v3179, %v3185
    %v3188 = vmul.f32 %v3008, %v3186
    %v3190 = vlaneseq
    %v3191 = vshrl.u32 %v3190, 7
    %v3192 = vsub.s32 0, %v3191
    %v3193 = vrot.slane %v3188, %v3192
    %v3194 = vlaneseq
    %v3195 = vshrl.u32 %v3194, 7
    %v3196 = vsub.s32 1, %v3195
    %v3197 = vrot.slane %v3188, %v3196
    %v3200 = vmul.f32 %v3158, %v3193
    %v3201 = vmul.f32 %v3159, %v3197
    %v3204 = vcombine.low %v3200, %v3201
    %v3206 = vunpack.c.l.s4 1966171168
    %v3207 = vunpack.c.0.s8 %v3206
    %v3208 = vlaneseq
    %v3209 = vshrl.u32 %v3208, 7
    %v3210 = vsub.s32 %v3207, %v3209
    %v3211 = vrot.slane %v3204, %v3210
    %v3213 = vunpack.c.l.s4 1966171168
    %v3214 = vunpack.c.0.s8 %v3213
    %v3215 = vlaneseq
    %v3216 = vshrl.u32 %v3215, 7
    %v3217 = vsub.s32 %v3214, %v3216
    %v3218 = vrot.slane %v3211, %v3217
    %v3220 = vsub.f32 %v3009, %v3218
    %v3221 = vmul.f32 %v2992, %v3193
    %v3222 = vmul.f32 %v2993, %v3197
    %v3223 = vmul.f32 %v2994, %v3193
    %v3224 = vmul.f32 %v2995, %v3197
    %v3225 = vmul.f32 %v2996, %v3193
    %v3226 = vmul.f32 %v2997, %v3197
    %v3227 = vmul.f32 %v2998, %v3193
    %v3228 = vmul.f32 %v2999, %v3197
    %v3229 = vmul.f32 %v3000, %v3193
    %v3230 = vmul.f32 %v3001, %v3197
    %v3231 = vmul.f32 %v3002, %v3193
    %v3232 = vmul.f32 %v3003, %v3197
    %v3233 = vmul.f32 %v3004, %v3193
    %v3234 = vmul.f32 %v3005, %v3197
    %v3235 = vmul.f32 %v3006, %v3193
    %v3236 = vmul.f32 %v3007, %v3197
    %v3238 = vlaneseq
    %v3239 = vshrl.u32 %v3238, 7
    %v3240 = vsub.s32 0, %v3239
    %v3241 = vrot.slane %v3220, %v3240
    %v3242 = vlaneseq
    %v3243 = vshrl.u32 %v3242, 7
    %v3244 = vsub.s32 1, %v3243
    %v3245 = vrot.slane %v3220, %v3244
    %v3248 = vadd.f32 %v3221, %v3241
    %v3249 = vadd.f32 %v3222, %v3245
    %v3250 = vadd.f32 %v3223, %v3241
    %v3251 = vadd.f32 %v3224, %v3245
    %v3252 = vadd.f32 %v3225, %v3241
    %v3253 = vadd.f32 %v3226, %v3245
    %v3254 = vadd.f32 %v3227, %v3241
    %v3255 = vadd.f32 %v3228, %v3245
    %v3256 = vadd.f32 %v3229, %v3241
    %v3257 = vadd.f32 %v3230, %v3245
    %v3258 = vadd.f32 %v3231, %v3241
    %v3259 = vadd.f32 %v3232, %v3245
    %v3260 = vadd.f32 %v3233, %v3241
    %v3261 = vadd.f32 %v3234, %v3245
    %v3262 = vadd.f32 %v3235, %v3241
    %v3263 = vadd.f32 %v3236, %v3245
    %vm3264 = vcmp.ge.f32.partialorder %v3248, 0.0
    %vm3265 = vcmp.ge.f32.partialorder %v3249, 0.0
    %vm3266 = vcmp.ge.f32.partialorder %v3250, 0.0
    %vm3267 = vcmp.ge.f32.partialorder %v3251, 0.0
    %vm3268 = vcmp.ge.f32.partialorder %v3252, 0.0
    %vm3269 = vcmp.ge.f32.partialorder %v3253, 0.0
    %vm3270 = vcmp.ge.f32.partialorder %v3254, 0.0
    %vm3271 = vcmp.ge.f32.partialorder %v3255, 0.0
    %vm3272 = vcmp.ge.f32.partialorder %v3256, 0.0
    %vm3273 = vcmp.ge.f32.partialorder %v3257, 0.0
    %vm3274 = vcmp.ge.f32.partialorder %v3258, 0.0
    %vm3275 = vcmp.ge.f32.partialorder %v3259, 0.0
    %vm3276 = vcmp.ge.f32.partialorder %v3260, 0.0
    %vm3277 = vcmp.ge.f32.partialorder %v3261, 0.0
    %vm3278 = vcmp.ge.f32.partialorder %v3262, 0.0
    %vm3279 = vcmp.ge.f32.partialorder %v3263, 0.0
    %v3280 = vmul.f32 %v3248, 0.2
    %v3281 = vmul.f32 %v3249, 0.2
    %v3282 = vmul.f32 %v3250, 0.2
    %v3283 = vmul.f32 %v3251, 0.2
    %v3284 = vmul.f32 %v3252, 0.2
    %v3285 = vmul.f32 %v3253, 0.2
    %v3286 = vmul.f32 %v3254, 0.2
    %v3287 = vmul.f32 %v3255, 0.2
    %v3288 = vmul.f32 %v3256, 0.2
    %v3289 = vmul.f32 %v3257, 0.2
    %v3290 = vmul.f32 %v3258, 0.2
    %v3291 = vmul.f32 %v3259, 0.2
    %v3292 = vmul.f32 %v3260, 0.2
    %v3293 = vmul.f32 %v3261, 0.2
    %v3294 = vmul.f32 %v3262, 0.2
    %v3295 = vmul.f32 %v3263, 0.2
    %v3296 = vsel %vm3264, %v3248, %v3280
    %v3297 = vsel %vm3265, %v3249, %v3281
    %v3298 = vsel %vm3266, %v3250, %v3282
    %v3299 = vsel %vm3267, %v3251, %v3283
    %v3300 = vsel %vm3268, %v3252, %v3284
    %v3301 = vsel %vm3269, %v3253, %v3285
    %v3302 = vsel %vm3270, %v3254, %v3286
    %v3303 = vsel %vm3271, %v3255, %v3287
    %v3304 = vsel %vm3272, %v3256, %v3288
    %v3305 = vsel %vm3273, %v3257, %v3289
    %v3306 = vsel %vm3274, %v3258, %v3290
    %v3307 = vsel %vm3275, %v3259, %v3291
    %v3308 = vsel %vm3276, %v3260, %v3292
    %v3309 = vsel %vm3277, %v3261, %v3293
    %v3310 = vsel %vm3278, %v3262, %v3294
    %v3311 = vsel %vm3279, %v3263, %v3295
    %v3312 = vpack.c.bf16 %v3298, %v3296
    %v3313 = vpack.c.bf16 %v3299, %v3297
    %v3314 = vpack.c.bf16 %v3302, %v3300
    %v3315 = vpack.c.bf16 %v3303, %v3301
    %v3316 = vpack.c.bf16 %v3306, %v3304
    %v3317 = vpack.c.bf16 %v3307, %v3305
    %v3318 = vpack.c.bf16 %v3310, %v3308
    %v3319 = vpack.c.bf16 %v3311, %v3309
    %v3320 = vld [vmem:[#allocation8] sm:$0xff]
    %v3321 = vld [vmem:[#allocation8 + $0x8] sm:$0xff]
    %v3322 = vld [vmem:[#allocation8 + $0x10] sm:$0xff]
    %v3323 = vld [vmem:[#allocation8 + $0x18] sm:$0xff]
    %v3324 = vld [vmem:[#allocation8 + $0x20] sm:$0xff]
    %v3325 = vld [vmem:[#allocation8 + $0x28] sm:$0xff]
    %v3326 = vld [vmem:[#allocation8 + $0x30] sm:$0xff]
    %v3327 = vld [vmem:[#allocation8 + $0x38] sm:$0xff]
    %v3328 = vld [vmem:[#allocation8 + $0x40] sm:$0xff]
    %v3329 = vld [vmem:[#allocation8 + $0x48] sm:$0xff]
    %v3330 = vld [vmem:[#allocation8 + $0x50] sm:$0xff]
    %v3331 = vld [vmem:[#allocation8 + $0x58] sm:$0xff]
    %v3332 = vld [vmem:[#allocation8 + $0x60] sm:$0xff]
    %v3333 = vld [vmem:[#allocation8 + $0x68] sm:$0xff]
    %v3334 = vld [vmem:[#allocation8 + $0x70] sm:$0xff]
    %v3335 = vld [vmem:[#allocation8 + $0x78] sm:$0xff]
    %v3336 = vld [vmem:[#allocation8 + $0x80] sm:$0xff]
    %v3337 = vld [vmem:[#allocation8 + $0x88] sm:$0xff]
    %v3338 = vld [vmem:[#allocation8 + $0x90] sm:$0xff]
    %v3339 = vld [vmem:[#allocation8 + $0x98] sm:$0xff]
    %v3340 = vld [vmem:[#allocation8 + $0xa0] sm:$0xff]
    %v3341 = vld [vmem:[#allocation8 + $0xa8] sm:$0xff]
    %v3342 = vld [vmem:[#allocation8 + $0xb0] sm:$0xff]
    %v3343 = vld [vmem:[#allocation8 + $0xb8] sm:$0xff]
    %v3344 = vld [vmem:[#allocation8 + $0xc0] sm:$0xff]
    %v3345 = vld [vmem:[#allocation8 + $0xc8] sm:$0xff]
    %v3346 = vld [vmem:[#allocation8 + $0xd0] sm:$0xff]
    %v3347 = vld [vmem:[#allocation8 + $0xd8] sm:$0xff]
    %v3348 = vld [vmem:[#allocation8 + $0xe0] sm:$0xff]
    %v3349 = vld [vmem:[#allocation8 + $0xe8] sm:$0xff]
    %v3350 = vld [vmem:[#allocation8 + $0xf0] sm:$0xff]
    %v3351 = vld [vmem:[#allocation8 + $0xf8] sm:$0xff]
    %v3352 = vld [vmem:[#allocation8 + $0x100] sm:$0xff]
    %v3353 = vld [vmem:[#allocation8 + $0x108] sm:$0xff]
    %v3354 = vld [vmem:[#allocation8 + $0x110] sm:$0xff]
    %v3355 = vld [vmem:[#allocation8 + $0x118] sm:$0xff]
    %v3356 = vld [vmem:[#allocation8 + $0x120] sm:$0xff]
    %v3357 = vld [vmem:[#allocation8 + $0x128] sm:$0xff]
    %v3358 = vld [vmem:[#allocation8 + $0x130] sm:$0xff]
    %v3359 = vld [vmem:[#allocation8 + $0x138] sm:$0xff]
    %v3360 = vld [vmem:[#allocation8 + $0x140] sm:$0xff]
    %v3361 = vld [vmem:[#allocation8 + $0x148] sm:$0xff]
    %v3362 = vld [vmem:[#allocation8 + $0x150] sm:$0xff]
    %v3363 = vld [vmem:[#allocation8 + $0x158] sm:$0xff]
    %v3364 = vld [vmem:[#allocation8 + $0x160] sm:$0xff]
    %v3365 = vld [vmem:[#allocation8 + $0x168] sm:$0xff]
    %v3366 = vld [vmem:[#allocation8 + $0x170] sm:$0xff]
    %v3367 = vld [vmem:[#allocation8 + $0x178] sm:$0xff]
    %v3368 = vld [vmem:[#allocation8 + $0x180] sm:$0xff]
    %v3369 = vld [vmem:[#allocation8 + $0x188] sm:$0xff]
    %v3370 = vld [vmem:[#allocation8 + $0x190] sm:$0xff]
    %v3371 = vld [vmem:[#allocation8 + $0x198] sm:$0xff]
    %v3372 = vld [vmem:[#allocation8 + $0x1a0] sm:$0xff]
    %v3373 = vld [vmem:[#allocation8 + $0x1a8] sm:$0xff]
    %v3374 = vld [vmem:[#allocation8 + $0x1b0] sm:$0xff]
    %v3375 = vld [vmem:[#allocation8 + $0x1b8] sm:$0xff]
    %v3376 = vld [vmem:[#allocation8 + $0x1c0] sm:$0xff]
    %v3377 = vld [vmem:[#allocation8 + $0x1c8] sm:$0xff]
    %v3378 = vld [vmem:[#allocation8 + $0x1d0] sm:$0xff]
    %v3379 = vld [vmem:[#allocation8 + $0x1d8] sm:$0xff]
    %v3380 = vld [vmem:[#allocation8 + $0x1e0] sm:$0xff]
    %v3381 = vld [vmem:[#allocation8 + $0x1e8] sm:$0xff]
    %v3382 = vld [vmem:[#allocation8 + $0x1f0] sm:$0xff]
    %v3383 = vld [vmem:[#allocation8 + $0x1f8] sm:$0xff]
    %v3448 = vunpack.c.l.b16 %v3320
    %v3449 = vunpack.c.h.b16 %v3320
    %v3450 = vunpack.c.l.b16 %v3321
    %v3451 = vunpack.c.h.b16 %v3321
    %v3452 = vunpack.c.l.b16 %v3322
    %v3453 = vunpack.c.h.b16 %v3322
    %v3454 = vunpack.c.l.b16 %v3323
    %v3455 = vunpack.c.h.b16 %v3323
    %v3456 = vunpack.c.l.b16 %v3324
    %v3457 = vunpack.c.h.b16 %v3324
    %v3458 = vunpack.c.l.b16 %v3325
    %v3459 = vunpack.c.h.b16 %v3325
    %v3460 = vunpack.c.l.b16 %v3326
    %v3461 = vunpack.c.h.b16 %v3326
    %v3462 = vunpack.c.l.b16 %v3327
    %v3463 = vunpack.c.h.b16 %v3327
    %v3464 = vunpack.c.l.b16 %v3328
    %v3465 = vunpack.c.h.b16 %v3328
    %v3466 = vunpack.c.l.b16 %v3329
    %v3467 = vunpack.c.h.b16 %v3329
    %v3468 = vunpack.c.l.b16 %v3330
    %v3469 = vunpack.c.h.b16 %v3330
    %v3470 = vunpack.c.l.b16 %v3331
    %v3471 = vunpack.c.h.b16 %v3331
    %v3472 = vunpack.c.l.b16 %v3332
    %v3473 = vunpack.c.h.b16 %v3332
    %v3474 = vunpack.c.l.b16 %v3333
    %v3475 = vunpack.c.h.b16 %v3333
    %v3476 = vunpack.c.l.b16 %v3334
    %v3477 = vunpack.c.h.b16 %v3334
    %v3478 = vunpack.c.l.b16 %v3335
    %v3479 = vunpack.c.h.b16 %v3335
    %v3480 = vunpack.c.l.b16 %v3336
    %v3481 = vunpack.c.h.b16 %v3336
    %v3482 = vunpack.c.l.b16 %v3337
    %v3483 = vunpack.c.h.b16 %v3337
    %v3484 = vunpack.c.l.b16 %v3338
    %v3485 = vunpack.c.h.b16 %v3338
    %v3486 = vunpack.c.l.b16 %v3339
    %v3487 = vunpack.c.h.b16 %v3339
    %v3488 = vunpack.c.l.b16 %v3340
    %v3489 = vunpack.c.h.b16 %v3340
    %v3490 = vunpack.c.l.b16 %v3341
    %v3491 = vunpack.c.h.b16 %v3341
    %v3492 = vunpack.c.l.b16 %v3342
    %v3493 = vunpack.c.h.b16 %v3342
    %v3494 = vunpack.c.l.b16 %v3343
    %v3495 = vunpack.c.h.b16 %v3343
    %v3496 = vunpack.c.l.b16 %v3344
    %v3497 = vunpack.c.h.b16 %v3344
    %v3498 = vunpack.c.l.b16 %v3345
    %v3499 = vunpack.c.h.b16 %v3345
    %v3500 = vunpack.c.l.b16 %v3346
    %v3501 = vunpack.c.h.b16 %v3346
    %v3502 = vunpack.c.l.b16 %v3347
    %v3503 = vunpack.c.h.b16 %v3347
    %v3504 = vunpack.c.l.b16 %v3348
    %v3505 = vunpack.c.h.b16 %v3348
    %v3506 = vunpack.c.l.b16 %v3349
    %v3507 = vunpack.c.h.b16 %v3349
    %v3508 = vunpack.c.l.b16 %v3350
    %v3509 = vunpack.c.h.b16 %v3350
    %v3510 = vunpack.c.l.b16 %v3351
    %v3511 = vunpack.c.h.b16 %v3351
    %v3512 = vunpack.c.l.b16 %v3352
    %v3513 = vunpack.c.h.b16 %v3352
    %v3514 = vunpack.c.l.b16 %v3353
    %v3515 = vunpack.c.h.b16 %v3353
    %v3516 = vunpack.c.l.b16 %v3354
    %v3517 = vunpack.c.h.b16 %v3354
    %v3518 = vunpack.c.l.b16 %v3355
    %v3519 = vunpack.c.h.b16 %v3355
    %v3520 = vunpack.c.l.b16 %v3356
    %v3521 = vunpack.c.h.b16 %v3356
    %v3522 = vunpack.c.l.b16 %v3357
    %v3523 = vunpack.c.h.b16 %v3357
    %v3524 = vunpack.c.l.b16 %v3358
    %v3525 = vunpack.c.h.b16 %v3358
    %v3526 = vunpack.c.l.b16 %v3359
    %v3527 = vunpack.c.h.b16 %v3359
    %v3528 = vunpack.c.l.b16 %v3360
    %v3529 = vunpack.c.h.b16 %v3360
    %v3530 = vunpack.c.l.b16 %v3361
    %v3531 = vunpack.c.h.b16 %v3361
    %v3532 = vunpack.c.l.b16 %v3362
    %v3533 = vunpack.c.h.b16 %v3362
    %v3534 = vunpack.c.l.b16 %v3363
    %v3535 = vunpack.c.h.b16 %v3363
    %v3536 = vunpack.c.l.b16 %v3364
    %v3537 = vunpack.c.h.b16 %v3364
    %v3538 = vunpack.c.l.b16 %v3365
    %v3539 = vunpack.c.h.b16 %v3365
    %v3540 = vunpack.c.l.b16 %v3366
    %v3541 = vunpack.c.h.b16 %v3366
    %v3542 = vunpack.c.l.b16 %v3367
    %v3543 = vunpack.c.h.b16 %v3367
    %v3544 = vunpack.c.l.b16 %v3368
    %v3545 = vunpack.c.h.b16 %v3368
    %v3546 = vunpack.c.l.b16 %v3369
    %v3547 = vunpack.c.h.b16 %v3369
    %v3548 = vunpack.c.l.b16 %v3370
    %v3549 = vunpack.c.h.b16 %v3370
    %v3550 = vunpack.c.l.b16 %v3371
    %v3551 = vunpack.c.h.b16 %v3371
    %v3552 = vunpack.c.l.b16 %v3372
    %v3553 = vunpack.c.h.b16 %v3372
    %v3554 = vunpack.c.l.b16 %v3373
    %v3555 = vunpack.c.h.b16 %v3373
    %v3556 = vunpack.c.l.b16 %v3374
    %v3557 = vunpack.c.h.b16 %v3374
    %v3558 = vunpack.c.l.b16 %v3375
    %v3559 = vunpack.c.h.b16 %v3375
    %v3560 = vunpack.c.l.b16 %v3376
    %v3561 = vunpack.c.h.b16 %v3376
    %v3562 = vunpack.c.l.b16 %v3377
    %v3563 = vunpack.c.h.b16 %v3377
    %v3564 = vunpack.c.l.b16 %v3378
    %v3565 = vunpack.c.h.b16 %v3378
    %v3566 = vunpack.c.l.b16 %v3379
    %v3567 = vunpack.c.h.b16 %v3379
    %v3568 = vunpack.c.l.b16 %v3380
    %v3569 = vunpack.c.h.b16 %v3380
    %v3570 = vunpack.c.l.b16 %v3381
    %v3571 = vunpack.c.h.b16 %v3381
    %v3572 = vunpack.c.l.b16 %v3382
    %v3573 = vunpack.c.h.b16 %v3382
    %v3574 = vunpack.c.l.b16 %v3383
    %v3575 = vunpack.c.h.b16 %v3383
    %v3576 = vpack.c.b16 %v3452, %v3448
    %v3577 = vpack.c.b16 %v3453, %v3449
    %v3578 = vpack.c.b16 %v3454, %v3450
    %v3579 = vpack.c.b16 %v3455, %v3451
    %v3580 = vpack.c.b16 %v3460, %v3456
    %v3581 = vpack.c.b16 %v3461, %v3457
    %v3582 = vpack.c.b16 %v3462, %v3458
    %v3583 = vpack.c.b16 %v3463, %v3459
    %v3584 = vpack.c.b16 %v3468, %v3464
    %v3585 = vpack.c.b16 %v3469, %v3465
    %v3586 = vpack.c.b16 %v3470, %v3466
    %v3587 = vpack.c.b16 %v3471, %v3467
    %v3588 = vpack.c.b16 %v3476, %v3472
    %v3589 = vpack.c.b16 %v3477, %v3473
    %v3590 = vpack.c.b16 %v3478, %v3474
    %v3591 = vpack.c.b16 %v3479, %v3475
    %v3592 = vpack.c.b16 %v3484, %v3480
    %v3593 = vpack.c.b16 %v3485, %v3481
    %v3594 = vpack.c.b16 %v3486, %v3482
    %v3595 = vpack.c.b16 %v3487, %v3483
    %v3596 = vpack.c.b16 %v3492, %v3488
    %v3597 = vpack.c.b16 %v3493, %v3489
    %v3598 = vpack.c.b16 %v3494, %v3490
    %v3599 = vpack.c.b16 %v3495, %v3491
    %v3600 = vpack.c.b16 %v3500, %v3496
    %v3601 = vpack.c.b16 %v3501, %v3497
    %v3602 = vpack.c.b16 %v3502, %v3498
    %v3603 = vpack.c.b16 %v3503, %v3499
    %v3604 = vpack.c.b16 %v3508, %v3504
    %v3605 = vpack.c.b16 %v3509, %v3505
    %v3606 = vpack.c.b16 %v3510, %v3506
    %v3607 = vpack.c.b16 %v3511, %v3507
    %v3608 = vpack.c.b16 %v3516, %v3512
    %v3609 = vpack.c.b16 %v3517, %v3513
    %v3610 = vpack.c.b16 %v3518, %v3514
    %v3611 = vpack.c.b16 %v3519, %v3515
    %v3612 = vpack.c.b16 %v3524, %v3520
    %v3613 = vpack.c.b16 %v3525, %v3521
    %v3614 = vpack.c.b16 %v3526, %v3522
    %v3615 = vpack.c.b16 %v3527, %v3523
    %v3616 = vpack.c.b16 %v3532, %v3528
    %v3617 = vpack.c.b16 %v3533, %v3529
    %v3618 = vpack.c.b16 %v3534, %v3530
    %v3619 = vpack.c.b16 %v3535, %v3531
    %v3620 = vpack.c.b16 %v3540, %v3536
    %v3621 = vpack.c.b16 %v3541, %v3537
    %v3622 = vpack.c.b16 %v3542, %v3538
    %v3623 = vpack.c.b16 %v3543, %v3539
    %v3624 = vpack.c.b16 %v3548, %v3544
    %v3625 = vpack.c.b16 %v3549, %v3545
    %v3626 = vpack.c.b16 %v3550, %v3546
    %v3627 = vpack.c.b16 %v3551, %v3547
    %v3628 = vpack.c.b16 %v3556, %v3552
    %v3629 = vpack.c.b16 %v3557, %v3553
    %v3630 = vpack.c.b16 %v3558, %v3554
    %v3631 = vpack.c.b16 %v3559, %v3555
    %v3632 = vpack.c.b16 %v3564, %v3560
    %v3633 = vpack.c.b16 %v3565, %v3561
    %v3634 = vpack.c.b16 %v3566, %v3562
    %v3635 = vpack.c.b16 %v3567, %v3563
    %v3636 = vpack.c.b16 %v3572, %v3568
    %v3637 = vpack.c.b16 %v3573, %v3569
    %v3638 = vpack.c.b16 %v3574, %v3570
    %v3639 = vpack.c.b16 %v3575, %v3571
    %3704 = vmatprep.subr.bf16.mxu0 %v3577
    %3705 = vmatpush1.bf16.msra.mxu0 %v3576
    %3706 = vmatprep.subr.bf16.mxu0 %v3581
    %3707 = vmatpush1.bf16.msra.mxu0 %v3580
    %3708 = vmatprep.subr.bf16.mxu0 %v3585
    %3709 = vmatpush1.bf16.msra.mxu0 %v3584
    %3710 = vmatprep.subr.bf16.mxu0 %v3589
    %3711 = vmatpush1.bf16.msra.mxu0 %v3588
    %3712 = vmatprep.subr.bf16.mxu0 %v3593
    %3713 = vmatpush1.bf16.msra.mxu0 %v3592
    %3714 = vmatprep.subr.bf16.mxu0 %v3597
    %3715 = vmatpush1.bf16.msra.mxu0 %v3596
    %3716 = vmatprep.subr.bf16.mxu0 %v3601
    %3717 = vmatpush1.bf16.msra.mxu0 %v3600
    %3718 = vmatprep.subr.bf16.mxu0 %v3605
    %3719 = vmatpush1.bf16.msra.mxu0 %v3604
    %3720 = vmatprep.subr.bf16.mxu0 %v3609
    %3721 = vmatpush1.bf16.msra.mxu0 %v3608
    %3722 = vmatprep.subr.bf16.mxu0 %v3613
    %3723 = vmatpush1.bf16.msra.mxu0 %v3612
    %3724 = vmatprep.subr.bf16.mxu0 %v3617
    %3725 = vmatpush1.bf16.msra.mxu0 %v3616
    %3726 = vmatprep.subr.bf16.mxu0 %v3621
    %3727 = vmatpush1.bf16.msra.mxu0 %v3620
    %3728 = vmatprep.subr.bf16.mxu0 %v3625
    %3729 = vmatpush1.bf16.msra.mxu0 %v3624
    %3730 = vmatprep.subr.bf16.mxu0 %v3629
    %3731 = vmatpush1.bf16.msra.mxu0 %v3628
    %3732 = vmatprep.subr.bf16.mxu0 %v3633
    %3733 = vmatpush1.bf16.msra.mxu0 %v3632
    %3734 = vmatprep.subr.bf16.mxu0 %v3637
    %3735 = vmatpush1.bf16.msra.mxu0 %v3636
    %3736 = vmatprep.mubr.bf16.mxu0 %v3313
    %3737 = vmatmul.mubr.bf16.gmra.mrb[0].mxu0 %v3312
    %v3738 = vpop.f32.mrb[0].mxu0
    %v3739 = vadd.f32 0.0, %v3738
    %v3740 = vpop.f32.mrb[0].mxu0
    %v3741 = vadd.f32 0.0, %v3740
    %v3742 = vpop.f32.mrb[0].mxu0
    %v3743 = vadd.f32 0.0, %v3742
    %v3744 = vpop.f32.mrb[0].mxu0
    %v3745 = vadd.f32 0.0, %v3744
    %3746 = vmatprep.mubr.bf16.mxu0 %v3315
    %3747 = vmatmul.mubr.bf16.gmra.mrb[0].mxu0 %v3314
    %v3748 = vpop.f32.mrb[0].mxu0
    %v3749 = vadd.f32 0.0, %v3748
    %v3750 = vpop.f32.mrb[0].mxu0
    %v3751 = vadd.f32 0.0, %v3750
    %v3752 = vpop.f32.mrb[0].mxu0
    %v3753 = vadd.f32 0.0, %v3752
    %v3754 = vpop.f32.mrb[0].mxu0
    %v3755 = vadd.f32 0.0, %v3754
    %3756 = vmatprep.mubr.bf16.mxu0 %v3317
    %3757 = vmatmul.mubr.bf16.gmra.mrb[0].mxu0 %v3316
    %v3758 = vpop.f32.mrb[0].mxu0
    %v3759 = vadd.f32 0.0, %v3758
    %v3760 = vpop.f32.mrb[0].mxu0
    %v3761 = vadd.f32 0.0, %v3760
    %v3762 = vpop.f32.mrb[0].mxu0
    %v3763 = vadd.f32 0.0, %v3762
    %v3764 = vpop.f32.mrb[0].mxu0
    %v3765 = vadd.f32 0.0, %v3764
    %3766 = vmatprep.mubr.bf16.mxu0 %v3319
    %3767 = vmatmul.mubr.bf16.gmra.mrb[0].mxu0 %v3318
    %v3768 = vpop.f32.mrb[0].mxu0
    %v3769 = vadd.f32 0.0, %v3768
    %v3770 = vpop.f32.mrb[0].mxu0
    %v3771 = vadd.f32 0.0, %v3770
    %v3772 = vpop.f32.mrb[0].mxu0
    %v3773 = vadd.f32 0.0, %v3772
    %v3774 = vpop.f32.mrb[0].mxu0
    %3775 = vdwg.mxu0
    %3776 = vmatprep.subr.bf16.mxu0 %v3579
    %3777 = vmatpush1.bf16.msra.mxu0 %v3578
    %3778 = vmatprep.subr.bf16.mxu0 %v3583
    %3779 = vmatpush1.bf16.msra.mxu0 %v3582
    %3780 = vmatprep.subr.bf16.mxu0 %v3587
    %3781 = vmatpush1.bf16.msra.mxu0 %v3586
    %3782 = vmatprep.subr.bf16.mxu0 %v3591
    %3783 = vmatpush1.bf16.msra.mxu0 %v3590
    %3784 = vmatprep.subr.bf16.mxu0 %v3595
    %3785 = vmatpush1.bf16.msra.mxu0 %v3594
    %3786 = vmatprep.subr.bf16.mxu0 %v3599
    %3787 = vmatpush1.bf16.msra.mxu0 %v3598
    %3788 = vmatprep.subr.bf16.mxu0 %v3603
    %3789 = vmatpush1.bf16.msra.mxu0 %v3602
    %3790 = vmatprep.subr.bf16.mxu0 %v3607
    %3791 = vmatpush1.bf16.msra.mxu0 %v3606
    %3792 = vmatprep.subr.bf16.mxu0 %v3611
    %3793 = vmatpush1.bf16.msra.mxu0 %v3610
    %3794 = vmatprep.subr.bf16.mxu0 %v3615
    %3795 = vmatpush1.bf16.msra.mxu0 %v3614
    %3796 = vmatprep.subr.bf16.mxu0 %v3619
    %3797 = vmatpush1.bf16.msra.mxu0 %v3618
    %3798 = vmatprep.subr.bf16.mxu0 %v3623
    %3799 = vmatpush1.bf16.msra.mxu0 %v3622
    %3800 = vmatprep.subr.bf16.mxu0 %v3627
    %3801 = vmatpush1.bf16.msra.mxu0 %v3626
    %3802 = vmatprep.subr.bf16.mxu0 %v3631
    %3803 = vmatpush1.bf16.msra.mxu0 %v3630
    %3804 = vmatprep.subr.bf16.mxu0 %v3635
    %3805 = vmatpush1.bf16.msra.mxu0 %v3634
    %3806 = vmatprep.subr.bf16.mxu0 %v3639
    %3807 = vmatpush1.bf16.msra.mxu0 %v3638
    %3808 = vmatprep.mubr.bf16.mxu0 %v3313
    %3809 = vmatmul.mubr.bf16.gmra.mrb[0].mxu0 %v3312
    %v3810 = vpop.f32.mrb[0].mxu0
    %v3811 = vpop.f32.mrb[0].mxu0
    %v3812 = vadd.f32 0.0, %v3811
    %v3813 = vpop.f32.mrb[0].mxu0
    %v3814 = vadd.f32 0.0, %v3813
    %v3815 = vpop.f32.mrb[0].mxu0
    %v3816 = vadd.f32 0.0, %v3815
    %3817 = vmatprep.mubr.bf16.mxu0 %v3315
    %3818 = vmatmul.mubr.bf16.gmra.mrb[0].mxu0 %v3314
    %v3819 = vpop.f32.mrb[0].mxu0
    %v3820 = vadd.f32 0.0, %v3819
    %v3821 = vpop.f32.mrb[0].mxu0
    %v3822 = vadd.f32 0.0, %v3821
    %v3823 = vpop.f32.mrb[0].mxu0
    %v3824 = vadd.f32 0.0, %v3823
    %v3825 = vpop.f32.mrb[0].mxu0
    %v3826 = vadd.f32 0.0, %v3825
    %3827 = vmatprep.mubr.bf16.mxu0 %v3317
    %3828 = vmatmul.mubr.bf16.gmra.mrb[0].mxu0 %v3316
    %v3829 = vpop.f32.mrb[0].mxu0
    %v3830 = vadd.f32 0.0, %v3829
    %v3831 = vpop.f32.mrb[0].mxu0
    %v3832 = vadd.f32 0.0, %v3831
    %v3833 = vpop.f32.mrb[0].mxu0
    %v3834 = vadd.f32 0.0, %v3833
    %v3835 = vpop.f32.mrb[0].mxu0
    %v3836 = vadd.f32 0.0, %v3835
    %3837 = vmatprep.mubr.bf16.mxu0 %v3319
    %3838 = vmatmul.mubr.bf16.gmra.mrb[0].mxu0 %v3318
    %v3839 = vpop.f32.mrb[0].mxu0
    %v3840 = vadd.f32 0.0, %v3839
    %v3841 = vpop.f32.mrb[0].mxu0
    %v3842 = vadd.f32 0.0, %v3841
    %v3843 = vpop.f32.mrb[0].mxu0
    %v3844 = vadd.f32 0.0, %v3843
    %v3845 = vpop.f32.mrb[0].mxu0
    %v3846 = vadd.f32 0.0, %v3845
    %3847 = vdwg.mxu0
    %v3848 = vadd.f32 %v3739, 0.0
    %v3849 = vadd.f32 %v3743, %v3761
    %v3850 = vadd.f32 %v3749, %v3765
    %v3851 = vadd.f32 %v3753, %v3771
    %v3852 = vadd.f32 %v3812, %v3830
    %v3853 = vadd.f32 %v3816, %v3834
    %v3854 = vadd.f32 %v3822, %v3840
    %v3855 = vadd.f32 %v3826, %v3844
    %v3856 = vadd.f32 %v3759, %v3741
    %v3857 = vadd.f32 %v3763, %v3745
    %v3858 = vadd.f32 %v3769, %v3751
    %v3859 = vadd.f32 %v3773, %v3755
    %v3860 = vadd.f32 %v3832, %v3814
    %v3861 = vadd.f32 %v3836, %v3820
    %v3862 = vadd.f32 %v3842, %v3824
    %v3863 = vadd.f32 %v3846, 0.0
    %v3864 = vld [vmem:[#allocation19] sm:$0x1]
    %v3865 = vld [vmem:[#allocation20] sm:$0x1]
    %v3866 = vadd.s32 %v654, 64
    %v3867 = vadd.s32 %v654, 72
    %v3868 = vadd.s32 %v654, 80
    %v3869 = vadd.s32 %v654, 88
    %v3870 = vadd.s32 %v654, 96
    %v3871 = vadd.s32 %v654, 104
    %v3872 = vadd.s32 %v654, 112
    %v3873 = vadd.s32 %v654, 120
    %vm3874 = vcmp.lt.s32.totalorder %v3866, 0
    %v3875 = vsub.s32 0, %v3866
    %v3876 = vsel %vm3874, %v3875, %v3866
    %v3877 = vshrl.u32 %v3876, 3
    %v3878 = vand.u32 %v3876, 7
    %v3879 = vsub.s32 0, %v3878
    %v3880 = vsel %vm3874, %v3879, %v3878
    %vm3881 = vcmp.lt.s32.totalorder %v3867, 0
    %v3882 = vsub.s32 0, %v3867
    %v3883 = vsel %vm3881, %v3882, %v3867
    %v3884 = vshrl.u32 %v3883, 3
    %v3885 = vand.u32 %v3883, 7
    %v3886 = vsub.s32 0, %v3885
    %v3887 = vsel %vm3881, %v3886, %v3885
    %vm3888 = vcmp.lt.s32.totalorder %v3868, 0
    %v3889 = vsub.s32 0, %v3868
    %v3890 = vsel %vm3888, %v3889, %v3868
    %v3891 = vshrl.u32 %v3890, 3
    %v3892 = vand.u32 %v3890, 7
    %v3893 = vsub.s32 0, %v3892
    %v3894 = vsel %vm3888, %v3893, %v3892
    %vm3895 = vcmp.lt.s32.totalorder %v3869, 0
    %v3896 = vsub.s32 0, %v3869
    %v3897 = vsel %vm3895, %v3896, %v3869
    %v3898 = vshrl.u32 %v3897, 3
    %v3899 = vand.u32 %v3897, 7
    %v3900 = vsub.s32 0, %v3899
    %v3901 = vsel %vm3895, %v3900, %v3899
    %vm3902 = vcmp.lt.s32.totalorder %v3870, 0
    %v3903 = vsub.s32 0, %v3870
    %v3904 = vsel %vm3902, %v3903, %v3870
    %v3905 = vshrl.u32 %v3904, 3
    %v3906 = vand.u32 %v3904, 7
    %v3907 = vsub.s32 0, %v3906
    %v3908 = vsel %vm3902, %v3907, %v3906
    %vm3909 = vcmp.lt.s32.totalorder %v3871, 0
    %v3910 = vsub.s32 0, %v3871
    %v3911 = vsel %vm3909, %v3910, %v3871
    %v3912 = vshrl.u32 %v3911, 3
    %v3913 = vand.u32 %v3911, 7
    %v3914 = vsub.s32 0, %v3913
    %v3915 = vsel %vm3909, %v3914, %v3913
    %vm3916 = vcmp.lt.s32.totalorder %v3872, 0
    %v3917 = vsub.s32 0, %v3872
    %v3918 = vsel %vm3916, %v3917, %v3872
    %v3919 = vshrl.u32 %v3918, 3
    %v3920 = vand.u32 %v3918, 7
    %v3921 = vsub.s32 0, %v3920
    %v3922 = vsel %vm3916, %v3921, %v3920
    %vm3923 = vcmp.lt.s32.totalorder %v3873, 0
    %v3924 = vsub.s32 0, %v3873
    %v3925 = vsel %vm3923, %v3924, %v3873
    %v3926 = vshrl.u32 %v3925, 3
    %v3927 = vand.u32 %v3925, 7
    %v3928 = vsub.s32 0, %v3927
    %v3929 = vsel %vm3923, %v3928, %v3927
    %vm3930 = vcmp.ne.s32.totalorder %v3880, 0
    %vm3931 = vcmp.ne.s32.totalorder %v3887, 0
    %vm3932 = vcmp.ne.s32.totalorder %v3894, 0
    %vm3933 = vcmp.ne.s32.totalorder %v3901, 0
    %vm3934 = vcmp.ne.s32.totalorder %v3908, 0
    %vm3935 = vcmp.ne.s32.totalorder %v3915, 0
    %vm3936 = vcmp.ne.s32.totalorder %v3922, 0
    %vm3937 = vcmp.ne.s32.totalorder %v3929, 0
    %vm3938 = vcmp.lt.s32.totalorder %v3880, 0
    %vm3939 = vcmp.lt.s32.totalorder %v3887, 0
    %vm3940 = vcmp.lt.s32.totalorder %v3894, 0
    %vm3941 = vcmp.lt.s32.totalorder %v3901, 0
    %vm3942 = vcmp.lt.s32.totalorder %v3908, 0
    %vm3943 = vcmp.lt.s32.totalorder %v3915, 0
    %vm3944 = vcmp.lt.s32.totalorder %v3922, 0
    %vm3945 = vcmp.lt.s32.totalorder %v3929, 0
    %vm3946 = vmand %vm3938, %vm3930
    %vm3947 = vmand %vm3939, %vm3931
    %vm3948 = vmand %vm3940, %vm3932
    %vm3949 = vmand %vm3941, %vm3933
    %vm3950 = vmand %vm3942, %vm3934
    %vm3951 = vmand %vm3943, %vm3935
    %vm3952 = vmand %vm3944, %vm3936
    %vm3953 = vmand %vm3945, %vm3937
    %v3954 = vadd.s32 %v3880, 8
    %v3955 = vadd.s32 %v3887, 8
    %v3956 = vadd.s32 %v3894, 8
    %v3957 = vadd.s32 %v3901, 8
    %v3958 = vadd.s32 %v3908, 8
    %v3959 = vadd.s32 %v3915, 8
    %v3960 = vadd.s32 %v3922, 8
    %v3961 = vadd.s32 %v3929, 8
    %v3962 = vsel %vm3946, %v3954, %v3880
    %v3963 = vsel %vm3947, %v3955, %v3887
    %v3964 = vsel %vm3948, %v3956, %v3894
    %v3965 = vsel %vm3949, %v3957, %v3901
    %v3966 = vsel %vm3950, %v3958, %v3908
    %v3967 = vsel %vm3951, %v3959, %v3915
    %v3968 = vsel %vm3952, %v3960, %v3922
    %v3969 = vsel %vm3953, %v3961, %v3929
    %vm3970 = vcmp.lt.s32.totalorder %v3962, 2
    %vm3971 = vcmp.lt.s32.totalorder %v3963, 2
    %vm3972 = vcmp.lt.s32.totalorder %v3964, 2
    %vm3973 = vcmp.lt.s32.totalorder %v3965, 2
    %vm3974 = vcmp.lt.s32.totalorder %v3966, 2
    %vm3975 = vcmp.lt.s32.totalorder %v3967, 2
    %vm3976 = vcmp.lt.s32.totalorder %v3968, 2
    %vm3977 = vcmp.lt.s32.totalorder %v3969, 2
    %v3978 = vsel %vm3970, 1, 0
    %v3979 = vsel %vm3971, 1, 0
    %v3980 = vsel %vm3972, 1, 0
    %v3981 = vsel %vm3973, 1, 0
    %v3982 = vsel %vm3974, 1, 0
    %v3983 = vsel %vm3975, 1, 0
    %v3984 = vsel %vm3976, 1, 0
    %v3985 = vsel %vm3977, 1, 0
    %vm3986 = vcmp.eq.s32.totalorder %v3978, 1
    %vm3987 = vcmp.eq.s32.totalorder %v3979, 1
    %vm3988 = vcmp.eq.s32.totalorder %v3980, 1
    %vm3989 = vcmp.eq.s32.totalorder %v3981, 1
    %vm3990 = vcmp.eq.s32.totalorder %v3982, 1
    %vm3991 = vcmp.eq.s32.totalorder %v3983, 1
    %vm3992 = vcmp.eq.s32.totalorder %v3984, 1
    %vm3993 = vcmp.eq.s32.totalorder %v3985, 1
    %v3994 = vsel %vm714, %v3848, 0.0
    %v3995 = vsel %vm715, %v3849, 0.0
    %v3996 = vsel %vm716, %v3850, 0.0
    %v3997 = vsel %vm717, %v3851, 0.0
    %v3998 = vsel %vm3070, %v3852, 0.0
    %v3999 = vsel %vm3071, %v3853, 0.0
    %v4000 = vsel %vm3072, %v3854, 0.0
    %v4001 = vsel %vm3073, %v3855, 0.0
    %v4002 = vsel %vm3986, %v3856, 0.0
    %v4003 = vsel %vm3987, %v3857, 0.0
    %v4004 = vsel %vm3988, %v3858, 0.0
    %v4005 = vsel %vm3989, %v3859, 0.0
    %v4006 = vsel %vm3990, %v3860, 0.0
    %v4007 = vsel %vm3991, %v3861, 0.0
    %v4008 = vsel %vm3992, %v3862, 0.0
    %v4009 = vsel %vm3993, %v3863, 0.0
    %v4010 = vadd.f32 %v3994, %v3995
    %v4011 = vadd.f32 %v4010, %v3996
    %v4012 = vadd.f32 %v4011, %v3997
    %v4013 = vadd.f32 %v4012, %v3998
    %v4014 = vadd.f32 %v4013, %v3999
    %v4015 = vadd.f32 %v4014, %v4000
    %v4016 = vadd.f32 %v4015, %v4001
    %v4017 = vadd.f32 %v4016, %v4002
    %v4018 = vadd.f32 %v4017, %v4003
    %v4019 = vadd.f32 %v4018, %v4004
    %v4020 = vadd.f32 %v4019, %v4005
    %v4021 = vadd.f32 %v4020, %v4006
    %v4022 = vadd.f32 %v4021, %v4007
    %v4023 = vadd.f32 %v4022, %v4008
    %v4024 = vadd.f32 %v4023, %v4009
    %v4025 = vrot.slane %v4024, 4
    %v4026 = vadd.f32 %v4024, %v4025
    %v4027 = vrot.slane %v4026, 2
    %v4028 = vadd.f32 %v4026, %v4027
    %v4029 = vrot.slane %v4028, 1
    %v4030 = vadd.f32 %v4028, %v4029
    %v4031 = vmul.f32 %v3994, %v3848
    %v4032 = vmul.f32 %v3995, %v3849
    %v4033 = vmul.f32 %v3996, %v3850
    %v4034 = vmul.f32 %v3997, %v3851
    %v4035 = vmul.f32 %v3998, %v3852
    %v4036 = vmul.f32 %v3999, %v3853
    %v4037 = vmul.f32 %v4000, %v3854
    %v4038 = vmul.f32 %v4001, %v3855
    %v4039 = vmul.f32 %v4002, %v3856
    %v4040 = vmul.f32 %v4003, %v3857
    %v4041 = vmul.f32 %v4004, %v3858
    %v4042 = vmul.f32 %v4005, %v3859
    %v4043 = vmul.f32 %v4006, %v3860
    %v4044 = vmul.f32 %v4007, %v3861
    %v4045 = vmul.f32 %v4008, %v3862
    %v4046 = vmul.f32 %v4009, %v3863
    %v4047 = vadd.f32 %v4031, %v4032
    %v4048 = vadd.f32 %v4047, %v4033
    %v4049 = vadd.f32 %v4048, %v4034
    %v4050 = vadd.f32 %v4049, %v4035
    %v4051 = vadd.f32 %v4050, %v4036
    %v4052 = vadd.f32 %v4051, %v4037
    %v4053 = vadd.f32 %v4052, %v4038
    %v4054 = vadd.f32 %v4053, %v4039
    %v4055 = vadd.f32 %v4054, %v4040
    %v4056 = vadd.f32 %v4055, %v4041
    %v4057 = vadd.f32 %v4056, %v4042
    %v4058 = vadd.f32 %v4057, %v4043
    %v4059 = vadd.f32 %v4058, %v4044
    %v4060 = vadd.f32 %v4059, %v4045
    %v4061 = vadd.f32 %v4060, %v4046
    %v4062 = vrot.slane %v4061, 4
    %v4063 = vadd.f32 %v4061, %v4062
    %v4064 = vrot.slane %v4063, 2
    %v4065 = vadd.f32 %v4063, %v4064
    %v4066 = vrot.slane %v4065, 1
    %v4067 = vadd.f32 %v4065, %v4066
    %v4068 = vmul.f32 %v4030, 0.03125
    %v4069 = vmul.f32 %v4067, 0.03125
    %v4070 = vmul.f32 %v4068, %v4068
    %v4071 = vsub.f32 %v4069, %v4070
    %v4072 = vadd.f32 %v4071, 1e-05
    %v4073 = vrsqrt.pop %v4072
    %v4074 = vmul.f32 %v3864, %v4073
    %v4075 = vmul.f32 %v4068, %v4074
    %v4076 = vsub.f32 %v3865, %v4075
    %v4078 = vlaneseq
    %v4079 = vshrl.u32 %v4078, 7
    %v4080 = vsub.s32 0, %v4079
    %v4081 = vrot.slane %v4074, %v4080
    %v4083 = vmul.f32 %v3848, %v4081
    %v4084 = vmul.f32 %v3849, %v4081
    %v4085 = vmul.f32 %v3850, %v4081
    %v4086 = vmul.f32 %v3851, %v4081
    %v4087 = vmul.f32 %v3852, %v4081
    %v4088 = vmul.f32 %v3853, %v4081
    %v4089 = vmul.f32 %v3854, %v4081
    %v4090 = vmul.f32 %v3855, %v4081
    %v4091 = vmul.f32 %v3856, %v4081
    %v4092 = vmul.f32 %v3857, %v4081
    %v4093 = vmul.f32 %v3858, %v4081
    %v4094 = vmul.f32 %v3859, %v4081
    %v4095 = vmul.f32 %v3860, %v4081
    %v4096 = vmul.f32 %v3861, %v4081
    %v4097 = vmul.f32 %v3862, %v4081
    %v4098 = vmul.f32 %v3863, %v4081
    %v4100 = vlaneseq
    %v4101 = vshrl.u32 %v4100, 7
    %v4102 = vsub.s32 0, %v4101
    %v4103 = vrot.slane %v4076, %v4102
    %v4105 = vadd.f32 %v4083, %v4103
    %v4106 = vadd.f32 %v4084, %v4103
    %v4107 = vadd.f32 %v4085, %v4103
    %v4108 = vadd.f32 %v4086, %v4103
    %v4109 = vadd.f32 %v4087, %v4103
    %v4110 = vadd.f32 %v4088, %v4103
    %v4111 = vadd.f32 %v4089, %v4103
    %v4112 = vadd.f32 %v4090, %v4103
    %v4113 = vadd.f32 %v4091, %v4103
    %v4114 = vadd.f32 %v4092, %v4103
    %v4115 = vadd.f32 %v4093, %v4103
    %v4116 = vadd.f32 %v4094, %v4103
    %v4117 = vadd.f32 %v4095, %v4103
    %v4118 = vadd.f32 %v4096, %v4103
    %v4119 = vadd.f32 %v4097, %v4103
    %v4120 = vadd.f32 %v4098, %v4103
    %vm4121 = vcmp.ge.f32.partialorder %v4105, 0.0
    %vm4122 = vcmp.ge.f32.partialorder %v4106, 0.0
    %vm4123 = vcmp.ge.f32.partialorder %v4107, 0.0
    %vm4124 = vcmp.ge.f32.partialorder %v4108, 0.0
    %vm4125 = vcmp.ge.f32.partialorder %v4109, 0.0
    %vm4126 = vcmp.ge.f32.partialorder %v4110, 0.0
    %vm4127 = vcmp.ge.f32.partialorder %v4111, 0.0
    %vm4128 = vcmp.ge.f32.partialorder %v4112, 0.0
    %vm4129 = vcmp.ge.f32.partialorder %v4113, 0.0
    %vm4130 = vcmp.ge.f32.partialorder %v4114, 0.0
    %vm4131 = vcmp.ge.f32.partialorder %v4115, 0.0
    %vm4132 = vcmp.ge.f32.partialorder %v4116, 0.0
    %vm4133 = vcmp.ge.f32.partialorder %v4117, 0.0
    %vm4134 = vcmp.ge.f32.partialorder %v4118, 0.0
    %vm4135 = vcmp.ge.f32.partialorder %v4119, 0.0
    %vm4136 = vcmp.ge.f32.partialorder %v4120, 0.0
    %v4137 = vmul.f32 %v4105, 0.2
    %v4138 = vmul.f32 %v4106, 0.2
    %v4139 = vmul.f32 %v4107, 0.2
    %v4140 = vmul.f32 %v4108, 0.2
    %v4141 = vmul.f32 %v4109, 0.2
    %v4142 = vmul.f32 %v4110, 0.2
    %v4143 = vmul.f32 %v4111, 0.2
    %v4144 = vmul.f32 %v4112, 0.2
    %v4145 = vmul.f32 %v4113, 0.2
    %v4146 = vmul.f32 %v4114, 0.2
    %v4147 = vmul.f32 %v4115, 0.2
    %v4148 = vmul.f32 %v4116, 0.2
    %v4149 = vmul.f32 %v4117, 0.2
    %v4150 = vmul.f32 %v4118, 0.2
    %v4151 = vmul.f32 %v4119, 0.2
    %v4152 = vmul.f32 %v4120, 0.2
    %v4153 = vsel %vm4121, %v4105, %v4137
    %v4154 = vsel %vm4122, %v4106, %v4138
    %v4155 = vsel %vm4123, %v4107, %v4139
    %v4156 = vsel %vm4124, %v4108, %v4140
    %v4157 = vsel %vm4125, %v4109, %v4141
    %v4158 = vsel %vm4126, %v4110, %v4142
    %v4159 = vsel %vm4127, %v4111, %v4143
    %v4160 = vsel %vm4128, %v4112, %v4144
    %v4161 = vsel %vm4129, %v4113, %v4145
    %v4162 = vsel %vm4130, %v4114, %v4146
    %v4163 = vsel %vm4131, %v4115, %v4147
    %v4164 = vsel %vm4132, %v4116, %v4148
    %v4165 = vsel %vm4133, %v4117, %v4149
    %v4166 = vsel %vm4134, %v4118, %v4150
    %v4167 = vsel %vm4135, %v4119, %v4151
    %v4168 = vsel %vm4136, %v4120, %v4152
    %v4169 = vpack.c.bf16 %v4154, %v4153
    %v4170 = vpack.c.bf16 %v4156, %v4155
    %v4171 = vpack.c.bf16 %v4158, %v4157
    %v4172 = vpack.c.bf16 %v4160, %v4159
    %v4173 = vpack.c.bf16 %v4162, %v4161
    %v4174 = vpack.c.bf16 %v4164, %v4163
    %v4175 = vpack.c.bf16 %v4166, %v4165
    %v4176 = vpack.c.bf16 %v4168, %v4167
    %v4177 = vld [vmem:[#allocation10] sm:$0xff]
    %v4178 = vld [vmem:[#allocation10 + $0x8] sm:$0xff]
    %v4179 = vld [vmem:[#allocation10 + $0x10] sm:$0xff]
    %v4180 = vld [vmem:[#allocation10 + $0x18] sm:$0xff]
    %v4181 = vld [vmem:[#allocation10 + $0x20] sm:$0xff]
    %v4182 = vld [vmem:[#allocation10 + $0x28] sm:$0xff]
    %v4183 = vld [vmem:[#allocation10 + $0x30] sm:$0xff]
    %v4184 = vld [vmem:[#allocation10 + $0x38] sm:$0xff]
    %v4185 = vld [vmem:[#allocation10 + $0x40] sm:$0xff]
    %v4186 = vld [vmem:[#allocation10 + $0x48] sm:$0xff]
    %v4187 = vld [vmem:[#allocation10 + $0x50] sm:$0xff]
    %v4188 = vld [vmem:[#allocation10 + $0x58] sm:$0xff]
    %v4189 = vld [vmem:[#allocation10 + $0x60] sm:$0xff]
    %v4190 = vld [vmem:[#allocation10 + $0x68] sm:$0xff]
    %v4191 = vld [vmem:[#allocation10 + $0x70] sm:$0xff]
    %v4192 = vld [vmem:[#allocation10 + $0x78] sm:$0xff]
    %v4209 = vunpack.c.l.b16 %v4177
    %v4210 = vunpack.c.h.b16 %v4177
    %v4211 = vunpack.c.l.b16 %v4178
    %v4212 = vunpack.c.h.b16 %v4178
    %v4213 = vunpack.c.l.b16 %v4179
    %v4214 = vunpack.c.h.b16 %v4179
    %v4215 = vunpack.c.l.b16 %v4180
    %v4216 = vunpack.c.h.b16 %v4180
    %v4217 = vunpack.c.l.b16 %v4181
    %v4218 = vunpack.c.h.b16 %v4181
    %v4219 = vunpack.c.l.b16 %v4182
    %v4220 = vunpack.c.h.b16 %v4182
    %v4221 = vunpack.c.l.b16 %v4183
    %v4222 = vunpack.c.h.b16 %v4183
    %v4223 = vunpack.c.l.b16 %v4184
    %v4224 = vunpack.c.h.b16 %v4184
    %v4225 = vunpack.c.l.b16 %v4185
    %v4226 = vunpack.c.h.b16 %v4185
    %v4227 = vunpack.c.l.b16 %v4186
    %v4228 = vunpack.c.h.b16 %v4186
    %v4229 = vunpack.c.l.b16 %v4187
    %v4230 = vunpack.c.h.b16 %v4187
    %v4231 = vunpack.c.l.b16 %v4188
    %v4232 = vunpack.c.h.b16 %v4188
    %v4233 = vunpack.c.l.b16 %v4189
    %v4234 = vunpack.c.h.b16 %v4189
    %v4235 = vunpack.c.l.b16 %v4190
    %v4236 = vunpack.c.h.b16 %v4190
    %v4237 = vunpack.c.l.b16 %v4191
    %v4238 = vunpack.c.h.b16 %v4191
    %v4239 = vunpack.c.l.b16 %v4192
    %v4240 = vunpack.c.h.b16 %v4192
    %v4241 = vpack.c.b16 %v4211, %v4209
    %v4242 = vpack.c.b16 %v4212, %v4210
    %v4243 = vpack.c.b16 %v4215, %v4213
    %v4244 = vpack.c.b16 %v4216, %v4214
    %v4245 = vpack.c.b16 %v4219, %v4217
    %v4246 = vpack.c.b16 %v4220, %v4218
    %v4247 = vpack.c.b16 %v4223, %v4221
    %v4248 = vpack.c.b16 %v4224, %v4222
    %v4249 = vpack.c.b16 %v4227, %v4225
    %v4250 = vpack.c.b16 %v4228, %v4226
    %v4251 = vpack.c.b16 %v4231, %v4229
    %v4252 = vpack.c.b16 %v4232, %v4230
    %v4253 = vpack.c.b16 %v4235, %v4233
    %v4254 = vpack.c.b16 %v4236, %v4234
    %v4255 = vpack.c.b16 %v4239, %v4237
    %v4256 = vpack.c.b16 %v4240, %v4238
    %4273 = vmatprep.subr.bf16.mxu0 %v4242
    %4274 = vmatpush1.bf16.msra.mxu0 %v4241
    %4275 = vmatprep.subr.bf16.mxu0 %v4244
    %4276 = vmatpush1.bf16.msra.mxu0 %v4243
    %4277 = vmatprep.subr.bf16.mxu0 %v4246
    %4278 = vmatpush1.bf16.msra.mxu0 %v4245
    %4279 = vmatprep.subr.bf16.mxu0 %v4248
    %4280 = vmatpush1.bf16.msra.mxu0 %v4247
    %4281 = vmatprep.subr.bf16.mxu0 %v4250
    %4282 = vmatpush1.bf16.msra.mxu0 %v4249
    %4283 = vmatprep.subr.bf16.mxu0 %v4252
    %4284 = vmatpush1.bf16.msra.mxu0 %v4251
    %4285 = vmatprep.subr.bf16.mxu0 %v4254
    %4286 = vmatpush1.bf16.msra.mxu0 %v4253
    %4287 = vmatprep.subr.bf16.mxu0 %v4256
    %4288 = vmatpush1.bf16.msra.mxu0 %v4255
    %4289 = vmatprep.subr.bf16.mxu0 0
    %4290 = vmatpush1.bf16.msra.mxu0 0
    %4291 = vmatprep.subr.bf16.mxu0 0
    %4292 = vmatpush1.bf16.msra.mxu0 0
    %4293 = vmatprep.subr.bf16.mxu0 0
    %4294 = vmatpush1.bf16.msra.mxu0 0
    %4295 = vmatprep.subr.bf16.mxu0 0
    %4296 = vmatpush1.bf16.msra.mxu0 0
    %4297 = vmatprep.subr.bf16.mxu0 0
    %4298 = vmatpush1.bf16.msra.mxu0 0
    %4299 = vmatprep.subr.bf16.mxu0 0
    %4300 = vmatpush1.bf16.msra.mxu0 0
    %4301 = vmatprep.subr.bf16.mxu0 0
    %4302 = vmatpush1.bf16.msra.mxu0 0
    %4303 = vmatprep.subr.bf16.mxu0 0
    %4304 = vmatpush1.bf16.msra.mxu0 0
    %4305 = vmatprep.mubr.bf16.mxu0 0
    %4306 = vmatmul.mubr.bf16.gmra.mrb[0].mxu0 %v4169
    %v4307 = vpop.f32.mrb[0].mxu0
    %v4308 = vadd.f32 0.0, %v4307
    %v4309 = vpop.f32.mrb[0].mxu0
    %v4310 = vadd.f32 0.0, %v4309
    %v4311 = vpop.f32.mrb[0].mxu0
    %v4312 = vadd.f32 0.0, %v4311
    %v4313 = vpop.f32.mrb[0].mxu0
    %v4314 = vadd.f32 0.0, %v4313
    %4315 = vmatprep.mubr.bf16.mxu0 0
    %4316 = vmatmul.mubr.bf16.gmra.mrb[0].mxu0 %v4170
    %v4317 = vpop.f32.mrb[0].mxu0
    %v4318 = vadd.f32 0.0, %v4317
    %v4319 = vpop.f32.mrb[0].mxu0
    %v4320 = vadd.f32 0.0, %v4319
    %v4321 = vpop.f32.mrb[0].mxu0
    %v4322 = vadd.f32 0.0, %v4321
    %v4323 = vpop.f32.mrb[0].mxu0
    %v4324 = vadd.f32 0.0, %v4323
    %4325 = vmatprep.mubr.bf16.mxu0 0
    %4326 = vmatmul.mubr.bf16.gmra.mrb[0].mxu0 %v4171
    %v4327 = vpop.f32.mrb[0].mxu0
    %v4328 = vadd.f32 0.0, %v4327
    %v4329 = vpop.f32.mrb[0].mxu0
    %v4330 = vadd.f32 0.0, %v4329
    %v4331 = vpop.f32.mrb[0].mxu0
    %v4332 = vadd.f32 0.0, %v4331
    %v4333 = vpop.f32.mrb[0].mxu0
    %v4334 = vadd.f32 0.0, %v4333
    %4335 = vmatprep.mubr.bf16.mxu0 0
    %4336 = vmatmul.mubr.bf16.gmra.mrb[0].mxu0 %v4172
    %v4337 = vpop.f32.mrb[0].mxu0
    %v4338 = vadd.f32 0.0, %v4337
    %v4339 = vpop.f32.mrb[0].mxu0
    %v4340 = vadd.f32 0.0, %v4339
    %v4341 = vpop.f32.mrb[0].mxu0
    %v4342 = vadd.f32 0.0, %v4341
    %v4343 = vpop.f32.mrb[0].mxu0
    %v4344 = vadd.f32 0.0, %v4343
    %4345 = vmatprep.mubr.bf16.mxu0 0
    %4346 = vmatmul.mubr.bf16.gmra.mrb[0].mxu0 %v4173
    %v4347 = vpop.f32.mrb[0].mxu0
    %v4348 = vadd.f32 0.0, %v4347
    %v4349 = vpop.f32.mrb[0].mxu0
    %v4350 = vadd.f32 0.0, %v4349
    %v4351 = vpop.f32.mrb[0].mxu0
    %v4352 = vadd.f32 0.0, %v4351
    %v4353 = vpop.f32.mrb[0].mxu0
    %v4354 = vadd.f32 0.0, %v4353
    %4355 = vmatprep.mubr.bf16.mxu0 0
    %4356 = vmatmul.mubr.bf16.gmra.mrb[0].mxu0 %v4174
    %v4357 = vpop.f32.mrb[0].mxu0
    %v4358 = vadd.f32 0.0, %v4357
    %v4359 = vpop.f32.mrb[0].mxu0
    %v4360 = vadd.f32 0.0, %v4359
    %v4361 = vpop.f32.mrb[0].mxu0
    %v4362 = vadd.f32 0.0, %v4361
    %v4363 = vpop.f32.mrb[0].mxu0
    %v4364 = vadd.f32 0.0, %v4363
    %4365 = vmatprep.mubr.bf16.mxu0 0
    %4366 = vmatmul.mubr.bf16.gmra.mrb[0].mxu0 %v4175
    %v4367 = vpop.f32.mrb[0].mxu0
    %v4368 = vadd.f32 0.0, %v4367
    %v4369 = vpop.f32.mrb[0].mxu0
    %v4370 = vadd.f32 0.0, %v4369
    %v4371 = vpop.f32.mrb[0].mxu0
    %v4372 = vadd.f32 0.0, %v4371
    %v4373 = vpop.f32.mrb[0].mxu0
    %v4374 = vadd.f32 0.0, %v4373
    %4375 = vmatprep.mubr.bf16.mxu0 0
    %4376 = vmatmul.mubr.bf16.gmra.mrb[0].mxu0 %v4176
    %v4377 = vpop.f32.mrb[0].mxu0
    %v4378 = vadd.f32 0.0, %v4377
    %v4379 = vpop.f32.mrb[0].mxu0
    %v4380 = vadd.f32 0.0, %v4379
    %v4381 = vpop.f32.mrb[0].mxu0
    %v4382 = vadd.f32 0.0, %v4381
    %v4383 = vpop.f32.mrb[0].mxu0
    %v4384 = vadd.f32 0.0, %v4383
    %4385 = vdwg.mxu0
    %v4386 = vlaneseq
    %v4387 = vand.u32 %v4386, 127
    %vm4388 = vcmp.lt.s32.totalorder %v4387, 64
    %v4389 = vsel %vm4388, 0.0, %v4330
    %v4390 = vsel %vm4388, %v4370, %v4334
    %v4391 = vsel %vm4388, %v4374, %v4340
    %v4392 = vsel %vm4388, %v4380, %v4344
    %v4393 = vadd.f32 %v4308, %v4389
    %v4394 = vadd.f32 %v4312, %v4390
    %v4395 = vadd.f32 %v4318, %v4391
    %v4396 = vadd.f32 %v4322, %v4392
    %v4397 = vsel %vm4388, %v4310, %v4350
    %v4398 = vsel %vm4388, %v4314, %v4354
    %v4399 = vsel %vm4388, %v4320, %v4360
    %v4400 = vsel %vm4388, %v4324, %v4364
    %v4401 = vadd.f32 %v4328, %v4397
    %v4402 = vadd.f32 %v4332, %v4398
    %v4403 = vadd.f32 %v4338, %v4399
    %v4404 = vadd.f32 %v4342, %v4400
    %v4405 = vsel %vm4388, %v4330, %v4370
    %v4406 = vsel %vm4388, %v4334, %v4374
    %v4407 = vsel %vm4388, %v4340, %v4380
    %v4408 = vsel %vm4388, %v4344, %v4384
    %v4409 = vadd.f32 %v4348, %v4405
    %v4410 = vadd.f32 %v4352, %v4406
    %v4411 = vadd.f32 %v4358, %v4407
    %v4412 = vadd.f32 %v4362, %v4408
    %v4413 = vsel %vm4388, %v4350, %v4314
    %v4414 = vsel %vm4388, %v4354, %v4320
    %v4415 = vsel %vm4388, %v4360, %v4324
    %v4416 = vsel %vm4388, %v4364, 0.0
    %v4417 = vadd.f32 %v4368, %v4413
    %v4418 = vadd.f32 %v4372, %v4414
    %v4419 = vadd.f32 %v4378, %v4415
    %v4420 = vadd.f32 %v4382, %v4416
    %v4421 = vld [vmem:[#allocation22] sm:$0x1]
    %v4422 = vld [vmem:[#allocation23] sm:$0x1]
    %v4423 = vsel %vm714, %v4393, 0.0
    %v4424 = vsel %vm714, %v4401, 0.0
    %v4425 = vsel %vm714, %v4409, 0.0
    %v4426 = vsel %vm714, %v4417, 0.0
    %v4427 = vsel %vm715, %v4394, 0.0
    %v4428 = vsel %vm715, %v4402, 0.0
    %v4429 = vsel %vm715, %v4410, 0.0
    %v4430 = vsel %vm715, %v4418, 0.0
    %v4431 = vsel %vm716, %v4395, 0.0
    %v4432 = vsel %vm716, %v4403, 0.0
    %v4433 = vsel %vm716, %v4411, 0.0
    %v4434 = vsel %vm716, %v4419, 0.0
    %v4435 = vsel %vm717, %v4396, 0.0
    %v4436 = vsel %vm717, %v4404, 0.0
    %v4437 = vsel %vm717, %v4412, 0.0
    %v4438 = vsel %vm717, %v4420, 0.0
    %v4439 = vadd.f32 %v4423, %v4427
    %v4440 = vadd.f32 %v4439, %v4431
    %v4441 = vadd.f32 %v4440, %v4435
    %v4442 = vrot.slane %v4441, 4
    %v4443 = vadd.f32 %v4441, %v4442
    %v4444 = vrot.slane %v4443, 2
    %v4445 = vadd.f32 %v4443, %v4444
    %v4446 = vrot.slane %v4445, 1
    %v4447 = vadd.f32 %v4445, %v4446
    %v4448 = vadd.f32 %v4424, %v4428
    %v4449 = vadd.f32 %v4448, %v4432
    %v4450 = vadd.f32 %v4449, %v4436
    %v4451 = vrot.slane %v4450, 4
    %v4452 = vadd.f32 %v4450, %v4451
    %v4453 = vrot.slane %v4452, 2
    %v4454 = vadd.f32 %v4452, %v4453
    %v4455 = vrot.slane %v4454, 1
    %v4456 = vadd.f32 %v4454, %v4455
    %v4457 = vadd.f32 %v4425, %v4429
    %v4458 = vadd.f32 %v4457, %v4433
    %v4459 = vadd.f32 %v4458, %v4437
    %v4460 = vrot.slane %v4459, 4
    %v4461 = vadd.f32 %v4459, %v4460
    %v4462 = vrot.slane %v4461, 2
    %v4463 = vadd.f32 %v4461, %v4462
    %v4464 = vrot.slane %v4463, 1
    %v4465 = vadd.f32 %v4463, %v4464
    %v4466 = vadd.f32 %v4426, %v4430
    %v4467 = vadd.f32 %v4466, %v4434
    %v4468 = vadd.f32 %v4467, %v4438
    %v4469 = vrot.slane %v4468, 4
    %v4470 = vadd.f32 %v4468, %v4469
    %v4471 = vrot.slane %v4470, 2
    %v4472 = vadd.f32 %v4470, %v4471
    %v4473 = vrot.slane %v4472, 1
    %v4474 = vadd.f32 %v4472, %v4473
    %v4475 = vmul.f32 %v4423, %v4393
    %v4476 = vmul.f32 %v4424, %v4401
    %v4477 = vmul.f32 %v4425, %v4409
    %v4478 = vmul.f32 %v4426, %v4417
    %v4479 = vmul.f32 %v4427, %v4394
    %v4480 = vmul.f32 %v4428, %v4402
    %v4481 = vmul.f32 %v4429, %v4410
    %v4482 = vmul.f32 %v4430, %v4418
    %v4483 = vmul.f32 %v4431, %v4395
    %v4484 = vmul.f32 %v4432, %v4403
    %v4485 = vmul.f32 %v4433, %v4411
    %v4486 = vmul.f32 %v4434, %v4419
    %v4487 = vmul.f32 %v4435, %v4396
    %v4488 = vmul.f32 %v4436, %v4404
    %v4489 = vmul.f32 %v4437, %v4412
    %v4490 = vmul.f32 %v4438, %v4420
    %v4491 = vadd.f32 %v4475, %v4479
    %v4492 = vadd.f32 %v4491, %v4483
    %v4493 = vadd.f32 %v4492, %v4487
    %v4494 = vrot.slane %v4493, 4
    %v4495 = vadd.f32 %v4493, %v4494
    %v4496 = vrot.slane %v4495, 2
    %v4497 = vadd.f32 %v4495, %v4496
    %v4498 = vrot.slane %v4497, 1
    %v4499 = vadd.f32 %v4497, %v4498
    %v4500 = vadd.f32 %v4476, %v4480
    %v4501 = vadd.f32 %v4500, %v4484
    %v4502 = vadd.f32 %v4501, %v4488
    %v4503 = vrot.slane %v4502, 4
    %v4504 = vadd.f32 %v4502, %v4503
    %v4505 = vrot.slane %v4504, 2
    %v4506 = vadd.f32 %v4504, %v4505
    %v4507 = vrot.slane %v4506, 1
    %v4508 = vadd.f32 %v4506, %v4507
    %v4509 = vadd.f32 %v4477, %v4481
    %v4510 = vadd.f32 %v4509, %v4485
    %v4511 = vadd.f32 %v4510, %v4489
    %v4512 = vrot.slane %v4511, 4
    %v4513 = vadd.f32 %v4511, %v4512
    %v4514 = vrot.slane %v4513, 2
    %v4515 = vadd.f32 %v4513, %v4514
    %v4516 = vrot.slane %v4515, 1
    %v4517 = vadd.f32 %v4515, %v4516
    %v4518 = vadd.f32 %v4478, %v4482
    %v4519 = vadd.f32 %v4518, %v4486
    %v4520 = vadd.f32 %v4519, %v4490
    %v4521 = vrot.slane %v4520, 4
    %v4522 = vadd.f32 %v4520, %v4521
    %v4523 = vrot.slane %v4522, 2
    %v4524 = vadd.f32 %v4522, %v4523
    %v4525 = vrot.slane %v4524, 1
    %v4526 = vadd.f32 %v4524, %v4525
    %v4527 = vadd.f32 %v4447, %v4465
    %v4528 = vadd.f32 %v4456, %v4474
    %v4529 = vadd.f32 %v4499, %v4517
    %v4530 = vadd.f32 %v4508, %v4526
    %v4531 = vadd.f32 %v4527, %v4528
    %v4532 = vadd.f32 %v4529, %v4530
    %4534 = vrot.lane.b32.xlu0 %v4531, 64
    %v4535 = vpop.permute.xlu0 %4534
    %v4537 = vadd.f32 %v4531, %v4535
    %4539 = vrot.lane.b32.xlu0 %v4532, 64
    %v4540 = vpop.permute.xlu0 %4539
    %v4542 = vadd.f32 %v4532, %v4540
    %v4543 = vmul.f32 %v4537, 0.015625
    %v4544 = vmul.f32 %v4542, 0.015625
    %v4545 = vmul.f32 %v4543, %v4543
    %v4546 = vsub.f32 %v4544, %v4545
    %v4547 = vadd.f32 %v4546, 1e-05
    %v4548 = vrsqrt.pop %v4547
    %v4549 = vmul.f32 %v4421, %v4548
    %v4550 = vmul.f32 %v4543, %v4549
    %v4551 = vsub.f32 %v4422, %v4550
    %v4553 = vlaneseq
    %v4554 = vshrl.u32 %v4553, 7
    %v4555 = vsub.s32 0, %v4554
    %v4556 = vrot.slane %v4549, %v4555
    %4557 = vrot.lane.b32.xlu0 %v4556, 64
    %v4558 = vpop.permute.xlu0 %4557
    %vm4560 = vcmask 523264
    %v4561 = vsel %vm4560, %v4549, %v4558
    %v4563 = vlaneseq
    %v4564 = vshrl.u32 %v4563, 7
    %v4565 = vsub.s32 0, %v4564
    %v4566 = vrot.slane %v4551, %v4565
    %4567 = vrot.lane.b32.xlu0 %v4566, 64
    %v4568 = vpop.permute.xlu0 %4567
    %v4570 = vsel %vm4560, %v4551, %v4568
    %v4571 = vlaneseq
    %v4572 = vshrl.u32 %v4571, 7
    %v4573 = vsub.s32 0, %v4572
    %v4574 = vrot.slane %v4561, %v4573
    %v4575 = vmul.f32 %v4393, %v4574
    %v4576 = vmul.f32 %v4401, %v4574
    %v4577 = vmul.f32 %v4409, %v4574
    %v4578 = vmul.f32 %v4417, %v4574
    %v4579 = vmul.f32 %v4394, %v4574
    %v4580 = vmul.f32 %v4402, %v4574
    %v4581 = vmul.f32 %v4410, %v4574
    %v4582 = vmul.f32 %v4418, %v4574
    %v4583 = vmul.f32 %v4395, %v4574
    %v4584 = vmul.f32 %v4403, %v4574
    %v4585 = vmul.f32 %v4411, %v4574
    %v4586 = vmul.f32 %v4419, %v4574
    %v4587 = vmul.f32 %v4396, %v4574
    %v4588 = vmul.f32 %v4404, %v4574
    %v4589 = vmul.f32 %v4412, %v4574
    %v4590 = vmul.f32 %v4420, %v4574
    %v4591 = vlaneseq
    %v4592 = vshrl.u32 %v4591, 7
    %v4593 = vsub.s32 0, %v4592
    %v4594 = vrot.slane %v4570, %v4593
    %v4595 = vadd.f32 %v4575, %v4594
    %v4596 = vadd.f32 %v4576, %v4594
    %v4597 = vadd.f32 %v4577, %v4594
    %v4598 = vadd.f32 %v4578, %v4594
    %v4599 = vadd.f32 %v4579, %v4594
    %v4600 = vadd.f32 %v4580, %v4594
    %v4601 = vadd.f32 %v4581, %v4594
    %v4602 = vadd.f32 %v4582, %v4594
    %v4603 = vadd.f32 %v4583, %v4594
    %v4604 = vadd.f32 %v4584, %v4594
    %v4605 = vadd.f32 %v4585, %v4594
    %v4606 = vadd.f32 %v4586, %v4594
    %v4607 = vadd.f32 %v4587, %v4594
    %v4608 = vadd.f32 %v4588, %v4594
    %v4609 = vadd.f32 %v4589, %v4594
    %v4610 = vadd.f32 %v4590, %v4594
    %vm4611 = vcmp.ge.f32.partialorder %v4595, 0.0
    %vm4612 = vcmp.ge.f32.partialorder %v4596, 0.0
    %vm4613 = vcmp.ge.f32.partialorder %v4597, 0.0
    %vm4614 = vcmp.ge.f32.partialorder %v4598, 0.0
    %vm4615 = vcmp.ge.f32.partialorder %v4599, 0.0
    %vm4616 = vcmp.ge.f32.partialorder %v4600, 0.0
    %vm4617 = vcmp.ge.f32.partialorder %v4601, 0.0
    %vm4618 = vcmp.ge.f32.partialorder %v4602, 0.0
    %vm4619 = vcmp.ge.f32.partialorder %v4603, 0.0
    %vm4620 = vcmp.ge.f32.partialorder %v4604, 0.0
    %vm4621 = vcmp.ge.f32.partialorder %v4605, 0.0
    %vm4622 = vcmp.ge.f32.partialorder %v4606, 0.0
    %vm4623 = vcmp.ge.f32.partialorder %v4607, 0.0
    %vm4624 = vcmp.ge.f32.partialorder %v4608, 0.0
    %vm4625 = vcmp.ge.f32.partialorder %v4609, 0.0
    %vm4626 = vcmp.ge.f32.partialorder %v4610, 0.0
    %v4627 = vmul.f32 %v4595, 0.2
    %v4628 = vmul.f32 %v4596, 0.2
    %v4629 = vmul.f32 %v4597, 0.2
    %v4630 = vmul.f32 %v4598, 0.2
    %v4631 = vmul.f32 %v4599, 0.2
    %v4632 = vmul.f32 %v4600, 0.2
    %v4633 = vmul.f32 %v4601, 0.2
    %v4634 = vmul.f32 %v4602, 0.2
    %v4635 = vmul.f32 %v4603, 0.2
    %v4636 = vmul.f32 %v4604, 0.2
    %v4637 = vmul.f32 %v4605, 0.2
    %v4638 = vmul.f32 %v4606, 0.2
    %v4639 = vmul.f32 %v4607, 0.2
    %v4640 = vmul.f32 %v4608, 0.2
    %v4641 = vmul.f32 %v4609, 0.2
    %v4642 = vmul.f32 %v4610, 0.2
    %v4643 = vsel %vm4611, %v4595, %v4627
    %v4644 = vsel %vm4612, %v4596, %v4628
    %v4645 = vsel %vm4613, %v4597, %v4629
    %v4646 = vsel %vm4614, %v4598, %v4630
    %v4647 = vsel %vm4615, %v4599, %v4631
    %v4648 = vsel %vm4616, %v4600, %v4632
    %v4649 = vsel %vm4617, %v4601, %v4633
    %v4650 = vsel %vm4618, %v4602, %v4634
    %v4651 = vsel %vm4619, %v4603, %v4635
    %v4652 = vsel %vm4620, %v4604, %v4636
    %v4653 = vsel %vm4621, %v4605, %v4637
    %v4654 = vsel %vm4622, %v4606, %v4638
    %v4655 = vsel %vm4623, %v4607, %v4639
    %v4656 = vsel %vm4624, %v4608, %v4640
    %v4657 = vsel %vm4625, %v4609, %v4641
    %v4658 = vsel %vm4626, %v4610, %v4642
    %v4659 = vpack.c.bf16 %v4647, %v4643
    %v4660 = vpack.c.bf16 %v4648, %v4644
    %v4661 = vpack.c.bf16 %v4649, %v4645
    %v4662 = vpack.c.bf16 %v4650, %v4646
    %v4663 = vpack.c.bf16 %v4655, %v4651
    %v4664 = vpack.c.bf16 %v4656, %v4652
    %v4665 = vpack.c.bf16 %v4657, %v4653
    %v4666 = vpack.c.bf16 %v4658, %v4654
    %v4667 = vld [vmem:[#allocation11] sm:$0xf]
    %v4668 = vld [vmem:[#allocation11 + $0x4] sm:$0xf]
    %v4669 = vld [vmem:[#allocation11 + $0x8] sm:$0xf]
    %v4670 = vld [vmem:[#allocation11 + $0xc] sm:$0xf]
    %v4671 = vld [vmem:[#allocation11 + $0x10] sm:$0xf]
    %v4672 = vld [vmem:[#allocation11 + $0x14] sm:$0xf]
    %v4673 = vld [vmem:[#allocation11 + $0x18] sm:$0xf]
    %v4674 = vld [vmem:[#allocation11 + $0x1c] sm:$0xf]
    %v4675 = vld [vmem:[#allocation11 + $0x20] sm:$0xf]
    %v4676 = vld [vmem:[#allocation11 + $0x24] sm:$0xf]
    %v4677 = vld [vmem:[#allocation11 + $0x28] sm:$0xf]
    %v4678 = vld [vmem:[#allocation11 + $0x2c] sm:$0xf]
    %v4679 = vld [vmem:[#allocation11 + $0x30] sm:$0xf]
    %v4680 = vld [vmem:[#allocation11 + $0x34] sm:$0xf]
    %v4681 = vld [vmem:[#allocation11 + $0x38] sm:$0xf]
    %v4682 = vld [vmem:[#allocation11 + $0x3c] sm:$0xf]
    %v4683 = vld [vmem:[#allocation11 + $0x40] sm:$0xf]
    %v4684 = vld [vmem:[#allocation11 + $0x44] sm:$0xf]
    %v4685 = vld [vmem:[#allocation11 + $0x48] sm:$0xf]
    %v4686 = vld [vmem:[#allocation11 + $0x4c] sm:$0xf]
    %v4687 = vld [vmem:[#allocation11 + $0x50] sm:$0xf]
    %v4688 = vld [vmem:[#allocation11 + $0x54] sm:$0xf]
    %v4689 = vld [vmem:[#allocation11 + $0x58] sm:$0xf]
    %v4690 = vld [vmem:[#allocation11 + $0x5c] sm:$0xf]
    %v4691 = vld [vmem:[#allocation11 + $0x60] sm:$0xf]
    %v4692 = vld [vmem:[#allocation11 + $0x64] sm:$0xf]
    %v4693 = vld [vmem:[#allocation11 + $0x68] sm:$0xf]
    %v4694 = vld [vmem:[#allocation11 + $0x6c] sm:$0xf]
    %v4695 = vld [vmem:[#allocation11 + $0x70] sm:$0xf]
    %v4696 = vld [vmem:[#allocation11 + $0x74] sm:$0xf]
    %v4697 = vld [vmem:[#allocation11 + $0x78] sm:$0xf]
    %v4698 = vld [vmem:[#allocation11 + $0x7c] sm:$0xf]
    %v4699 = vld [vmem:[#allocation11 + $0x80] sm:$0xf]
    %v4700 = vld [vmem:[#allocation11 + $0x84] sm:$0xf]
    %v4701 = vld [vmem:[#allocation11 + $0x88] sm:$0xf]
    %v4702 = vld [vmem:[#allocation11 + $0x8c] sm:$0xf]
    %v4703 = vld [vmem:[#allocation11 + $0x90] sm:$0xf]
    %v4704 = vld [vmem:[#allocation11 + $0x94] sm:$0xf]
    %v4705 = vld [vmem:[#allocation11 + $0x98] sm:$0xf]
    %v4706 = vld [vmem:[#allocation11 + $0x9c] sm:$0xf]
    %v4707 = vld [vmem:[#allocation11 + $0xa0] sm:$0xf]
    %v4708 = vld [vmem:[#allocation11 + $0xa4] sm:$0xf]
    %v4709 = vld [vmem:[#allocation11 + $0xa8] sm:$0xf]
    %v4710 = vld [vmem:[#allocation11 + $0xac] sm:$0xf]
    %v4711 = vld [vmem:[#allocation11 + $0xb0] sm:$0xf]
    %v4712 = vld [vmem:[#allocation11 + $0xb4] sm:$0xf]
    %v4713 = vld [vmem:[#allocation11 + $0xb8] sm:$0xf]
    %v4714 = vld [vmem:[#allocation11 + $0xbc] sm:$0xf]
    %v4715 = vld [vmem:[#allocation11 + $0xc0] sm:$0xf]
    %v4716 = vld [vmem:[#allocation11 + $0xc4] sm:$0xf]
    %v4717 = vld [vmem:[#allocation11 + $0xc8] sm:$0xf]
    %v4718 = vld [vmem:[#allocation11 + $0xcc] sm:$0xf]
    %v4719 = vld [vmem:[#allocation11 + $0xd0] sm:$0xf]
    %v4720 = vld [vmem:[#allocation11 + $0xd4] sm:$0xf]
    %v4721 = vld [vmem:[#allocation11 + $0xd8] sm:$0xf]
    %v4722 = vld [vmem:[#allocation11 + $0xdc] sm:$0xf]
    %v4723 = vld [vmem:[#allocation11 + $0xe0] sm:$0xf]
    %v4724 = vld [vmem:[#allocation11 + $0xe4] sm:$0xf]
    %v4725 = vld [vmem:[#allocation11 + $0xe8] sm:$0xf]
    %v4726 = vld [vmem:[#allocation11 + $0xec] sm:$0xf]
    %v4727 = vld [vmem:[#allocation11 + $0xf0] sm:$0xf]
    %v4728 = vld [vmem:[#allocation11 + $0xf4] sm:$0xf]
    %v4729 = vld [vmem:[#allocation11 + $0xf8] sm:$0xf]
    %v4730 = vld [vmem:[#allocation11 + $0xfc] sm:$0xf]
    %v4795 = vunpack.c.l.b16 %v4667
    %v4796 = vunpack.c.l.b16 %v4668
    %v4797 = vunpack.c.l.b16 %v4669
    %v4798 = vunpack.c.l.b16 %v4670
    %v4799 = vunpack.c.l.b16 %v4671
    %v4800 = vunpack.c.l.b16 %v4672
    %v4801 = vunpack.c.l.b16 %v4673
    %v4802 = vunpack.c.l.b16 %v4674
    %v4803 = vunpack.c.l.b16 %v4675
    %v4804 = vunpack.c.l.b16 %v4676
    %v4805 = vunpack.c.l.b16 %v4677
    %v4806 = vunpack.c.l.b16 %v4678
    %v4807 = vunpack.c.l.b16 %v4679
    %v4808 = vunpack.c.l.b16 %v4680
    %v4809 = vunpack.c.l.b16 %v4681
    %v4810 = vunpack.c.l.b16 %v4682
    %v4811 = vunpack.c.l.b16 %v4683
    %v4812 = vunpack.c.l.b16 %v4684
    %v4813 = vunpack.c.l.b16 %v4685
    %v4814 = vunpack.c.l.b16 %v4686
    %v4815 = vunpack.c.l.b16 %v4687
    %v4816 = vunpack.c.l.b16 %v4688
    %v4817 = vunpack.c.l.b16 %v4689
    %v4818 = vunpack.c.l.b16 %v4690
    %v4819 = vunpack.c.l.b16 %v4691
    %v4820 = vunpack.c.l.b16 %v4692
    %v4821 = vunpack.c.l.b16 %v4693
    %v4822 = vunpack.c.l.b16 %v4694
    %v4823 = vunpack.c.l.b16 %v4695
    %v4824 = vunpack.c.l.b16 %v4696
    %v4825 = vunpack.c.l.b16 %v4697
    %v4826 = vunpack.c.l.b16 %v4698
    %v4827 = vunpack.c.l.b16 %v4699
    %v4828 = vunpack.c.l.b16 %v4700
    %v4829 = vunpack.c.l.b16 %v4701
    %v4830 = vunpack.c.l.b16 %v4702
    %v4831 = vunpack.c.l.b16 %v4703
    %v4832 = vunpack.c.l.b16 %v4704
    %v4833 = vunpack.c.l.b16 %v4705
    %v4834 = vunpack.c.l.b16 %v4706
    %v4835 = vunpack.c.l.b16 %v4707
    %v4836 = vunpack.c.l.b16 %v4708
    %v4837 = vunpack.c.l.b16 %v4709
    %v4838 = vunpack.c.l.b16 %v4710
    %v4839 = vunpack.c.l.b16 %v4711
    %v4840 = vunpack.c.l.b16 %v4712
    %v4841 = vunpack.c.l.b16 %v4713
    %v4842 = vunpack.c.l.b16 %v4714
    %v4843 = vunpack.c.l.b16 %v4715
    %v4844 = vunpack.c.l.b16 %v4716
    %v4845 = vunpack.c.l.b16 %v4717
    %v4846 = vunpack.c.l.b16 %v4718
    %v4847 = vunpack.c.l.b16 %v4719
    %v4848 = vunpack.c.l.b16 %v4720
    %v4849 = vunpack.c.l.b16 %v4721
    %v4850 = vunpack.c.l.b16 %v4722
    %v4851 = vunpack.c.l.b16 %v4723
    %v4852 = vunpack.c.l.b16 %v4724
    %v4853 = vunpack.c.l.b16 %v4725
    %v4854 = vunpack.c.l.b16 %v4726
    %v4855 = vunpack.c.l.b16 %v4727
    %v4856 = vunpack.c.l.b16 %v4728
    %v4857 = vunpack.c.l.b16 %v4729
    %v4858 = vunpack.c.l.b16 %v4730
    %v4859 = vpack.c.b16 %v4796, %v4795
    %v4860 = vpack.c.b16 %v4798, %v4797
    %v4861 = vpack.c.b16 %v4800, %v4799
    %v4862 = vpack.c.b16 %v4802, %v4801
    %v4863 = vpack.c.b16 %v4804, %v4803
    %v4864 = vpack.c.b16 %v4806, %v4805
    %v4865 = vpack.c.b16 %v4808, %v4807
    %v4866 = vpack.c.b16 %v4810, %v4809
    %v4867 = vpack.c.b16 %v4812, %v4811
    %v4868 = vpack.c.b16 %v4814, %v4813
    %v4869 = vpack.c.b16 %v4816, %v4815
    %v4870 = vpack.c.b16 %v4818, %v4817
    %v4871 = vpack.c.b16 %v4820, %v4819
    %v4872 = vpack.c.b16 %v4822, %v4821
    %v4873 = vpack.c.b16 %v4824, %v4823
    %v4874 = vpack.c.b16 %v4826, %v4825
    %v4875 = vpack.c.b16 %v4828, %v4827
    %v4876 = vpack.c.b16 %v4830, %v4829
    %v4877 = vpack.c.b16 %v4832, %v4831
    %v4878 = vpack.c.b16 %v4834, %v4833
    %v4879 = vpack.c.b16 %v4836, %v4835
    %v4880 = vpack.c.b16 %v4838, %v4837
    %v4881 = vpack.c.b16 %v4840, %v4839
    %v4882 = vpack.c.b16 %v4842, %v4841
    %v4883 = vpack.c.b16 %v4844, %v4843
    %v4884 = vpack.c.b16 %v4846, %v4845
    %v4885 = vpack.c.b16 %v4848, %v4847
    %v4886 = vpack.c.b16 %v4850, %v4849
    %v4887 = vpack.c.b16 %v4852, %v4851
    %v4888 = vpack.c.b16 %v4854, %v4853
    %v4889 = vpack.c.b16 %v4856, %v4855
    %v4890 = vpack.c.b16 %v4858, %v4857
    %4923 = vmatprep.subr.bf16.mxu0 0
    %4924 = vmatpush1.bf16.msra.mxu0 %v4859
    %4925 = vmatprep.subr.bf16.mxu0 0
    %4926 = vmatpush1.bf16.msra.mxu0 %v4860
    %4927 = vmatprep.subr.bf16.mxu0 0
    %4928 = vmatpush1.bf16.msra.mxu0 %v4861
    %4929 = vmatprep.subr.bf16.mxu0 0
    %4930 = vmatpush1.bf16.msra.mxu0 %v4862
    %4931 = vmatprep.subr.bf16.mxu0 0
    %4932 = vmatpush1.bf16.msra.mxu0 %v4863
    %4933 = vmatprep.subr.bf16.mxu0 0
    %4934 = vmatpush1.bf16.msra.mxu0 %v4864
    %4935 = vmatprep.subr.bf16.mxu0 0
    %4936 = vmatpush1.bf16.msra.mxu0 %v4865
    %4937 = vmatprep.subr.bf16.mxu0 0
    %4938 = vmatpush1.bf16.msra.mxu0 %v4866
    %4939 = vmatprep.subr.bf16.mxu0 0
    %4940 = vmatpush1.bf16.msra.mxu0 %v4867
    %4941 = vmatprep.subr.bf16.mxu0 0
    %4942 = vmatpush1.bf16.msra.mxu0 %v4868
    %4943 = vmatprep.subr.bf16.mxu0 0
    %4944 = vmatpush1.bf16.msra.mxu0 %v4869
    %4945 = vmatprep.subr.bf16.mxu0 0
    %4946 = vmatpush1.bf16.msra.mxu0 %v4870
    %4947 = vmatprep.subr.bf16.mxu0 0
    %4948 = vmatpush1.bf16.msra.mxu0 %v4871
    %4949 = vmatprep.subr.bf16.mxu0 0
    %4950 = vmatpush1.bf16.msra.mxu0 %v4872
    %4951 = vmatprep.subr.bf16.mxu0 0
    %4952 = vmatpush1.bf16.msra.mxu0 %v4873
    %4953 = vmatprep.subr.bf16.mxu0 0
    %4954 = vmatpush1.bf16.msra.mxu0 %v4874
    %4955 = vmatprep.mubr.bf16.mxu0 %v4660
    %4956 = vmatmul.mubr.bf16.gmra.mrb[0].mxu0 %v4659
    %v4957 = vpop.f32.mrb[0].mxu0
    %v4958 = vadd.f32 0.0, %v4957
    %v4959 = vpop.f32.mrb[0].mxu0
    %v4960 = vpop.f32.mrb[0].mxu0
    %v4961 = vadd.f32 0.0, %v4960
    %v4962 = vpop.f32.mrb[0].mxu0
    %4963 = vmatprep.mubr.bf16.mxu0 %v4664
    %4964 = vmatmul.mubr.bf16.gmra.mrb[0].mxu0 %v4663
    %v4965 = vpop.f32.mrb[0].mxu0
    %v4966 = vadd.f32 0.0, %v4965
    %v4967 = vpop.f32.mrb[0].mxu0
    %v4968 = vpop.f32.mrb[0].mxu0
    %v4969 = vadd.f32 0.0, %v4968
    %v4970 = vpop.f32.mrb[0].mxu0
    %4971 = vdwg.mxu0
    %4972 = vmatprep.subr.bf16.mxu0 0
    %4973 = vmatpush1.bf16.msra.mxu0 %v4875
    %4974 = vmatprep.subr.bf16.mxu0 0
    %4975 = vmatpush1.bf16.msra.mxu0 %v4876
    %4976 = vmatprep.subr.bf16.mxu0 0
    %4977 = vmatpush1.bf16.msra.mxu0 %v4877
    %4978 = vmatprep.subr.bf16.mxu0 0
    %4979 = vmatpush1.bf16.msra.mxu0 %v4878
    %4980 = vmatprep.subr.bf16.mxu0 0
    %4981 = vmatpush1.bf16.msra.mxu0 %v4879
    %4982 = vmatprep.subr.bf16.mxu0 0
    %4983 = vmatpush1.bf16.msra.mxu0 %v4880
    %4984 = vmatprep.subr.bf16.mxu0 0
    %4985 = vmatpush1.bf16.msra.mxu0 %v4881
    %4986 = vmatprep.subr.bf16.mxu0 0
    %4987 = vmatpush1.bf16.msra.mxu0 %v4882
    %4988 = vmatprep.subr.bf16.mxu0 0
    %4989 = vmatpush1.bf16.msra.mxu0 %v4883
    %4990 = vmatprep.subr.bf16.mxu0 0
    %4991 = vmatpush1.bf16.msra.mxu0 %v4884
    %4992 = vmatprep.subr.bf16.mxu0 0
    %4993 = vmatpush1.bf16.msra.mxu0 %v4885
    %4994 = vmatprep.subr.bf16.mxu0 0
    %4995 = vmatpush1.bf16.msra.mxu0 %v4886
    %4996 = vmatprep.subr.bf16.mxu0 0
    %4997 = vmatpush1.bf16.msra.mxu0 %v4887
    %4998 = vmatprep.subr.bf16.mxu0 0
    %4999 = vmatpush1.bf16.msra.mxu0 %v4888
    %5000 = vmatprep.subr.bf16.mxu0 0
    %5001 = vmatpush1.bf16.msra.mxu0 %v4889
    %5002 = vmatprep.subr.bf16.mxu0 0
    %5003 = vmatpush1.bf16.msra.mxu0 %v4890
    %5004 = vmatprep.mubr.bf16.mxu0 %v4662
    %5005 = vmatmul.mubr.bf16.gmra.mrb[0].mxu0 %v4661
    %v5006 = vpop.f32.mrb[0].mxu0
    %v5007 = vadd.f32 %v4958, %v5006
    %v5008 = vpop.f32.mrb[0].mxu0
    %v5009 = vpop.f32.mrb[0].mxu0
    %v5010 = vadd.f32 %v4961, %v5009
    %v5011 = vpop.f32.mrb[0].mxu0
    %5012 = vmatprep.mubr.bf16.mxu0 %v4666
    %5013 = vmatmul.mubr.bf16.gmra.mrb[0].mxu0 %v4665
    %v5014 = vpop.f32.mrb[0].mxu0
    %v5015 = vadd.f32 %v4966, %v5014
    %v5016 = vpop.f32.mrb[0].mxu0
    %v5017 = vpop.f32.mrb[0].mxu0
    %v5018 = vadd.f32 %v4969, %v5017
    %v5019 = vpop.f32.mrb[0].mxu0
    %5020 = vdwg.mxu0
    %vm5021 = vcmp.eq.s32.totalorder %v4387, 0
    %5025 = vrot.lane.b32.xlu0 %v5007, 112
    %v5026 = vpop.permute.xlu0 %5025
    %5027 = vrot.lane.b32.xlu0 %v5010, 112
    %v5028 = vpop.permute.xlu0 %5027
    %5029 = vrot.lane.b32.xlu0 %v5015, 112
    %v5030 = vpop.permute.xlu0 %5029
    %5032 = vset.pattern.permute.xlu0 0
    %5033 = vperm.xlu0 %5032, 0.0
    %v5034 = vpop.permute.xlu0 %5033
    %5036 = vset.pattern.permute.xlu0 0
    %5037 = vperm.xlu0 %5036, %v5026
    %v5038 = vpop.permute.xlu0 %5037
    %5040 = vset.pattern.permute.xlu0 0
    %5041 = vperm.xlu0 %5040, %v5028
    %v5042 = vpop.permute.xlu0 %5041
    %5044 = vset.pattern.permute.xlu0 0
    %5045 = vperm.xlu0 %5044, %v5030
    %v5046 = vpop.permute.xlu0 %5045
    %v5048 = vsel %vm5021, %v5034, 0.0
    %v5049 = vsel %vm5021, %v5038, 0.0
    %v5050 = vsel %vm5021, %v5042, 0.0
    %v5051 = vsel %vm5021, %v5046, 0.0
    %v5052 = vadd.f32 %v5007, %v5048
    %v5053 = vadd.f32 %v5010, %v5049
    %v5054 = vadd.f32 %v5015, %v5050
    %v5055 = vadd.f32 %v5018, %v5051
    %vm5056 = vcmp.eq.s32.totalorder %v4387, 15
    %5057 = vset.pattern.permute.xlu0 17
    %5058 = vperm.xlu0 %5057, %v5010
    %v5059 = vpop.permute.xlu0 %5058
    %5061 = vset.pattern.permute.xlu0 17
    %5062 = vperm.xlu0 %5061, %v5015
    %v5063 = vpop.permute.xlu0 %5062
    %5066 = vset.pattern.permute.xlu0 17
    %5067 = vperm.xlu0 %5066, %v5018
    %v5068 = vpop.permute.xlu0 %5067
    %5070 = vset.pattern.permute.xlu0 17
    %5071 = vperm.xlu0 %5070, 0.0
    %v5072 = vpop.permute.xlu0 %5071
    %v5074 = vsel %vm5056, %v5059, 0.0
    %v5075 = vsel %vm5056, %v5063, 0.0
    %v5076 = vsel %vm5056, %v5068, 0.0
    %v5077 = vsel %vm5056, %v5072, 0.0
    %v5078 = vadd.f32 %v5052, %v5074
    %v5079 = vadd.f32 %v5053, %v5075
    %v5080 = vadd.f32 %v5054, %v5076
    %v5081 = vadd.f32 %v5055, %v5077
    %5083 = vrot.lane.b32.xlu0 %v5079, 16
    %v5084 = vpop.permute.xlu0 %5083
    %5087 = vrot.lane.b32.xlu0 %v5080, 32
    %v5088 = vpop.permute.xlu0 %5087
    %5091 = vrot.lane.b32.xlu0 %v5081, 48
    %v5092 = vpop.permute.xlu0 %5091
    %v5094 = vsel %vm319, %v5078, %v5084
    %vm5095 = vcmask 261120
    %v5096 = vsel %vm5095, %v5094, %v5088
    %vm5097 = vcmask 392192
    %v5098 = vsel %vm5097, %v5096, %v5092
    %v5099 = vtanh.pop %v5098
    %5100 = vst.msk [vmem:[#allocation25] sm:$0xff] %vm4560, %v5099
    // Predicated region
    $region114: #{generator_forward.1} parent=1 // pred_check
      _
    $region115: #{generator_forward.1} parent=1 // pred_check_branch
      %5102 = sbr.rel (0) target = $region117
    $region116: #{generator_forward.1} parent=1 // pred_region
      %s5104 = ssub.s32 128, 128
      %5105 = vsyncadd [#allocation4], %s5104
      %s5107 = sshll.u32 [#allocation25], 4
      %s5108 = int_to_ptr.vmem [resolvable:$true] %s5107
      %5110 = dma.vmem_to_hbm [thread:$0]  %s5108, 128, %s14, [#allocation4]
    $region117: #{generator_forward.1} parent=1 // pred_fallthru
      _
    // Predicated region
    $region118: #{generator_forward.1} parent=1 // pred_check
      _
    $region119: #{generator_forward.1} parent=1 // pred_check_branch
      %5112 = sbr.rel (0) target = $region121
    $region120: #{generator_forward.1} parent=1 // pred_region
      %5113 = dma.done [#allocation4], 128
    $region121: #{generator_forward.1} parent=1 // pred_fallthru
      _
    %5114 = vsyncpa [#allocation3], 1
    %5115 = vsyncpa [#allocation6], 1
    %5116 = vsyncpa [#allocation9], 1
    %5117 = vsyncpa [#allocation12], 1
    %5118 = vsyncpa [#allocation15], 1
    %5119 = vsyncpa [#allocation18], 1
    %5120 = vsyncpa [#allocation21], 1
    %5121 = vsyncpa [#allocation24], 1
    %5122 = vsyncpa [#allocation4], 1

</llo_original>
